<compile_context>
chip_gen: v7x
topology: tpu7x:2x2x1
jax: 0.10.0
libtpu: 0.0.40
codegen_flags: <defaults>
</compile_context>

<pallas_src>
import functools

import jax
import jax.numpy as jnp
from jax import lax
from jax.experimental import pallas as pl
from jax.experimental.pallas import tpu as pltpu

EPS = 1e-5


def _bottleneck_kernel(x_ref, s1_ref, b1_ref, w1_ref, b2_ref, w2_ref,
                       b3_ref, w3_ref, out_ref, pad_ref):
    # x_ref block: (Nb, H, W, Cin); parameters are whole (untiled) blocks.
    Nb, H, W, Cin = x_ref.shape
    P = w1_ref.shape[1]          # planes
    Cout = w3_ref.shape[1]       # planes * 4 == Cin (residual add, no downsample)
    M = Nb * H * W

    x0 = x_ref[...].reshape(M, Cin)                           # (M, Cin) f32

    # bn1 + relu  (scale/shift folded from running stats, f32 on the VPU).
    t1 = jnp.maximum(x0 * s1_ref[...] + b1_ref[...], 0.0)

    # conv1: 1x1 == channel matmul; bn2's scale is pre-folded into w1 columns.
    # bf16 operands, f32 accumulation (MXU).
    y1 = jnp.dot(t1.astype(jnp.bfloat16), w1_ref[...],
                 preferred_element_type=jnp.float32)          # (M, P)

    # bn2 bias + relu, then cast ONCE to bf16 for the whole conv2 pipeline.
    t2 = jnp.maximum(y1 + b2_ref[...], 0.0).astype(jnp.bfloat16)

    # conv2: 3x3, stride 1, padding 1, as ONE fused im2col matmul.
    # Zero only the 1-pixel halo every step (the interior is fully
    # overwritten), which stays correct when the "parallel" batch axis is
    # sharded across TensorCores (per-core scratch starts uninitialized).
    zrow = jnp.zeros((Nb, 1, W + 2, P), jnp.bfloat16)
    zcol = jnp.zeros((Nb, H + 2, 1, P), jnp.bfloat16)
    pad_ref[:, 0:1, :, :] = zrow
    pad_ref[:, H + 1:H + 2, :, :] = zrow
    pad_ref[:, :, 0:1, :] = zcol
    pad_ref[:, :, W + 1:W + 2, :] = zcol
    pad_ref[:, 1:H + 1, 1:W + 1, :] = t2.reshape(Nb, H, W, P)

    # im2col assembled in registers: 9 shifted bf16 slab reads concatenated
    # along the lane axis -> (M, 9P).  No f32 col scratch round trip.
    slabs = [pad_ref[:, dh:dh + H, dw:dw + W, :].reshape(M, P)
             for dh in range(3) for dw in range(3)]
    col = jnp.concatenate(slabs, axis=-1)                     # (M, 9P) bf16

    # bn3's scale is pre-folded into w2 columns.
    y2 = jnp.dot(col, w2_ref[...],
                 preferred_element_type=jnp.float32)          # (M, P)

    # bn3 bias + relu
    t3 = jnp.maximum(y2 + b3_ref[...], 0.0)

    # conv3: 1x1 expansion
    y3 = jnp.dot(t3.astype(jnp.bfloat16), w3_ref[...],
                 preferred_element_type=jnp.float32)          # (M, Cout)

    # Residual add (pre-BN input, matching the PyTorch module).  Re-read the
    # resident VMEM block instead of keeping x0 live across all matmuls.
    res = x_ref[...].reshape(M, Cin)
    out_ref[...] = (y3 + res).reshape(Nb, H, W, Cout).astype(out_ref.dtype)


def _fold_bn(gamma, beta, mean, var):
    scale = gamma / jnp.sqrt(var + EPS)
    shift = beta - mean * scale
    return (scale.reshape(1, -1).astype(jnp.float32),
            shift.reshape(1, -1).astype(jnp.float32))


def _choose_block_n(N, H, W, Cin):
    """Pick images per grid step: >= ~1 MiB of input per step (amortize the
    ~0.35us per-step overhead), but keep >= 2 grid steps so v7x's second
    TensorCore has work.  On v5e/v6e (128 MiB VMEM) larger is also fine."""
    target_bytes = 1 << 20
    best = 1
    for nb in range(1, N + 1):
        if N % nb != 0:
            continue
        if N >= 2 and N // nb < 2:
            break
        if nb * H * W * Cin * 4 <= target_bytes:
            best = nb
    return best


@functools.partial(jax.jit, static_argnames=("block_n",))
def bottleneck_forward_nhwc(x_nhwc, params, block_n=None):
    """x_nhwc: (N, H, W, Cin) float32.  Returns (N, H, W, Cin) float32."""
    N, H, W, Cin = x_nhwc.shape
    w1, w2, w3 = params["conv1_w"], params["conv2_w"], params["conv3_w"]
    P = w1.shape[0]            # planes
    Cout = w3.shape[0]         # planes * 4
    assert Cout == Cin, "downsample=None requires inplanes == planes * 4"
    if block_n is None:
        block_n = _choose_block_n(N, H, W, Cin)
    assert N % block_n == 0, "block_n must divide the batch size"

    s1, b1 = _fold_bn(params["bn1_g"], params["bn1_b"], params["bn1_m"], params["bn1_v"])
    s2, b2 = _fold_bn(params["bn2_g"], params["bn2_b"], params["bn2_m"], params["bn2_v"])
    s3, b3 = _fold_bn(params["bn3_g"], params["bn3_b"], params["bn3_m"], params["bn3_v"])

    # Conv weights: torch OIHW -> matmul layouts.  bn2/bn3 scales are folded
    # into the output columns of the preceding conv (exact, even through the
    # following ReLU).  bf16 for the MXU fast path.
    w1k = (jnp.transpose(w1[:, :, 0, 0], (1, 0)) * s2).astype(jnp.bfloat16)       # (Cin, P)
    w2k = (jnp.transpose(w2, (2, 3, 1, 0)).reshape(9 * P, P) * s3).astype(jnp.bfloat16)  # (9P, P)
    w3k = jnp.transpose(w3[:, :, 0, 0], (1, 0)).astype(jnp.bfloat16)              # (P, Cout)

    x_nhwc = x_nhwc.astype(jnp.float32)
    Nb = block_n

    flops = 2 * N * H * W * (Cin * P + 9 * P * P + P * Cout)
    bytes_accessed = (
        2 * N * H * W * Cin * 4                                   # x in + out (f32)
        + (w1k.size + w2k.size + w3k.size) * 2                    # bf16 weights
        + (s1.size + b1.size + b2.size + b3.size) * 4)            # f32 bn vectors

    out_nhwc = pl.pallas_call(
        _bottleneck_kernel,
        out_shape=jax.ShapeDtypeStruct((N, H, W, Cout), jnp.float32),
        grid_spec=pltpu.PrefetchScalarGridSpec(
            num_scalar_prefetch=0,
            grid=(N // Nb,),
            in_specs=[
                pl.BlockSpec((Nb, H, W, Cin), lambda n: (n, 0, 0, 0)),
                pl.BlockSpec((1, Cin), lambda n: (0, 0)),
                pl.BlockSpec((1, Cin), lambda n: (0, 0)),
                pl.BlockSpec((Cin, P), lambda n: (0, 0)),
                pl.BlockSpec((1, P), lambda n: (0, 0)),
                pl.BlockSpec((9 * P, P), lambda n: (0, 0)),
                pl.BlockSpec((1, P), lambda n: (0, 0)),
                pl.BlockSpec((P, Cout), lambda n: (0, 0)),
            ],
            out_specs=pl.BlockSpec((Nb, H, W, Cout), lambda n: (n, 0, 0, 0)),
            scratch_shapes=[
                pltpu.VMEM((Nb, H + 2, W + 2, P), jnp.bfloat16),   # padded t2 (bf16)
            ],
        ),
        compiler_params=pltpu.CompilerParams(
            # Batch steps are independent -> shard across TensorCores on v7x.
            dimension_semantics=("parallel",),
            # Above the 16 MiB (v5e) / 32 MiB (v6e/v7x) scoped defaults, with
            # headroom below v7x's 64 MiB/TC physical VMEM for Mosaic scratch
            # and the double-buffered pipeline buffers.
            vmem_limit_bytes=48 * 1024 * 1024,
        ),
        cost_estimate=pl.CostEstimate(
            flops=flops, transcendentals=0, bytes_accessed=bytes_accessed),
    )(x_nhwc, s1, b1, w1k, b2, w2k, b3, w3k)

    return out_nhwc


@functools.partial(jax.jit, static_argnames=("block_n",))
def bottleneck_forward(x_nchw, params, block_n=None):
    """NCHW wrapper for parity with the PyTorch module (adds two transposes).
    Prefer bottleneck_forward_nhwc when the surrounding network is NHWC."""
    x_nhwc = jnp.transpose(x_nchw, (0, 2, 3, 1))
    out_nhwc = bottleneck_forward_nhwc(x_nhwc, params, block_n=block_n)
    return jnp.transpose(out_nhwc, (0, 3, 1, 2))


def reference_forward(x, params):
    """Pure-JAX NCHW reference mirroring the PyTorch module (eval-mode BN)."""
    def bn(t, g, b, m, v):
        scale = g / jnp.sqrt(v + EPS)
        shift = b - m * scale
        return t * scale[None, :, None, None] + shift[None, :, None, None]

    dn = ("NCHW", "OIHW", "NCHW")
    out = jax.nn.relu(bn(x, params["bn1_g"], params["bn1_b"], params["bn1_m"], params["bn1_v"]))
    out = lax.conv_general_dilated(out, params["conv1_w"], (1, 1), "VALID", dimension_numbers=dn)
    out = jax.nn.relu(bn(out, params["bn2_g"], params["bn2_b"], params["bn2_m"], params["bn2_v"]))
    out = lax.conv_general_dilated(out, params["conv2_w"], (1, 1), ((1, 1), (1, 1)),
                                   dimension_numbers=dn)
    out = jax.nn.relu(bn(out, params["bn3_g"], params["bn3_b"], params["bn3_m"], params["bn3_v"]))
    out = lax.conv_general_dilated(out, params["conv3_w"], (1, 1), "VALID", dimension_numbers=dn)
    return out + x


def init_params(key, inplanes, planes):
    ks = jax.random.split(key, 15)
    def u(k, shape, lo, hi):
        return jax.random.uniform(k, shape, jnp.float32, lo, hi)
    params = {
        "bn1_g": u(ks[0], (inplanes,), 0.5, 1.5),
        "bn1_b": 0.1 * jax.random.normal(ks[1], (inplanes,), jnp.float32),
        "bn1_m": 0.1 * jax.random.normal(ks[2], (inplanes,), jnp.float32),
        "bn1_v": u(ks[3], (inplanes,), 0.5, 1.5),
        "bn2_g": u(ks[4], (planes,), 0.5, 1.5),
        "bn2_b": 0.1 * jax.random.normal(ks[5], (planes,), jnp.float32),
        "bn2_m": 0.1 * jax.random.normal(ks[6], (planes,), jnp.float32),
        "bn2_v": u(ks[7], (planes,), 0.5, 1.5),
        "bn3_g": u(ks[8], (planes,), 0.5, 1.5),
        "bn3_b": 0.1 * jax.random.normal(ks[9], (planes,), jnp.float32),
        "bn3_m": 0.1 * jax.random.normal(ks[10], (planes,), jnp.float32),
        "bn3_v": u(ks[11], (planes,), 0.5, 1.5),
        # Conv2d weights (OIHW), bias=False
        "conv1_w": jax.random.normal(ks[12], (planes, inplanes, 1, 1), jnp.float32)
                   / jnp.sqrt(inplanes),
        "conv2_w": jax.random.normal(ks[13], (planes, planes, 3, 3), jnp.float32)
                   / jnp.sqrt(9 * planes),
        "conv3_w": jax.random.normal(ks[14], (planes * 4, planes, 1, 1), jnp.float32)
                   / jnp.sqrt(planes),
    }
    return params


if __name__ == "__main__":
    key = jax.random.PRNGKey(0)
    kx, kp = jax.random.split(key)

    planes = 32
    inplanes = planes * 4          # 128 channels: lane-dense loads/stores,
    N, H, W = 2, 16, 16            # and inplanes == planes*4 for the residual.

    x = jax.random.normal(kx, (N, inplanes, H, W), jnp.float32)   # NCHW, like PyTorch
    params = init_params(kp, inplanes, planes)

    ref = reference_forward(x, params)

    # NCHW entry (PyTorch layout parity); block_n auto-picks 1 here so the
    # grid has 2 steps (both v7x TensorCores get work).
    out = jax.block_until_ready(bottleneck_forward(x, params))
    assert out.shape == ref.shape == (N, inplanes, H, W)
    err = float(jnp.max(jnp.abs(out - ref)))
    # bf16 matmul operands (f32 accumulation) -> looser tolerance than pure f32.
    assert jnp.allclose(out, ref, atol=1e-1, rtol=5e-2), f"max abs err = {err}"

    print("KERNEL_OK")
</pallas_src>

<mosaic_0001>
module attributes {stable_mosaic.version = 11 : i64} {
  func.func @_bottleneck_kernel(%arg0: i32, %arg1: memref<1x16x16x128xf32, #tpu.memory_space<vmem>>, %arg2: memref<1x128xf32, #tpu.memory_space<vmem>>, %arg3: memref<1x128xf32, #tpu.memory_space<vmem>>, %arg4: memref<128x32xbf16, #tpu.memory_space<vmem>>, %arg5: memref<1x32xf32, #tpu.memory_space<vmem>>, %arg6: memref<288x32xbf16, #tpu.memory_space<vmem>>, %arg7: memref<1x32xf32, #tpu.memory_space<vmem>>, %arg8: memref<32x128xbf16, #tpu.memory_space<vmem>>, %arg9: memref<1x16x16x128xf32, #tpu.memory_space<vmem>>, %arg10: memref<1x18x18x32xbf16, #tpu.memory_space<vmem>>) attributes {dimension_semantics = [#tpu.dimension_semantics<parallel>], iteration_bounds = array<i64: 2>, scalar_prefetch = 0 : i64, scratch_operands = 1 : i64, tpu.core_type = #tpu.core_type<tc>, window_params = [{transform_indices = @transform_0, window_bounds = array<i64: 1, 16, 16, 128>}, {pipeline_mode = #tpu.pipeline_mode<synchronous>, transform_indices = @transform_1, window_bounds = array<i64: 1, 128>}, {pipeline_mode = #tpu.pipeline_mode<synchronous>, transform_indices = @transform_2, window_bounds = array<i64: 1, 128>}, {pipeline_mode = #tpu.pipeline_mode<synchronous>, transform_indices = @transform_3, window_bounds = array<i64: 128, 32>}, {pipeline_mode = #tpu.pipeline_mode<synchronous>, transform_indices = @transform_4, window_bounds = array<i64: 1, 32>}, {pipeline_mode = #tpu.pipeline_mode<synchronous>, transform_indices = @transform_5, window_bounds = array<i64: 288, 32>}, {pipeline_mode = #tpu.pipeline_mode<synchronous>, transform_indices = @transform_6, window_bounds = array<i64: 1, 32>}, {pipeline_mode = #tpu.pipeline_mode<synchronous>, transform_indices = @transform_7, window_bounds = array<i64: 32, 128>}, {transform_indices = @transform_8, window_bounds = array<i64: 1, 16, 16, 128>}]} {
    %c0 = arith.constant 0 : index
    %c0_0 = arith.constant 0 : index
    %c0_1 = arith.constant 0 : index
    %c0_2 = arith.constant 0 : index
    %0 = vector.load %arg1[%c0, %c0_0, %c0_1, %c0_2] : memref<1x16x16x128xf32, #tpu.memory_space<vmem>>, vector<1x16x16x128xf32>
    %1 = vector.shape_cast %0 : vector<1x16x16x128xf32> to vector<256x128xf32>
    %c0_3 = arith.constant 0 : index
    %c0_4 = arith.constant 0 : index
    %2 = vector.load %arg2[%c0_3, %c0_4] : memref<1x128xf32, #tpu.memory_space<vmem>>, vector<1x128xf32>
    %3 = vector.broadcast %2 : vector<1x128xf32> to vector<256x128xf32>
    %4 = arith.mulf %1, %3 : vector<256x128xf32>
    %c0_5 = arith.constant 0 : index
    %c0_6 = arith.constant 0 : index
    %5 = vector.load %arg3[%c0_5, %c0_6] : memref<1x128xf32, #tpu.memory_space<vmem>>, vector<1x128xf32>
    %6 = vector.broadcast %5 : vector<1x128xf32> to vector<256x128xf32>
    %7 = arith.addf %4, %6 : vector<256x128xf32>
    %cst = arith.constant 0.000000e+00 : f32
    %8 = vector.broadcast %cst : f32 to vector<256x128xf32>
    %9 = arith.maximumf %7, %8 : vector<256x128xf32>
    %10 = arith.truncf %9 : vector<256x128xf32> to vector<256x128xbf16>
    %c0_7 = arith.constant 0 : index
    %c0_8 = arith.constant 0 : index
    %11 = vector.load %arg4[%c0_7, %c0_8] : memref<128x32xbf16, #tpu.memory_space<vmem>>, vector<128x32xbf16>
    %cst_9 = arith.constant dense<0.000000e+00> : vector<256x32xf32>
    %12 = tpu.matmul %10, %11, %cst_9 {dimension_numbers = #tpu.dot_dimension_numbers<[1], [0], [0], [1], [0, 0, 1, 1], [], []>} : vector<256x128xbf16>, vector<128x32xbf16>, vector<256x32xf32> -> vector<256x32xf32>
    %c0_10 = arith.constant 0 : index
    %c0_11 = arith.constant 0 : index
    %13 = vector.load %arg5[%c0_10, %c0_11] : memref<1x32xf32, #tpu.memory_space<vmem>>, vector<1x32xf32>
    %14 = vector.broadcast %13 : vector<1x32xf32> to vector<256x32xf32>
    %15 = arith.addf %12, %14 : vector<256x32xf32>
    %cst_12 = arith.constant 0.000000e+00 : f32
    %16 = vector.broadcast %cst_12 : f32 to vector<256x32xf32>
    %17 = arith.maximumf %15, %16 : vector<256x32xf32>
    %18 = arith.truncf %17 : vector<256x32xf32> to vector<256x32xbf16>
    %cst_13 = arith.constant 0.000000e+00 : bf16
    %19 = vector.broadcast %cst_13 : bf16 to vector<1x1x18x32xbf16>
    %cst_14 = arith.constant 0.000000e+00 : bf16
    %20 = vector.broadcast %cst_14 : bf16 to vector<1x18x1x32xbf16>
    %c0_15 = arith.constant 0 : index
    %c0_16 = arith.constant 0 : index
    %c0_17 = arith.constant 0 : index
    %c0_18 = arith.constant 0 : index
    %21 = vector.load %arg10[%c0_15, %c0_16, %c0_17, %c0_18] : memref<1x18x18x32xbf16, #tpu.memory_space<vmem>>, vector<1x1x18x32xbf16>
    tpu.vector_store %arg10[%c0_15, %c0_16, %c0_17, %c0_18], %19 {strides = array<i32>} : memref<1x18x18x32xbf16, #tpu.memory_space<vmem>>, vector<1x1x18x32xbf16>,
    %c0_19 = arith.constant 0 : index
    %c17 = arith.constant 17 : index
    %c0_20 = arith.constant 0 : index
    %c0_21 = arith.constant 0 : index
    %22 = vector.load %arg10[%c0_19, %c17, %c0_20, %c0_21] : memref<1x18x18x32xbf16, #tpu.memory_space<vmem>>, vector<1x1x18x32xbf16>
    tpu.vector_store %arg10[%c0_19, %c17, %c0_20, %c0_21], %19 {strides = array<i32>} : memref<1x18x18x32xbf16, #tpu.memory_space<vmem>>, vector<1x1x18x32xbf16>,
    %c0_22 = arith.constant 0 : index
    %c0_23 = arith.constant 0 : index
    %c0_24 = arith.constant 0 : index
    %c0_25 = arith.constant 0 : index
    %23 = vector.load %arg10[%c0_22, %c0_23, %c0_24, %c0_25] : memref<1x18x18x32xbf16, #tpu.memory_space<vmem>>, vector<1x18x1x32xbf16>
    tpu.vector_store %arg10[%c0_22, %c0_23, %c0_24, %c0_25], %20 {strides = array<i32>} : memref<1x18x18x32xbf16, #tpu.memory_space<vmem>>, vector<1x18x1x32xbf16>,
    %c0_26 = arith.constant 0 : index
    %c0_27 = arith.constant 0 : index
    %c17_28 = arith.constant 17 : index
    %c0_29 = arith.constant 0 : index
    %24 = vector.load %arg10[%c0_26, %c0_27, %c17_28, %c0_29] : memref<1x18x18x32xbf16, #tpu.memory_space<vmem>>, vector<1x18x1x32xbf16>
    tpu.vector_store %arg10[%c0_26, %c0_27, %c17_28, %c0_29], %20 {strides = array<i32>} : memref<1x18x18x32xbf16, #tpu.memory_space<vmem>>, vector<1x18x1x32xbf16>,
    %25 = vector.shape_cast %18 : vector<256x32xbf16> to vector<1x16x16x32xbf16>
    %c0_30 = arith.constant 0 : index
    %c1 = arith.constant 1 : index
    %c1_31 = arith.constant 1 : index
    %c0_32 = arith.constant 0 : index
    %26 = vector.load %arg10[%c0_30, %c1, %c1_31, %c0_32] : memref<1x18x18x32xbf16, #tpu.memory_space<vmem>>, vector<1x16x16x32xbf16>
    tpu.vector_store %arg10[%c0_30, %c1, %c1_31, %c0_32], %25 {strides = array<i32>} : memref<1x18x18x32xbf16, #tpu.memory_space<vmem>>, vector<1x16x16x32xbf16>,
    %c0_33 = arith.constant 0 : index
    %c0_34 = arith.constant 0 : index
    %c0_35 = arith.constant 0 : index
    %c0_36 = arith.constant 0 : index
    %27 = vector.load %arg10[%c0_33, %c0_34, %c0_35, %c0_36] : memref<1x18x18x32xbf16, #tpu.memory_space<vmem>>, vector<1x16x16x32xbf16>
    %28 = vector.shape_cast %27 : vector<1x16x16x32xbf16> to vector<256x32xbf16>
    %c0_37 = arith.constant 0 : index
    %c0_38 = arith.constant 0 : index
    %c1_39 = arith.constant 1 : index
    %c0_40 = arith.constant 0 : index
    %29 = vector.load %arg10[%c0_37, %c0_38, %c1_39, %c0_40] : memref<1x18x18x32xbf16, #tpu.memory_space<vmem>>, vector<1x16x16x32xbf16>
    %30 = vector.shape_cast %29 : vector<1x16x16x32xbf16> to vector<256x32xbf16>
    %c0_41 = arith.constant 0 : index
    %c0_42 = arith.constant 0 : index
    %c2 = arith.constant 2 : index
    %c0_43 = arith.constant 0 : index
    %31 = vector.load %arg10[%c0_41, %c0_42, %c2, %c0_43] : memref<1x18x18x32xbf16, #tpu.memory_space<vmem>>, vector<1x16x16x32xbf16>
    %32 = vector.shape_cast %31 : vector<1x16x16x32xbf16> to vector<256x32xbf16>
    %c0_44 = arith.constant 0 : index
    %c1_45 = arith.constant 1 : index
    %c0_46 = arith.constant 0 : index
    %c0_47 = arith.constant 0 : index
    %33 = vector.load %arg10[%c0_44, %c1_45, %c0_46, %c0_47] : memref<1x18x18x32xbf16, #tpu.memory_space<vmem>>, vector<1x16x16x32xbf16>
    %34 = vector.shape_cast %33 : vector<1x16x16x32xbf16> to vector<256x32xbf16>
    %c0_48 = arith.constant 0 : index
    %c1_49 = arith.constant 1 : index
    %c1_50 = arith.constant 1 : index
    %c0_51 = arith.constant 0 : index
    %35 = vector.load %arg10[%c0_48, %c1_49, %c1_50, %c0_51] : memref<1x18x18x32xbf16, #tpu.memory_space<vmem>>, vector<1x16x16x32xbf16>
    %36 = vector.shape_cast %35 : vector<1x16x16x32xbf16> to vector<256x32xbf16>
    %c0_52 = arith.constant 0 : index
    %c1_53 = arith.constant 1 : index
    %c2_54 = arith.constant 2 : index
    %c0_55 = arith.constant 0 : index
    %37 = vector.load %arg10[%c0_52, %c1_53, %c2_54, %c0_55] : memref<1x18x18x32xbf16, #tpu.memory_space<vmem>>, vector<1x16x16x32xbf16>
    %38 = vector.shape_cast %37 : vector<1x16x16x32xbf16> to vector<256x32xbf16>
    %c0_56 = arith.constant 0 : index
    %c2_57 = arith.constant 2 : index
    %c0_58 = arith.constant 0 : index
    %c0_59 = arith.constant 0 : index
    %39 = vector.load %arg10[%c0_56, %c2_57, %c0_58, %c0_59] : memref<1x18x18x32xbf16, #tpu.memory_space<vmem>>, vector<1x16x16x32xbf16>
    %40 = vector.shape_cast %39 : vector<1x16x16x32xbf16> to vector<256x32xbf16>
    %c0_60 = arith.constant 0 : index
    %c2_61 = arith.constant 2 : index
    %c1_62 = arith.constant 1 : index
    %c0_63 = arith.constant 0 : index
    %41 = vector.load %arg10[%c0_60, %c2_61, %c1_62, %c0_63] : memref<1x18x18x32xbf16, #tpu.memory_space<vmem>>, vector<1x16x16x32xbf16>
    %42 = vector.shape_cast %41 : vector<1x16x16x32xbf16> to vector<256x32xbf16>
    %c0_64 = arith.constant 0 : index
    %c2_65 = arith.constant 2 : index
    %c2_66 = arith.constant 2 : index
    %c0_67 = arith.constant 0 : index
    %43 = vector.load %arg10[%c0_64, %c2_65, %c2_66, %c0_67] : memref<1x18x18x32xbf16, #tpu.memory_space<vmem>>, vector<1x16x16x32xbf16>
    %44 = vector.shape_cast %43 : vector<1x16x16x32xbf16> to vector<256x32xbf16>
    %45 = tpu.concatenate %28, %30, %32, %34, %36, %38, %40, %42, %44 in 1 : vector<256x32xbf16>, vector<256x32xbf16>, vector<256x32xbf16>, vector<256x32xbf16>, vector<256x32xbf16>, vector<256x32xbf16>, vector<256x32xbf16>, vector<256x32xbf16>, vector<256x32xbf16> -> vector<256x288xbf16>
    %c0_68 = arith.constant 0 : index
    %c0_69 = arith.constant 0 : index
    %46 = vector.load %arg6[%c0_68, %c0_69] : memref<288x32xbf16, #tpu.memory_space<vmem>>, vector<288x32xbf16>
    %cst_70 = arith.constant dense<0.000000e+00> : vector<256x32xf32>
    %47 = tpu.matmul %45, %46, %cst_70 {dimension_numbers = #tpu.dot_dimension_numbers<[1], [0], [0], [1], [0, 0, 1, 1], [], []>} : vector<256x288xbf16>, vector<288x32xbf16>, vector<256x32xf32> -> vector<256x32xf32>
    %c0_71 = arith.constant 0 : index
    %c0_72 = arith.constant 0 : index
    %48 = vector.load %arg7[%c0_71, %c0_72] : memref<1x32xf32, #tpu.memory_space<vmem>>, vector<1x32xf32>
    %49 = vector.broadcast %48 : vector<1x32xf32> to vector<256x32xf32>
    %50 = arith.addf %47, %49 : vector<256x32xf32>
    %cst_73 = arith.constant 0.000000e+00 : f32
    %51 = vector.broadcast %cst_73 : f32 to vector<256x32xf32>
    %52 = arith.maximumf %50, %51 : vector<256x32xf32>
    %53 = arith.truncf %52 : vector<256x32xf32> to vector<256x32xbf16>
    %c0_74 = arith.constant 0 : index
    %c0_75 = arith.constant 0 : index
    %54 = vector.load %arg8[%c0_74, %c0_75] : memref<32x128xbf16, #tpu.memory_space<vmem>>, vector<32x128xbf16>
    %cst_76 = arith.constant dense<0.000000e+00> : vector<256x128xf32>
    %55 = tpu.matmul %53, %54, %cst_76 {dimension_numbers = #tpu.dot_dimension_numbers<[1], [0], [0], [1], [0, 0, 1, 1], [], []>} : vector<256x32xbf16>, vector<32x128xbf16>, vector<256x128xf32> -> vector<256x128xf32>
    %c0_77 = arith.constant 0 : index
    %c0_78 = arith.constant 0 : index
    %c0_79 = arith.constant 0 : index
    %c0_80 = arith.constant 0 : index
    %56 = vector.load %arg1[%c0_77, %c0_78, %c0_79, %c0_80] : memref<1x16x16x128xf32, #tpu.memory_space<vmem>>, vector<1x16x16x128xf32>
    %57 = vector.shape_cast %56 : vector<1x16x16x128xf32> to vector<256x128xf32>
    %58 = arith.addf %55, %57 : vector<256x128xf32>
    %59 = vector.shape_cast %58 : vector<256x128xf32> to vector<1x16x16x128xf32>
    %c0_81 = arith.constant 0 : index
    %c0_82 = arith.constant 0 : index
    %c0_83 = arith.constant 0 : index
    %c0_84 = arith.constant 0 : index
    %60 = vector.load %arg9[%c0_81, %c0_82, %c0_83, %c0_84] : memref<1x16x16x128xf32, #tpu.memory_space<vmem>>, vector<1x16x16x128xf32>
    tpu.vector_store %arg9[%c0_81, %c0_82, %c0_83, %c0_84], %59 {strides = array<i32>} : memref<1x16x16x128xf32, #tpu.memory_space<vmem>>, vector<1x16x16x128xf32>,
    return
  }
  func.func @transform_0(%arg0: i32) -> (i32, i32, i32, i32) {
    %c0_i32 = arith.constant 0 : i32
    %c0_i32_0 = arith.constant 0 : i32
    %c0_i32_1 = arith.constant 0 : i32
    %c0_i32_2 = arith.constant 0 : i32
    return %arg0, %c0_i32, %c0_i32_0, %c0_i32_1 : i32, i32, i32, i32
  }
  func.func @transform_1(%arg0: i32) -> (i32, i32) {
    %c0_i32 = arith.constant 0 : i32
    %c0_i32_0 = arith.constant 0 : i32
    %c0_i32_1 = arith.constant 0 : i32
    return %c0_i32, %c0_i32_0 : i32, i32
  }
  func.func @transform_2(%arg0: i32) -> (i32, i32) {
    %c0_i32 = arith.constant 0 : i32
    %c0_i32_0 = arith.constant 0 : i32
    %c0_i32_1 = arith.constant 0 : i32
    return %c0_i32, %c0_i32_0 : i32, i32
  }
  func.func @transform_3(%arg0: i32) -> (i32, i32) {
    %c0_i32 = arith.constant 0 : i32
    %c0_i32_0 = arith.constant 0 : i32
    %c0_i32_1 = arith.constant 0 : i32
    return %c0_i32, %c0_i32_0 : i32, i32
  }
  func.func @transform_4(%arg0: i32) -> (i32, i32) {
    %c0_i32 = arith.constant 0 : i32
    %c0_i32_0 = arith.constant 0 : i32
    %c0_i32_1 = arith.constant 0 : i32
    return %c0_i32, %c0_i32_0 : i32, i32
  }
  func.func @transform_5(%arg0: i32) -> (i32, i32) {
    %c0_i32 = arith.constant 0 : i32
    %c0_i32_0 = arith.constant 0 : i32
    %c0_i32_1 = arith.constant 0 : i32
    return %c0_i32, %c0_i32_0 : i32, i32
  }
  func.func @transform_6(%arg0: i32) -> (i32, i32) {
    %c0_i32 = arith.constant 0 : i32
    %c0_i32_0 = arith.constant 0 : i32
    %c0_i32_1 = arith.constant 0 : i32
    return %c0_i32, %c0_i32_0 : i32, i32
  }
  func.func @transform_7(%arg0: i32) -> (i32, i32) {
    %c0_i32 = arith.constant 0 : i32
    %c0_i32_0 = arith.constant 0 : i32
    %c0_i32_1 = arith.constant 0 : i32
    return %c0_i32, %c0_i32_0 : i32, i32
  }
  func.func @transform_8(%arg0: i32) -> (i32, i32, i32, i32) {
    %c0_i32 = arith.constant 0 : i32
    %c0_i32_0 = arith.constant 0 : i32
    %c0_i32_1 = arith.constant 0 : i32
    %c0_i32_2 = arith.constant 0 : i32
    return %arg0, %c0_i32, %c0_i32_0, %c0_i32_1 : i32, i32, i32, i32
  }
}

</mosaic_0001>

<llo_original>
// kernel: bottleneck_forward_nhwc.1
$region0: #{bottleneck_forward_nhwc.1}
  #allocation0 [shape = 'u32[]', space=smem, size = 0x4, offset = 0x4, fixed_abs, tag = 'smem constant byte address 0x4 - core index']
  #allocation1 [shape = 'u32[144,128]{1,0:T(1,128)}', space=vmem, size = 0x12000, scoped, tag = 'internal scratch']
  #allocation2 [shape = 'bf16[1,18,18,32]{3,2,1,0:T(8,128)(2,1)}', space=vmem, size = 0x1b000, scoped, tag = 'scratch operand']
  %s0 = inlined_call_operand.vmem [shape: f32[2,16,16,128], index: 0, kind: input, shape index: {}]
  %s1 = inlined_call_operand.vmem [shape: f32[1,128], index: 1, kind: input, shape index: {}]
  %s2 = inlined_call_operand.vmem [shape: f32[1,128], index: 2, kind: input, shape index: {}]
  %s3 = inlined_call_operand.vmem [shape: bf16[128,32], index: 3, kind: input, shape index: {}]
  %s4 = inlined_call_operand.vmem [shape: f32[1,32], index: 4, kind: input, shape index: {}]
  %s5 = inlined_call_operand.vmem [shape: bf16[288,32], index: 5, kind: input, shape index: {}]
  %s6 = inlined_call_operand.vmem [shape: f32[1,32], index: 6, kind: input, shape index: {}]
  %s7 = inlined_call_operand.vmem [shape: bf16[32,128], index: 7, kind: input, shape index: {}]
  %s8 = inlined_call_operand.hbm [shape: f32[2,16,16,128], index: 8, kind: output, shape index: {}]
  %s9 = sld [smem:[#allocation0]]
  $region65: #{bottleneck_forward_nhwc.1} parent=0
    _
  %s11 = ssub.s32 1, %s9
  %s12 = scalar_select 0, %s11, %s9
  $region1: #{bottleneck_forward_nhwc.1} parent=0
    #allocation3 [shape = 'u8[262144]{0}', space=vmem, size = 0x40000, scoped, tag = 'output window, operand 0']
    #allocation4 [shape = 's32[2]{0}', space=sflag, size = 0x8, scoped, tag = 'scoped memory for bottleneck_forward_nhwc.1']
    %13 = vsyncpa [#allocation4], 0
    %s14 = scalar_lea.sflag [#allocation4], 1
    %15 = vsyncpa %s14, 0
    loop: start=0, step=1, limit=4
    $region2: #{bottleneck_forward_nhwc.1} parent=1 // loop_pre_header
      _
    $region3: #{bottleneck_forward_nhwc.1} parent=1 // loop_header
      %s17 = sphi 0, %s21
      %p18 = scmp.ge.s32.totalorder %s17, 4
      %s27 = sphi 0, %s29
      %s30 = sphi 0, %s27
      %s31 = sphi 0, %s30
      %s47 = sphi 0, %s31
      %s51 = sphi 0, %s51
      %s53 = sphi 0, %s51
      %s54 = sphi 0, %s53
      %s68 = sphi 0, %s54
      %s72 = sphi 0, %s72
      %s74 = sphi 0, %s72
      %s75 = sphi 0, %s74
      %s89 = sphi 0, %s75
      %s93 = sphi 0, %s93
      %s95 = sphi 0, %s93
      %s96 = sphi 0, %s95
      %s110 = sphi 0, %s96
      %s114 = sphi 0, %s114
      %s116 = sphi 0, %s114
      %s117 = sphi 0, %s116
      %s131 = sphi 0, %s117
      %s135 = sphi 0, %s135
      %s137 = sphi 0, %s135
      %s138 = sphi 0, %s137
      %s152 = sphi 0, %s138
      %s156 = sphi 0, %s156
      %s158 = sphi 0, %s156
      %s159 = sphi 0, %s158
      %s173 = sphi 0, %s159
      %s177 = sphi 0, %s177
      %s179 = sphi 0, %s177
      %s180 = sphi 0, %s179
      %s194 = sphi 0, %s180
      %s200 = sphi 0, %s202
      %s203 = sphi 0, %s200
      %s204 = sphi 0, %s203
      %s220 = sphi 0, %s204
    $region4: #{bottleneck_forward_nhwc.1} parent=1 // loop_header_branch
      %20 = sbr.rel (%p18) target = $region8
    $region5: #{bottleneck_forward_nhwc.1} parent=1 // loop_body
      %s22 = ssub.s32 %s17, 1
      %s23 = ssub.s32 %s17, 2
      %s24 = sadd.s32 %s17, 1
      %s25 = ssub.s32 %s17, %s24
      %p26 = scmp.eq.s32.totalorder %s25, 0
      %s28 = sadd.s32 %s27, 1
      %s29 = scalar_select %p26, %s27, %s28
      %p32 = pneg %p26
      %p33 = scmp.eq.s32.totalorder %s17, 1
      %p34 = por %p32, %p33
      %p35 = scmp.ne.s32.totalorder %s27, %s30
      %p36 = scmp.eq.s32.totalorder %s17, 0
      %p37 = por %p35, %p36
      %p38 = scmp.ne.s32.totalorder %s27, %s30
      %p39 = scmp.eq.s32.totalorder %s22, 1
      %p40 = por %p38, %p39
      %p41 = scmp.ne.s32.totalorder %s30, %s31
      %p42 = scmp.eq.s32.totalorder %s22, 0
      %p43 = por %p41, %p42
      %p44 = scmp.ne.s32.totalorder %s30, %s31
      %p45 = scmp.eq.s32.totalorder %s23, 1
      %p46 = por %p44, %p45
      %p48 = scmp.ne.s32.totalorder %s31, %s47
      %p49 = scmp.eq.s32.totalorder %s23, 0
      %p50 = por %p48, %p49
      %s52 = sadd.s32 %s51, 1
      %p55 = scmp.eq.s32.totalorder %s17, 1
      %p56 = scmp.ne.s32.totalorder %s51, %s53
      %p57 = scmp.eq.s32.totalorder %s17, 0
      %p58 = por %p56, %p57
      %p59 = scmp.ne.s32.totalorder %s51, %s53
      %p60 = scmp.eq.s32.totalorder %s22, 1
      %p61 = por %p59, %p60
      %p62 = scmp.ne.s32.totalorder %s53, %s54
      %p63 = scmp.eq.s32.totalorder %s22, 0
      %p64 = por %p62, %p63
      %p65 = scmp.ne.s32.totalorder %s53, %s54
      %p66 = scmp.eq.s32.totalorder %s23, 1
      %p67 = por %p65, %p66
      %p69 = scmp.ne.s32.totalorder %s54, %s68
      %p70 = scmp.eq.s32.totalorder %s23, 0
      %p71 = por %p69, %p70
      %s73 = sadd.s32 %s72, 1
      %p76 = scmp.eq.s32.totalorder %s17, 1
      %p77 = scmp.ne.s32.totalorder %s72, %s74
      %p78 = scmp.eq.s32.totalorder %s17, 0
      %p79 = por %p77, %p78
      %p80 = scmp.ne.s32.totalorder %s72, %s74
      %p81 = scmp.eq.s32.totalorder %s22, 1
      %p82 = por %p80, %p81
      %p83 = scmp.ne.s32.totalorder %s74, %s75
      %p84 = scmp.eq.s32.totalorder %s22, 0
      %p85 = por %p83, %p84
      %p86 = scmp.ne.s32.totalorder %s74, %s75
      %p87 = scmp.eq.s32.totalorder %s23, 1
      %p88 = por %p86, %p87
      %p90 = scmp.ne.s32.totalorder %s75, %s89
      %p91 = scmp.eq.s32.totalorder %s23, 0
      %p92 = por %p90, %p91
      %s94 = sadd.s32 %s93, 1
      %p97 = scmp.eq.s32.totalorder %s17, 1
      %p98 = scmp.ne.s32.totalorder %s93, %s95
      %p99 = scmp.eq.s32.totalorder %s17, 0
      %p100 = por %p98, %p99
      %p101 = scmp.ne.s32.totalorder %s93, %s95
      %p102 = scmp.eq.s32.totalorder %s22, 1
      %p103 = por %p101, %p102
      %p104 = scmp.ne.s32.totalorder %s95, %s96
      %p105 = scmp.eq.s32.totalorder %s22, 0
      %p106 = por %p104, %p105
      %p107 = scmp.ne.s32.totalorder %s95, %s96
      %p108 = scmp.eq.s32.totalorder %s23, 1
      %p109 = por %p107, %p108
      %p111 = scmp.ne.s32.totalorder %s96, %s110
      %p112 = scmp.eq.s32.totalorder %s23, 0
      %p113 = por %p111, %p112
      %s115 = sadd.s32 %s114, 1
      %p118 = scmp.eq.s32.totalorder %s17, 1
      %p119 = scmp.ne.s32.totalorder %s114, %s116
      %p120 = scmp.eq.s32.totalorder %s17, 0
      %p121 = por %p119, %p120
      %p122 = scmp.ne.s32.totalorder %s114, %s116
      %p123 = scmp.eq.s32.totalorder %s22, 1
      %p124 = por %p122, %p123
      %p125 = scmp.ne.s32.totalorder %s116, %s117
      %p126 = scmp.eq.s32.totalorder %s22, 0
      %p127 = por %p125, %p126
      %p128 = scmp.ne.s32.totalorder %s116, %s117
      %p129 = scmp.eq.s32.totalorder %s23, 1
      %p130 = por %p128, %p129
      %p132 = scmp.ne.s32.totalorder %s117, %s131
      %p133 = scmp.eq.s32.totalorder %s23, 0
      %p134 = por %p132, %p133
      %s136 = sadd.s32 %s135, 1
      %p139 = scmp.eq.s32.totalorder %s17, 1
      %p140 = scmp.ne.s32.totalorder %s135, %s137
      %p141 = scmp.eq.s32.totalorder %s17, 0
      %p142 = por %p140, %p141
      %p143 = scmp.ne.s32.totalorder %s135, %s137
      %p144 = scmp.eq.s32.totalorder %s22, 1
      %p145 = por %p143, %p144
      %p146 = scmp.ne.s32.totalorder %s137, %s138
      %p147 = scmp.eq.s32.totalorder %s22, 0
      %p148 = por %p146, %p147
      %p149 = scmp.ne.s32.totalorder %s137, %s138
      %p150 = scmp.eq.s32.totalorder %s23, 1
      %p151 = por %p149, %p150
      %p153 = scmp.ne.s32.totalorder %s138, %s152
      %p154 = scmp.eq.s32.totalorder %s23, 0
      %p155 = por %p153, %p154
      %s157 = sadd.s32 %s156, 1
      %p160 = scmp.eq.s32.totalorder %s17, 1
      %p161 = scmp.ne.s32.totalorder %s156, %s158
      %p162 = scmp.eq.s32.totalorder %s17, 0
      %p163 = por %p161, %p162
      %p164 = scmp.ne.s32.totalorder %s156, %s158
      %p165 = scmp.eq.s32.totalorder %s22, 1
      %p166 = por %p164, %p165
      %p167 = scmp.ne.s32.totalorder %s158, %s159
      %p168 = scmp.eq.s32.totalorder %s22, 0
      %p169 = por %p167, %p168
      %p170 = scmp.ne.s32.totalorder %s158, %s159
      %p171 = scmp.eq.s32.totalorder %s23, 1
      %p172 = por %p170, %p171
      %p174 = scmp.ne.s32.totalorder %s159, %s173
      %p175 = scmp.eq.s32.totalorder %s23, 0
      %p176 = por %p174, %p175
      %s178 = sadd.s32 %s177, 1
      %p181 = scmp.eq.s32.totalorder %s17, 1
      %p182 = scmp.ne.s32.totalorder %s177, %s179
      %p183 = scmp.eq.s32.totalorder %s17, 0
      %p184 = por %p182, %p183
      %p185 = scmp.ne.s32.totalorder %s177, %s179
      %p186 = scmp.eq.s32.totalorder %s22, 1
      %p187 = por %p185, %p186
      %p188 = scmp.ne.s32.totalorder %s179, %s180
      %p189 = scmp.eq.s32.totalorder %s22, 0
      %p190 = por %p188, %p189
      %p191 = scmp.ne.s32.totalorder %s179, %s180
      %p192 = scmp.eq.s32.totalorder %s23, 1
      %p193 = por %p191, %p192
      %p195 = scmp.ne.s32.totalorder %s180, %s194
      %p196 = scmp.eq.s32.totalorder %s23, 0
      %p197 = por %p195, %p196
      %s198 = ssub.s32 %s17, %s24
      %p199 = scmp.eq.s32.totalorder %s198, 0
      %s201 = sadd.s32 %s200, 1
      %s202 = scalar_select %p199, %s200, %s201
      %p205 = pneg %p199
      %p206 = scmp.eq.s32.totalorder %s17, 1
      %p207 = por %p205, %p206
      %p208 = scmp.ne.s32.totalorder %s200, %s203
      %p209 = scmp.eq.s32.totalorder %s17, 0
      %p210 = por %p208, %p209
      %p211 = scmp.ne.s32.totalorder %s200, %s203
      %p212 = scmp.eq.s32.totalorder %s22, 1
      %p213 = por %p211, %p212
      %p214 = scmp.ne.s32.totalorder %s203, %s204
      %p215 = scmp.eq.s32.totalorder %s22, 0
      %p216 = por %p214, %p215
      %p217 = scmp.ne.s32.totalorder %s203, %s204
      %p218 = scmp.eq.s32.totalorder %s23, 1
      %p219 = por %p217, %p218
      %p221 = scmp.ne.s32.totalorder %s204, %s220
      %p222 = scmp.eq.s32.totalorder %s23, 0
      %p223 = por %p221, %p222
      %p224 = scmp.le.s32.totalorder 1, %s17
      %p225 = scmp.lt.s32.totalorder %s17, 3
      %p226 = pnand %p224, %p225
      %p227 = pneg %p226
      // Predicated region
      $region9: #{bottleneck_forward_nhwc.1} parent=5 // pred_check
        _
      $region10: #{bottleneck_forward_nhwc.1} parent=5 // pred_check_branch
        %229 = sbr.rel (%p226) target = $region12
      $region11: #{bottleneck_forward_nhwc.1} parent=5 // pred_region
        %s230 = ssub.s32 %s17, 1
        // Predicated region
        $region13: #{bottleneck_forward_nhwc.1} parent=11 // pred_check
          %p231 = pneg %p64
        $region14: #{bottleneck_forward_nhwc.1} parent=11 // pred_check_branch
          %233 = sbr.rel (%p231) target = $region16
        $region15: #{bottleneck_forward_nhwc.1} parent=11 // pred_region
          _
        $region16: #{bottleneck_forward_nhwc.1} parent=11 // pred_fallthru
          _
        // Predicated region
        $region17: #{bottleneck_forward_nhwc.1} parent=11 // pred_check
          %p234 = pneg %p85
        $region18: #{bottleneck_forward_nhwc.1} parent=11 // pred_check_branch
          %236 = sbr.rel (%p234) target = $region20
        $region19: #{bottleneck_forward_nhwc.1} parent=11 // pred_region
          _
        $region20: #{bottleneck_forward_nhwc.1} parent=11 // pred_fallthru
          _
        // Predicated region
        $region21: #{bottleneck_forward_nhwc.1} parent=11 // pred_check
          %p237 = pneg %p106
        $region22: #{bottleneck_forward_nhwc.1} parent=11 // pred_check_branch
          %239 = sbr.rel (%p237) target = $region24
        $region23: #{bottleneck_forward_nhwc.1} parent=11 // pred_region
          _
        $region24: #{bottleneck_forward_nhwc.1} parent=11 // pred_fallthru
          _
        // Predicated region
        $region25: #{bottleneck_forward_nhwc.1} parent=11 // pred_check
          %p240 = pneg %p127
        $region26: #{bottleneck_forward_nhwc.1} parent=11 // pred_check_branch
          %242 = sbr.rel (%p240) target = $region28
        $region27: #{bottleneck_forward_nhwc.1} parent=11 // pred_region
          _
        $region28: #{bottleneck_forward_nhwc.1} parent=11 // pred_fallthru
          _
        // Predicated region
        $region29: #{bottleneck_forward_nhwc.1} parent=11 // pred_check
          %p243 = pneg %p148
        $region30: #{bottleneck_forward_nhwc.1} parent=11 // pred_check_branch
          %245 = sbr.rel (%p243) target = $region32
        $region31: #{bottleneck_forward_nhwc.1} parent=11 // pred_region
          _
        $region32: #{bottleneck_forward_nhwc.1} parent=11 // pred_fallthru
          _
        // Predicated region
        $region33: #{bottleneck_forward_nhwc.1} parent=11 // pred_check
          %p246 = pneg %p169
        $region34: #{bottleneck_forward_nhwc.1} parent=11 // pred_check_branch
          %248 = sbr.rel (%p246) target = $region36
        $region35: #{bottleneck_forward_nhwc.1} parent=11 // pred_region
          _
        $region36: #{bottleneck_forward_nhwc.1} parent=11 // pred_fallthru
          _
        // Predicated region
        $region37: #{bottleneck_forward_nhwc.1} parent=11 // pred_check
          %p249 = pneg %p190
        $region38: #{bottleneck_forward_nhwc.1} parent=11 // pred_check_branch
          %251 = sbr.rel (%p249) target = $region40
        $region39: #{bottleneck_forward_nhwc.1} parent=11 // pred_region
          _
        $region40: #{bottleneck_forward_nhwc.1} parent=11 // pred_fallthru
          _
      $region12: #{bottleneck_forward_nhwc.1} parent=5 // pred_fallthru
        _
      %p252 = scmp.lt.s32.totalorder %s17, 2
      // Predicated region
      $region41: #{bottleneck_forward_nhwc.1} parent=5 // pred_check
        %p253 = pneg %p252
      $region42: #{bottleneck_forward_nhwc.1} parent=5 // pred_check_branch
        %255 = sbr.rel (%p253) target = $region44
      $region43: #{bottleneck_forward_nhwc.1} parent=5 // pred_region
        // Predicated region
        $region45: #{bottleneck_forward_nhwc.1} parent=43 // pred_check
          %p256 = pneg %p37
        $region46: #{bottleneck_forward_nhwc.1} parent=43 // pred_check_branch
          %258 = sbr.rel (%p256) target = $region48
        $region47: #{bottleneck_forward_nhwc.1} parent=43 // pred_region
          %p259 = scmp.lt.s32.totalorder %s17, 1
          %s260 = scalar_select %p259, %s17, 1
          %s261 = smul.addr %s260, 32
          %s262 = smul.addr %s261, 8
          %s263 = scalar_lea.vmem %s0, %s262
        $region48: #{bottleneck_forward_nhwc.1} parent=43 // pred_fallthru
          _
      $region44: #{bottleneck_forward_nhwc.1} parent=5 // pred_fallthru
        _
      %p264 = scmp.le.s32.totalorder 1, %s17
      %p265 = scmp.lt.s32.totalorder %s17, 3
      %p266 = pnand %p264, %p265
      %p267 = pneg %p266
      // Predicated region
      $region49: #{bottleneck_forward_nhwc.1} parent=5 // pred_check
        _
      $region50: #{bottleneck_forward_nhwc.1} parent=5 // pred_check_branch
        %269 = sbr.rel (%p266) target = $region52
      $region51: #{bottleneck_forward_nhwc.1} parent=5 // pred_region
        %s270 = ssub.s32 %s17, 1
        %p271 = scmp.lt.s32.totalorder %s22, 1
        %s272 = scalar_select %p271, %s22, 1
        %s273 = smul.addr %s272, 32
        %s274 = smul.addr %s273, 8
        %s275 = scalar_lea.vmem %s0, %s274
        %p276 = pneg %p43
        %p277 = pneg %p40
        %p278 = pneg %p64
        %p279 = pneg %p61
        %p280 = pneg %p85
        %p281 = pneg %p82
        %p282 = pneg %p106
        %p283 = pneg %p103
        %p284 = pneg %p127
        %p285 = pneg %p124
        %p286 = pneg %p148
        %p287 = pneg %p145
        %p288 = pneg %p169
        %p289 = pneg %p166
        %p290 = pneg %p190
        %p291 = pneg %p187
        %p292 = pneg %p216
        %p293 = pneg %p213
        %s294 = sand.u32 %s203, 1
        %s295 = scalar_lea.sflag [#allocation4], %s294
        %s296 = sand.u32 %s203, 1
        %s297 = smul.addr %s296, 256
        %s298 = scalar_lea.vmem [#allocation3], %s297
        %p299 = scmp.lt.s32.totalorder %s22, 1
        %s300 = scalar_select %p299, %s22, 1
        %s301 = smul.addr %s300, 32
        %s302 = smul.addr %s301, 8
        %s303 = scalar_lea.vmem %s0, %s302
        %v305 = vld [vmem:[%s303] sm:$0xff]
        %v306 = vld [vmem:[%s303 + $0x8] sm:$0xff]
        %v307 = vld [vmem:[%s303 + $0x10] sm:$0xff]
        %v308 = vld [vmem:[%s303 + $0x18] sm:$0xff]
        %v309 = vld [vmem:[%s303 + $0x20] sm:$0xff]
        %v310 = vld [vmem:[%s303 + $0x28] sm:$0xff]
        %v311 = vld [vmem:[%s303 + $0x30] sm:$0xff]
        %v312 = vld [vmem:[%s303 + $0x38] sm:$0xff]
        %v313 = vld [vmem:[%s303 + $0x40] sm:$0xff]
        %v314 = vld [vmem:[%s303 + $0x48] sm:$0xff]
        %v315 = vld [vmem:[%s303 + $0x50] sm:$0xff]
        %v316 = vld [vmem:[%s303 + $0x58] sm:$0xff]
        %v317 = vld [vmem:[%s303 + $0x60] sm:$0xff]
        %v318 = vld [vmem:[%s303 + $0x68] sm:$0xff]
        %v319 = vld [vmem:[%s303 + $0x70] sm:$0xff]
        %v320 = vld [vmem:[%s303 + $0x78] sm:$0xff]
        %v321 = vld [vmem:[%s303 + $0x80] sm:$0xff]
        %v322 = vld [vmem:[%s303 + $0x88] sm:$0xff]
        %v323 = vld [vmem:[%s303 + $0x90] sm:$0xff]
        %v324 = vld [vmem:[%s303 + $0x98] sm:$0xff]
        %v325 = vld [vmem:[%s303 + $0xa0] sm:$0xff]
        %v326 = vld [vmem:[%s303 + $0xa8] sm:$0xff]
        %v327 = vld [vmem:[%s303 + $0xb0] sm:$0xff]
        %v328 = vld [vmem:[%s303 + $0xb8] sm:$0xff]
        %v329 = vld [vmem:[%s303 + $0xc0] sm:$0xff]
        %v330 = vld [vmem:[%s303 + $0xc8] sm:$0xff]
        %v331 = vld [vmem:[%s303 + $0xd0] sm:$0xff]
        %v332 = vld [vmem:[%s303 + $0xd8] sm:$0xff]
        %v333 = vld [vmem:[%s303 + $0xe0] sm:$0xff]
        %v334 = vld [vmem:[%s303 + $0xe8] sm:$0xff]
        %v335 = vld [vmem:[%s303 + $0xf0] sm:$0xff]
        %v336 = vld [vmem:[%s303 + $0xf8] sm:$0xff]
        %v337 = vld [vmem:[%s1] sm:$0x1]
        %v339 = vlaneseq
        %v340 = vshrl.u32 %v339, 7
        %v341 = vsub.s32 0, %v340
        %v342 = vrot.slane %v337, %v341
        %v344 = vmul.f32 %v305, %v342
        %v345 = vmul.f32 %v306, %v342
        %v346 = vmul.f32 %v307, %v342
        %v347 = vmul.f32 %v308, %v342
        %v348 = vmul.f32 %v309, %v342
        %v349 = vmul.f32 %v310, %v342
        %v350 = vmul.f32 %v311, %v342
        %v351 = vmul.f32 %v312, %v342
        %v352 = vmul.f32 %v313, %v342
        %v353 = vmul.f32 %v314, %v342
        %v354 = vmul.f32 %v315, %v342
        %v355 = vmul.f32 %v316, %v342
        %v356 = vmul.f32 %v317, %v342
        %v357 = vmul.f32 %v318, %v342
        %v358 = vmul.f32 %v319, %v342
        %v359 = vmul.f32 %v320, %v342
        %v360 = vmul.f32 %v321, %v342
        %v361 = vmul.f32 %v322, %v342
        %v362 = vmul.f32 %v323, %v342
        %v363 = vmul.f32 %v324, %v342
        %v364 = vmul.f32 %v325, %v342
        %v365 = vmul.f32 %v326, %v342
        %v366 = vmul.f32 %v327, %v342
        %v367 = vmul.f32 %v328, %v342
        %v368 = vmul.f32 %v329, %v342
        %v369 = vmul.f32 %v330, %v342
        %v370 = vmul.f32 %v331, %v342
        %v371 = vmul.f32 %v332, %v342
        %v372 = vmul.f32 %v333, %v342
        %v373 = vmul.f32 %v334, %v342
        %v374 = vmul.f32 %v335, %v342
        %v375 = vmul.f32 %v336, %v342
        %v376 = vld [vmem:[%s2] sm:$0x1]
        %v378 = vlaneseq
        %v379 = vshrl.u32 %v378, 7
        %v380 = vsub.s32 0, %v379
        %v381 = vrot.slane %v376, %v380
        %v383 = vadd.f32 %v344, %v381
        %v384 = vadd.f32 %v345, %v381
        %v385 = vadd.f32 %v346, %v381
        %v386 = vadd.f32 %v347, %v381
        %v387 = vadd.f32 %v348, %v381
        %v388 = vadd.f32 %v349, %v381
        %v389 = vadd.f32 %v350, %v381
        %v390 = vadd.f32 %v351, %v381
        %v391 = vadd.f32 %v352, %v381
        %v392 = vadd.f32 %v353, %v381
        %v393 = vadd.f32 %v354, %v381
        %v394 = vadd.f32 %v355, %v381
        %v395 = vadd.f32 %v356, %v381
        %v396 = vadd.f32 %v357, %v381
        %v397 = vadd.f32 %v358, %v381
        %v398 = vadd.f32 %v359, %v381
        %v399 = vadd.f32 %v360, %v381
        %v400 = vadd.f32 %v361, %v381
        %v401 = vadd.f32 %v362, %v381
        %v402 = vadd.f32 %v363, %v381
        %v403 = vadd.f32 %v364, %v381
        %v404 = vadd.f32 %v365, %v381
        %v405 = vadd.f32 %v366, %v381
        %v406 = vadd.f32 %v367, %v381
        %v407 = vadd.f32 %v368, %v381
        %v408 = vadd.f32 %v369, %v381
        %v409 = vadd.f32 %v370, %v381
        %v410 = vadd.f32 %v371, %v381
        %v411 = vadd.f32 %v372, %v381
        %v412 = vadd.f32 %v373, %v381
        %v413 = vadd.f32 %v374, %v381
        %v414 = vadd.f32 %v375, %v381
        %v415 = vmax.f32 %v383, 0.0
        %v416 = vmax.f32 %v384, 0.0
        %v417 = vmax.f32 %v385, 0.0
        %v418 = vmax.f32 %v386, 0.0
        %v419 = vmax.f32 %v387, 0.0
        %v420 = vmax.f32 %v388, 0.0
        %v421 = vmax.f32 %v389, 0.0
        %v422 = vmax.f32 %v390, 0.0
        %v423 = vmax.f32 %v391, 0.0
        %v424 = vmax.f32 %v392, 0.0
        %v425 = vmax.f32 %v393, 0.0
        %v426 = vmax.f32 %v394, 0.0
        %v427 = vmax.f32 %v395, 0.0
        %v428 = vmax.f32 %v396, 0.0
        %v429 = vmax.f32 %v397, 0.0
        %v430 = vmax.f32 %v398, 0.0
        %v431 = vmax.f32 %v399, 0.0
        %v432 = vmax.f32 %v400, 0.0
        %v433 = vmax.f32 %v401, 0.0
        %v434 = vmax.f32 %v402, 0.0
        %v435 = vmax.f32 %v403, 0.0
        %v436 = vmax.f32 %v404, 0.0
        %v437 = vmax.f32 %v405, 0.0
        %v438 = vmax.f32 %v406, 0.0
        %v439 = vmax.f32 %v407, 0.0
        %v440 = vmax.f32 %v408, 0.0
        %v441 = vmax.f32 %v409, 0.0
        %v442 = vmax.f32 %v410, 0.0
        %v443 = vmax.f32 %v411, 0.0
        %v444 = vmax.f32 %v412, 0.0
        %v445 = vmax.f32 %v413, 0.0
        %v446 = vmax.f32 %v414, 0.0
        %v447 = vpack.c.bf16 %v416, %v415
        %v448 = vpack.c.bf16 %v418, %v417
        %v449 = vpack.c.bf16 %v420, %v419
        %v450 = vpack.c.bf16 %v422, %v421
        %v451 = vpack.c.bf16 %v424, %v423
        %v452 = vpack.c.bf16 %v426, %v425
        %v453 = vpack.c.bf16 %v428, %v427
        %v454 = vpack.c.bf16 %v430, %v429
        %v455 = vpack.c.bf16 %v432, %v431
        %v456 = vpack.c.bf16 %v434, %v433
        %v457 = vpack.c.bf16 %v436, %v435
        %v458 = vpack.c.bf16 %v438, %v437
        %v459 = vpack.c.bf16 %v440, %v439
        %v460 = vpack.c.bf16 %v442, %v441
        %v461 = vpack.c.bf16 %v444, %v443
        %v462 = vpack.c.bf16 %v446, %v445
        %v463 = vld [vmem:[%s3] sm:$0xf]
        %v464 = vld [vmem:[%s3 + $0x4] sm:$0xf]
        %v465 = vld [vmem:[%s3 + $0x8] sm:$0xf]
        %v466 = vld [vmem:[%s3 + $0xc] sm:$0xf]
        %v467 = vld [vmem:[%s3 + $0x10] sm:$0xf]
        %v468 = vld [vmem:[%s3 + $0x14] sm:$0xf]
        %v469 = vld [vmem:[%s3 + $0x18] sm:$0xf]
        %v470 = vld [vmem:[%s3 + $0x1c] sm:$0xf]
        %v471 = vld [vmem:[%s3 + $0x20] sm:$0xf]
        %v472 = vld [vmem:[%s3 + $0x24] sm:$0xf]
        %v473 = vld [vmem:[%s3 + $0x28] sm:$0xf]
        %v474 = vld [vmem:[%s3 + $0x2c] sm:$0xf]
        %v475 = vld [vmem:[%s3 + $0x30] sm:$0xf]
        %v476 = vld [vmem:[%s3 + $0x34] sm:$0xf]
        %v477 = vld [vmem:[%s3 + $0x38] sm:$0xf]
        %v478 = vld [vmem:[%s3 + $0x3c] sm:$0xf]
        %v479 = vld [vmem:[%s4] sm:$0x1]
        %v481 = vlaneseq
        %v482 = vshrl.u32 %v481, 7
        %v483 = vsub.s32 0, %v482
        %v484 = vrot.slane %v479, %v483
        %v502 = vunpack.c.l.b16 %v463
        %v503 = vunpack.c.l.b16 %v464
        %v504 = vunpack.c.l.b16 %v465
        %v505 = vunpack.c.l.b16 %v466
        %v506 = vunpack.c.l.b16 %v467
        %v507 = vunpack.c.l.b16 %v468
        %v508 = vunpack.c.l.b16 %v469
        %v509 = vunpack.c.l.b16 %v470
        %v510 = vunpack.c.l.b16 %v471
        %v511 = vunpack.c.l.b16 %v472
        %v512 = vunpack.c.l.b16 %v473
        %v513 = vunpack.c.l.b16 %v474
        %v514 = vunpack.c.l.b16 %v475
        %v515 = vunpack.c.l.b16 %v476
        %v516 = vunpack.c.l.b16 %v477
        %v517 = vunpack.c.l.b16 %v478
        %v518 = vpack.c.b16 %v503, %v502
        %v519 = vpack.c.b16 %v505, %v504
        %v520 = vpack.c.b16 %v507, %v506
        %v521 = vpack.c.b16 %v509, %v508
        %v522 = vpack.c.b16 %v511, %v510
        %v523 = vpack.c.b16 %v513, %v512
        %v524 = vpack.c.b16 %v515, %v514
        %v525 = vpack.c.b16 %v517, %v516
        %534 = vmatprep.subr.bf16.mxu0 0
        %535 = vmatpush1.bf16.msra.mxu0 %v518
        %536 = vmatprep.subr.bf16.mxu0 0
        %537 = vmatpush1.bf16.msra.mxu0 %v519
        %538 = vmatprep.subr.bf16.mxu0 0
        %539 = vmatpush1.bf16.msra.mxu0 %v520
        %540 = vmatprep.subr.bf16.mxu0 0
        %541 = vmatpush1.bf16.msra.mxu0 %v521
        %542 = vmatprep.subr.bf16.mxu0 0
        %543 = vmatpush1.bf16.msra.mxu0 %v522
        %544 = vmatprep.subr.bf16.mxu0 0
        %545 = vmatpush1.bf16.msra.mxu0 %v523
        %546 = vmatprep.subr.bf16.mxu0 0
        %547 = vmatpush1.bf16.msra.mxu0 %v524
        %548 = vmatprep.subr.bf16.mxu0 0
        %549 = vmatpush1.bf16.msra.mxu0 %v525
        %550 = vmatprep.subr.bf16.mxu0 0
        %551 = vmatpush1.bf16.msra.mxu0 0
        %552 = vmatprep.subr.bf16.mxu0 0
        %553 = vmatpush1.bf16.msra.mxu0 0
        %554 = vmatprep.subr.bf16.mxu0 0
        %555 = vmatpush1.bf16.msra.mxu0 0
        %556 = vmatprep.subr.bf16.mxu0 0
        %557 = vmatpush1.bf16.msra.mxu0 0
        %558 = vmatprep.subr.bf16.mxu0 0
        %559 = vmatpush1.bf16.msra.mxu0 0
        %560 = vmatprep.subr.bf16.mxu0 0
        %561 = vmatpush1.bf16.msra.mxu0 0
        %562 = vmatprep.subr.bf16.mxu0 0
        %563 = vmatpush1.bf16.msra.mxu0 0
        %564 = vmatprep.subr.bf16.mxu0 0
        %565 = vmatpush1.bf16.msra.mxu0 0
        %566 = vmatprep.mubr.bf16.mxu0 0
        %567 = vmatmul.mubr.bf16.gmra.mrb[0].mxu0 %v447
        %v568 = vpop.f32.mrb[0].mxu0
        %v569 = vadd.f32 %v484, %v568
        %v570 = vpop.f32.mrb[0].mxu0
        %v571 = vpop.f32.mrb[0].mxu0
        %v572 = vadd.f32 %v484, %v571
        %v573 = vpop.f32.mrb[0].mxu0
        %574 = vmatprep.mubr.bf16.mxu0 0
        %575 = vmatmul.mubr.bf16.gmra.mrb[0].mxu0 %v448
        %v576 = vpop.f32.mrb[0].mxu0
        %v577 = vadd.f32 %v484, %v576
        %v578 = vpop.f32.mrb[0].mxu0
        %v579 = vpop.f32.mrb[0].mxu0
        %v580 = vadd.f32 %v484, %v579
        %v581 = vpop.f32.mrb[0].mxu0
        %582 = vmatprep.mubr.bf16.mxu0 0
        %583 = vmatmul.mubr.bf16.gmra.mrb[0].mxu0 %v449
        %v584 = vpop.f32.mrb[0].mxu0
        %v585 = vadd.f32 %v484, %v584
        %v586 = vpop.f32.mrb[0].mxu0
        %v587 = vpop.f32.mrb[0].mxu0
        %v588 = vadd.f32 %v484, %v587
        %v589 = vpop.f32.mrb[0].mxu0
        %590 = vmatprep.mubr.bf16.mxu0 0
        %591 = vmatmul.mubr.bf16.gmra.mrb[0].mxu0 %v450
        %v592 = vpop.f32.mrb[0].mxu0
        %v593 = vadd.f32 %v484, %v592
        %v594 = vpop.f32.mrb[0].mxu0
        %v595 = vpop.f32.mrb[0].mxu0
        %v596 = vadd.f32 %v484, %v595
        %v597 = vpop.f32.mrb[0].mxu0
        %598 = vmatprep.mubr.bf16.mxu0 0
        %599 = vmatmul.mubr.bf16.gmra.mrb[0].mxu0 %v451
        %v600 = vpop.f32.mrb[0].mxu0
        %v601 = vadd.f32 %v484, %v600
        %v602 = vpop.f32.mrb[0].mxu0
        %v603 = vpop.f32.mrb[0].mxu0
        %v604 = vadd.f32 %v484, %v603
        %v605 = vpop.f32.mrb[0].mxu0
        %606 = vmatprep.mubr.bf16.mxu0 0
        %607 = vmatmul.mubr.bf16.gmra.mrb[0].mxu0 %v452
        %v608 = vpop.f32.mrb[0].mxu0
        %v609 = vadd.f32 %v484, %v608
        %v610 = vpop.f32.mrb[0].mxu0
        %v611 = vpop.f32.mrb[0].mxu0
        %v612 = vadd.f32 %v484, %v611
        %v613 = vpop.f32.mrb[0].mxu0
        %614 = vmatprep.mubr.bf16.mxu0 0
        %615 = vmatmul.mubr.bf16.gmra.mrb[0].mxu0 %v453
        %v616 = vpop.f32.mrb[0].mxu0
        %v617 = vadd.f32 %v484, %v616
        %v618 = vpop.f32.mrb[0].mxu0
        %v619 = vpop.f32.mrb[0].mxu0
        %v620 = vadd.f32 %v484, %v619
        %v621 = vpop.f32.mrb[0].mxu0
        %622 = vmatprep.mubr.bf16.mxu0 0
        %623 = vmatmul.mubr.bf16.gmra.mrb[0].mxu0 %v454
        %v624 = vpop.f32.mrb[0].mxu0
        %v625 = vadd.f32 %v484, %v624
        %v626 = vpop.f32.mrb[0].mxu0
        %v627 = vpop.f32.mrb[0].mxu0
        %v628 = vadd.f32 %v484, %v627
        %v629 = vpop.f32.mrb[0].mxu0
        %630 = vmatprep.mubr.bf16.mxu0 0
        %631 = vmatmul.mubr.bf16.gmra.mrb[0].mxu0 %v455
        %v632 = vpop.f32.mrb[0].mxu0
        %v633 = vadd.f32 %v484, %v632
        %v634 = vpop.f32.mrb[0].mxu0
        %v635 = vpop.f32.mrb[0].mxu0
        %v636 = vadd.f32 %v484, %v635
        %v637 = vpop.f32.mrb[0].mxu0
        %638 = vmatprep.mubr.bf16.mxu0 0
        %639 = vmatmul.mubr.bf16.gmra.mrb[0].mxu0 %v456
        %v640 = vpop.f32.mrb[0].mxu0
        %v641 = vadd.f32 %v484, %v640
        %v642 = vpop.f32.mrb[0].mxu0
        %v643 = vpop.f32.mrb[0].mxu0
        %v644 = vadd.f32 %v484, %v643
        %v645 = vpop.f32.mrb[0].mxu0
        %646 = vmatprep.mubr.bf16.mxu0 0
        %647 = vmatmul.mubr.bf16.gmra.mrb[0].mxu0 %v457
        %v648 = vpop.f32.mrb[0].mxu0
        %v649 = vadd.f32 %v484, %v648
        %v650 = vpop.f32.mrb[0].mxu0
        %v651 = vpop.f32.mrb[0].mxu0
        %v652 = vadd.f32 %v484, %v651
        %v653 = vpop.f32.mrb[0].mxu0
        %654 = vmatprep.mubr.bf16.mxu0 0
        %655 = vmatmul.mubr.bf16.gmra.mrb[0].mxu0 %v458
        %v656 = vpop.f32.mrb[0].mxu0
        %v657 = vadd.f32 %v484, %v656
        %v658 = vpop.f32.mrb[0].mxu0
        %v659 = vpop.f32.mrb[0].mxu0
        %v660 = vadd.f32 %v484, %v659
        %v661 = vpop.f32.mrb[0].mxu0
        %662 = vmatprep.mubr.bf16.mxu0 0
        %663 = vmatmul.mubr.bf16.gmra.mrb[0].mxu0 %v459
        %v664 = vpop.f32.mrb[0].mxu0
        %v665 = vadd.f32 %v484, %v664
        %v666 = vpop.f32.mrb[0].mxu0
        %v667 = vpop.f32.mrb[0].mxu0
        %v668 = vadd.f32 %v484, %v667
        %v669 = vpop.f32.mrb[0].mxu0
        %670 = vmatprep.mubr.bf16.mxu0 0
        %671 = vmatmul.mubr.bf16.gmra.mrb[0].mxu0 %v460
        %v672 = vpop.f32.mrb[0].mxu0
        %v673 = vadd.f32 %v484, %v672
        %v674 = vpop.f32.mrb[0].mxu0
        %v675 = vpop.f32.mrb[0].mxu0
        %v676 = vadd.f32 %v484, %v675
        %v677 = vpop.f32.mrb[0].mxu0
        %678 = vmatprep.mubr.bf16.mxu0 0
        %679 = vmatmul.mubr.bf16.gmra.mrb[0].mxu0 %v461
        %v680 = vpop.f32.mrb[0].mxu0
        %v681 = vadd.f32 %v484, %v680
        %v682 = vpop.f32.mrb[0].mxu0
        %v683 = vpop.f32.mrb[0].mxu0
        %v684 = vadd.f32 %v484, %v683
        %v685 = vpop.f32.mrb[0].mxu0
        %686 = vmatprep.mubr.bf16.mxu0 0
        %687 = vmatmul.mubr.bf16.gmra.mrb[0].mxu0 %v462
        %v688 = vpop.f32.mrb[0].mxu0
        %v689 = vadd.f32 %v484, %v688
        %v690 = vpop.f32.mrb[0].mxu0
        %v691 = vpop.f32.mrb[0].mxu0
        %v692 = vadd.f32 %v484, %v691
        %v693 = vpop.f32.mrb[0].mxu0
        %694 = vdwg.mxu0
        %v695 = vmax.f32 %v569, 0.0
        %v696 = vmax.f32 %v572, 0.0
        %v697 = vmax.f32 %v577, 0.0
        %v698 = vmax.f32 %v580, 0.0
        %v699 = vmax.f32 %v585, 0.0
        %v700 = vmax.f32 %v588, 0.0
        %v701 = vmax.f32 %v593, 0.0
        %v702 = vmax.f32 %v596, 0.0
        %v703 = vmax.f32 %v601, 0.0
        %v704 = vmax.f32 %v604, 0.0
        %v705 = vmax.f32 %v609, 0.0
        %v706 = vmax.f32 %v612, 0.0
        %v707 = vmax.f32 %v617, 0.0
        %v708 = vmax.f32 %v620, 0.0
        %v709 = vmax.f32 %v625, 0.0
        %v710 = vmax.f32 %v628, 0.0
        %v711 = vmax.f32 %v633, 0.0
        %v712 = vmax.f32 %v636, 0.0
        %v713 = vmax.f32 %v641, 0.0
        %v714 = vmax.f32 %v644, 0.0
        %v715 = vmax.f32 %v649, 0.0
        %v716 = vmax.f32 %v652, 0.0
        %v717 = vmax.f32 %v657, 0.0
        %v718 = vmax.f32 %v660, 0.0
        %v719 = vmax.f32 %v665, 0.0
        %v720 = vmax.f32 %v668, 0.0
        %v721 = vmax.f32 %v673, 0.0
        %v722 = vmax.f32 %v676, 0.0
        %v723 = vmax.f32 %v681, 0.0
        %v724 = vmax.f32 %v684, 0.0
        %v725 = vmax.f32 %v689, 0.0
        %v726 = vmax.f32 %v692, 0.0
        %v727 = vpack.c.bf16 %v696, %v695
        %v728 = vpack.c.bf16 %v698, %v697
        %v729 = vpack.c.bf16 %v700, %v699
        %v730 = vpack.c.bf16 %v702, %v701
        %v731 = vpack.c.bf16 %v704, %v703
        %v732 = vpack.c.bf16 %v706, %v705
        %v733 = vpack.c.bf16 %v708, %v707
        %v734 = vpack.c.bf16 %v710, %v709
        %v735 = vpack.c.bf16 %v712, %v711
        %v736 = vpack.c.bf16 %v714, %v713
        %v737 = vpack.c.bf16 %v716, %v715
        %v738 = vpack.c.bf16 %v718, %v717
        %v739 = vpack.c.bf16 %v720, %v719
        %v740 = vpack.c.bf16 %v722, %v721
        %v741 = vpack.c.bf16 %v724, %v723
        %v742 = vpack.c.bf16 %v726, %v725
        %vm743 = vcmask 257024
        %744 = vst.msk [vmem:[#allocation2] sm:$0xf] %vm743, 0
        %745 = vst.msk [vmem:[#allocation2 + $0x4] sm:$0xf] %vm743, 0
        %vm746 = vcmask 253952
        %747 = vst.msk [vmem:[#allocation2 + $0x8] sm:$0x1] %vm746, 0
        %s748 = scalar_lea.vmem [#allocation2], 204
        %749 = vst.msk [vmem:[%s748] sm:$0xf] %vm743, 0
        %750 = vst.msk [vmem:[%s748 + $0x4] sm:$0xf] %vm743, 0
        %751 = vst.msk [vmem:[%s748 + $0x8] sm:$0x1] %vm746, 0
        %vm752 = vcmask 253952
        %vm753 = vsmask.f32 256
        %vm754 = vmand %vm752, %vm753
        %v755 = vld [vmem:[#allocation2] sm:$0x1]
        %v756 = vsel %vm754, 0, %v755
        %757 = vst [vmem:[#allocation2] sm:$0x1] %v756
        %v758 = vld [vmem:[#allocation2 + $0xc] sm:$0x1]
        %v759 = vsel %vm754, 0, %v758
        %760 = vst [vmem:[#allocation2 + $0xc] sm:$0x1] %v759
        %v761 = vld [vmem:[#allocation2 + $0x18] sm:$0x1]
        %v762 = vsel %vm754, 0, %v761
        %763 = vst [vmem:[#allocation2 + $0x18] sm:$0x1] %v762
        %v764 = vld [vmem:[#allocation2 + $0x24] sm:$0x1]
        %v765 = vsel %vm754, 0, %v764
        %766 = vst [vmem:[#allocation2 + $0x24] sm:$0x1] %v765
        %v767 = vld [vmem:[#allocation2 + $0x30] sm:$0x1]
        %v768 = vsel %vm754, 0, %v767
        %769 = vst [vmem:[#allocation2 + $0x30] sm:$0x1] %v768
        %v770 = vld [vmem:[#allocation2 + $0x3c] sm:$0x1]
        %v771 = vsel %vm754, 0, %v770
        %772 = vst [vmem:[#allocation2 + $0x3c] sm:$0x1] %v771
        %v773 = vld [vmem:[#allocation2 + $0x48] sm:$0x1]
        %v774 = vsel %vm754, 0, %v773
        %775 = vst [vmem:[#allocation2 + $0x48] sm:$0x1] %v774
        %v776 = vld [vmem:[#allocation2 + $0x54] sm:$0x1]
        %v777 = vsel %vm754, 0, %v776
        %778 = vst [vmem:[#allocation2 + $0x54] sm:$0x1] %v777
        %v779 = vld [vmem:[#allocation2 + $0x60] sm:$0x1]
        %v780 = vsel %vm754, 0, %v779
        %781 = vst [vmem:[#allocation2 + $0x60] sm:$0x1] %v780
        %v782 = vld [vmem:[#allocation2 + $0x6c] sm:$0x1]
        %v783 = vsel %vm754, 0, %v782
        %784 = vst [vmem:[#allocation2 + $0x6c] sm:$0x1] %v783
        %v785 = vld [vmem:[#allocation2 + $0x78] sm:$0x1]
        %v786 = vsel %vm754, 0, %v785
        %787 = vst [vmem:[#allocation2 + $0x78] sm:$0x1] %v786
        %v788 = vld [vmem:[#allocation2 + $0x84] sm:$0x1]
        %v789 = vsel %vm754, 0, %v788
        %790 = vst [vmem:[#allocation2 + $0x84] sm:$0x1] %v789
        %v791 = vld [vmem:[#allocation2 + $0x90] sm:$0x1]
        %v792 = vsel %vm754, 0, %v791
        %793 = vst [vmem:[#allocation2 + $0x90] sm:$0x1] %v792
        %v794 = vld [vmem:[#allocation2 + $0x9c] sm:$0x1]
        %v795 = vsel %vm754, 0, %v794
        %796 = vst [vmem:[#allocation2 + $0x9c] sm:$0x1] %v795
        %v797 = vld [vmem:[#allocation2 + $0xa8] sm:$0x1]
        %v798 = vsel %vm754, 0, %v797
        %799 = vst [vmem:[#allocation2 + $0xa8] sm:$0x1] %v798
        %v800 = vld [vmem:[#allocation2 + $0xb4] sm:$0x1]
        %v801 = vsel %vm754, 0, %v800
        %802 = vst [vmem:[#allocation2 + $0xb4] sm:$0x1] %v801
        %v803 = vld [vmem:[#allocation2 + $0xc0] sm:$0x1]
        %v804 = vsel %vm754, 0, %v803
        %805 = vst [vmem:[#allocation2 + $0xc0] sm:$0x1] %v804
        %v806 = vld [vmem:[#allocation2 + $0xcc] sm:$0x1]
        %v807 = vsel %vm754, 0, %v806
        %808 = vst [vmem:[#allocation2 + $0xcc] sm:$0x1] %v807
        %vm809 = vsmask.f32 7938
        %vm810 = vmand %vm752, %vm809
        %v811 = vld [vmem:[#allocation2 + $0x8] sm:$0x1]
        %v812 = vsel %vm810, 0, %v811
        %813 = vst [vmem:[#allocation2 + $0x8] sm:$0x1] %v812
        %v814 = vld [vmem:[#allocation2 + $0x14] sm:$0x1]
        %v815 = vsel %vm810, 0, %v814
        %816 = vst [vmem:[#allocation2 + $0x14] sm:$0x1] %v815
        %v817 = vld [vmem:[#allocation2 + $0x20] sm:$0x1]
        %v818 = vsel %vm810, 0, %v817
        %819 = vst [vmem:[#allocation2 + $0x20] sm:$0x1] %v818
        %v820 = vld [vmem:[#allocation2 + $0x2c] sm:$0x1]
        %v821 = vsel %vm810, 0, %v820
        %822 = vst [vmem:[#allocation2 + $0x2c] sm:$0x1] %v821
        %v823 = vld [vmem:[#allocation2 + $0x38] sm:$0x1]
        %v824 = vsel %vm810, 0, %v823
        %825 = vst [vmem:[#allocation2 + $0x38] sm:$0x1] %v824
        %v826 = vld [vmem:[#allocation2 + $0x44] sm:$0x1]
        %v827 = vsel %vm810, 0, %v826
        %828 = vst [vmem:[#allocation2 + $0x44] sm:$0x1] %v827
        %v829 = vld [vmem:[#allocation2 + $0x50] sm:$0x1]
        %v830 = vsel %vm810, 0, %v829
        %831 = vst [vmem:[#allocation2 + $0x50] sm:$0x1] %v830
        %v832 = vld [vmem:[#allocation2 + $0x5c] sm:$0x1]
        %v833 = vsel %vm810, 0, %v832
        %834 = vst [vmem:[#allocation2 + $0x5c] sm:$0x1] %v833
        %v835 = vld [vmem:[#allocation2 + $0x68] sm:$0x1]
        %v836 = vsel %vm810, 0, %v835
        %837 = vst [vmem:[#allocation2 + $0x68] sm:$0x1] %v836
        %v838 = vld [vmem:[#allocation2 + $0x74] sm:$0x1]
        %v839 = vsel %vm810, 0, %v838
        %840 = vst [vmem:[#allocation2 + $0x74] sm:$0x1] %v839
        %v841 = vld [vmem:[#allocation2 + $0x80] sm:$0x1]
        %v842 = vsel %vm810, 0, %v841
        %843 = vst [vmem:[#allocation2 + $0x80] sm:$0x1] %v842
        %v844 = vld [vmem:[#allocation2 + $0x8c] sm:$0x1]
        %v845 = vsel %vm810, 0, %v844
        %846 = vst [vmem:[#allocation2 + $0x8c] sm:$0x1] %v845
        %v847 = vld [vmem:[#allocation2 + $0x98] sm:$0x1]
        %v848 = vsel %vm810, 0, %v847
        %849 = vst [vmem:[#allocation2 + $0x98] sm:$0x1] %v848
        %v850 = vld [vmem:[#allocation2 + $0xa4] sm:$0x1]
        %v851 = vsel %vm810, 0, %v850
        %852 = vst [vmem:[#allocation2 + $0xa4] sm:$0x1] %v851
        %v853 = vld [vmem:[#allocation2 + $0xb0] sm:$0x1]
        %v854 = vsel %vm810, 0, %v853
        %855 = vst [vmem:[#allocation2 + $0xb0] sm:$0x1] %v854
        %v856 = vld [vmem:[#allocation2 + $0xbc] sm:$0x1]
        %v857 = vsel %vm810, 0, %v856
        %858 = vst [vmem:[#allocation2 + $0xbc] sm:$0x1] %v857
        %v859 = vld [vmem:[#allocation2 + $0xc8] sm:$0x1]
        %v860 = vsel %vm810, 0, %v859
        %861 = vst [vmem:[#allocation2 + $0xc8] sm:$0x1] %v860
        %v862 = vld [vmem:[#allocation2 + $0xd4] sm:$0x1]
        %v863 = vsel %vm810, 0, %v862
        %864 = vst [vmem:[#allocation2 + $0xd4] sm:$0x1] %v863
        %v881 = vunpack.c.l.b16 %v727
        %v882 = vunpack.c.h.b16 %v727
        %v883 = vunpack.c.l.b16 %v728
        %v884 = vunpack.c.h.b16 %v728
        %v885 = vunpack.c.l.b16 %v729
        %v886 = vunpack.c.h.b16 %v729
        %v887 = vunpack.c.l.b16 %v730
        %v888 = vunpack.c.h.b16 %v730
        %v889 = vunpack.c.l.b16 %v731
        %v890 = vunpack.c.h.b16 %v731
        %v891 = vunpack.c.l.b16 %v732
        %v892 = vunpack.c.h.b16 %v732
        %v893 = vunpack.c.l.b16 %v733
        %v894 = vunpack.c.h.b16 %v733
        %v895 = vunpack.c.l.b16 %v734
        %v896 = vunpack.c.h.b16 %v734
        %v897 = vunpack.c.l.b16 %v735
        %v898 = vunpack.c.h.b16 %v735
        %v899 = vunpack.c.l.b16 %v736
        %v900 = vunpack.c.h.b16 %v736
        %v901 = vunpack.c.l.b16 %v737
        %v902 = vunpack.c.h.b16 %v737
        %v903 = vunpack.c.l.b16 %v738
        %v904 = vunpack.c.h.b16 %v738
        %v905 = vunpack.c.l.b16 %v739
        %v906 = vunpack.c.h.b16 %v739
        %v907 = vunpack.c.l.b16 %v740
        %v908 = vunpack.c.h.b16 %v740
        %v909 = vunpack.c.l.b16 %v741
        %v910 = vunpack.c.h.b16 %v741
        %v911 = vunpack.c.l.b16 %v742
        %v912 = vunpack.c.h.b16 %v742
        %v913 = vpack.c.b16 %v881, %v881
        %v914 = vpack.c.b16 %v882, %v882
        %v915 = vpack.c.b16 %v883, %v883
        %v916 = vpack.c.b16 %v884, %v884
        %v917 = vpack.c.b16 %v885, %v885
        %v918 = vpack.c.b16 %v886, %v886
        %v919 = vpack.c.b16 %v887, %v887
        %v920 = vpack.c.b16 %v888, %v888
        %v921 = vpack.c.b16 %v889, %v889
        %v922 = vpack.c.b16 %v890, %v890
        %v923 = vpack.c.b16 %v891, %v891
        %v924 = vpack.c.b16 %v892, %v892
        %v925 = vpack.c.b16 %v893, %v893
        %v926 = vpack.c.b16 %v894, %v894
        %v927 = vpack.c.b16 %v895, %v895
        %v928 = vpack.c.b16 %v896, %v896
        %v929 = vpack.c.b16 %v897, %v897
        %v930 = vpack.c.b16 %v898, %v898
        %v931 = vpack.c.b16 %v899, %v899
        %v932 = vpack.c.b16 %v900, %v900
        %v933 = vpack.c.b16 %v901, %v901
        %v934 = vpack.c.b16 %v902, %v902
        %v935 = vpack.c.b16 %v903, %v903
        %v936 = vpack.c.b16 %v904, %v904
        %v937 = vpack.c.b16 %v905, %v905
        %v938 = vpack.c.b16 %v906, %v906
        %v939 = vpack.c.b16 %v907, %v907
        %v940 = vpack.c.b16 %v908, %v908
        %v941 = vpack.c.b16 %v909, %v909
        %v942 = vpack.c.b16 %v910, %v910
        %v943 = vpack.c.b16 %v911, %v911
        %v944 = vpack.c.b16 %v912, %v912
        %vm945 = vsmask.f32 4368
        %vm946 = vmor %vm753, %vm945
        %v948 = vshrl.u32 %v913, 16
        %v950 = vrot.slane %v948, 7
        %v951 = vshll.u32 %v913, 16
        %v953 = vor.u32 %v950, %v951
        %v954 = vrot.slane %v950, 4
        %v956 = vshrl.u32 %v914, 16
        %v958 = vrot.slane %v956, 7
        %v959 = vshll.u32 %v914, 16
        %v961 = vor.u32 %v958, %v959
        %v962 = vsel %vm946, %v954, %v961
        %v963 = vrot.slane %v958, 4
        %v965 = vshrl.u32 %v915, 16
        %v967 = vrot.slane %v965, 7
        %v968 = vshll.u32 %v915, 16
        %v970 = vor.u32 %v967, %v968
        %v971 = vrot.slane %v967, 4
        %v973 = vshrl.u32 %v916, 16
        %v975 = vrot.slane %v973, 7
        %v976 = vshll.u32 %v916, 16
        %v978 = vor.u32 %v975, %v976
        %v979 = vsel %vm946, %v971, %v978
        %v980 = vrot.slane %v975, 4
        %v982 = vshrl.u32 %v917, 16
        %v984 = vrot.slane %v982, 7
        %v985 = vshll.u32 %v917, 16
        %v987 = vor.u32 %v984, %v985
        %v988 = vrot.slane %v984, 4
        %v990 = vshrl.u32 %v918, 16
        %v992 = vrot.slane %v990, 7
        %v993 = vshll.u32 %v918, 16
        %v995 = vor.u32 %v992, %v993
        %v996 = vsel %vm946, %v988, %v995
        %v997 = vrot.slane %v992, 4
        %v999 = vshrl.u32 %v919, 16
        %v1001 = vrot.slane %v999, 7
        %v1002 = vshll.u32 %v919, 16
        %v1004 = vor.u32 %v1001, %v1002
        %v1005 = vrot.slane %v1001, 4
        %v1007 = vshrl.u32 %v920, 16
        %v1009 = vrot.slane %v1007, 7
        %v1010 = vshll.u32 %v920, 16
        %v1012 = vor.u32 %v1009, %v1010
        %v1013 = vsel %vm946, %v1005, %v1012
        %v1014 = vrot.slane %v1009, 4
        %v1016 = vshrl.u32 %v921, 16
        %v1018 = vrot.slane %v1016, 7
        %v1019 = vshll.u32 %v921, 16
        %v1021 = vor.u32 %v1018, %v1019
        %v1022 = vrot.slane %v1018, 4
        %v1024 = vshrl.u32 %v922, 16
        %v1026 = vrot.slane %v1024, 7
        %v1027 = vshll.u32 %v922, 16
        %v1029 = vor.u32 %v1026, %v1027
        %v1030 = vsel %vm946, %v1022, %v1029
        %v1031 = vrot.slane %v1026, 4
        %v1033 = vshrl.u32 %v923, 16
        %v1035 = vrot.slane %v1033, 7
        %v1036 = vshll.u32 %v923, 16
        %v1038 = vor.u32 %v1035, %v1036
        %v1039 = vrot.slane %v1035, 4
        %v1041 = vshrl.u32 %v924, 16
        %v1043 = vrot.slane %v1041, 7
        %v1044 = vshll.u32 %v924, 16
        %v1046 = vor.u32 %v1043, %v1044
        %v1047 = vsel %vm946, %v1039, %v1046
        %v1048 = vrot.slane %v1043, 4
        %v1050 = vshrl.u32 %v925, 16
        %v1052 = vrot.slane %v1050, 7
        %v1053 = vshll.u32 %v925, 16
        %v1055 = vor.u32 %v1052, %v1053
        %v1056 = vrot.slane %v1052, 4
        %v1058 = vshrl.u32 %v926, 16
        %v1060 = vrot.slane %v1058, 7
        %v1061 = vshll.u32 %v926, 16
        %v1063 = vor.u32 %v1060, %v1061
        %v1064 = vsel %vm946, %v1056, %v1063
        %v1065 = vrot.slane %v1060, 4
        %v1067 = vshrl.u32 %v927, 16
        %v1069 = vrot.slane %v1067, 7
        %v1070 = vshll.u32 %v927, 16
        %v1072 = vor.u32 %v1069, %v1070
        %v1073 = vrot.slane %v1069, 4
        %v1075 = vshrl.u32 %v928, 16
        %v1077 = vrot.slane %v1075, 7
        %v1078 = vshll.u32 %v928, 16
        %v1080 = vor.u32 %v1077, %v1078
        %v1081 = vsel %vm946, %v1073, %v1080
        %v1082 = vrot.slane %v1077, 4
        %v1084 = vshrl.u32 %v929, 16
        %v1086 = vrot.slane %v1084, 7
        %v1087 = vshll.u32 %v929, 16
        %v1089 = vor.u32 %v1086, %v1087
        %v1090 = vrot.slane %v1086, 4
        %v1092 = vshrl.u32 %v930, 16
        %v1094 = vrot.slane %v1092, 7
        %v1095 = vshll.u32 %v930, 16
        %v1097 = vor.u32 %v1094, %v1095
        %v1098 = vsel %vm946, %v1090, %v1097
        %v1099 = vrot.slane %v1094, 4
        %v1101 = vshrl.u32 %v931, 16
        %v1103 = vrot.slane %v1101, 7
        %v1104 = vshll.u32 %v931, 16
        %v1106 = vor.u32 %v1103, %v1104
        %v1107 = vrot.slane %v1103, 4
        %v1109 = vshrl.u32 %v932, 16
        %v1111 = vrot.slane %v1109, 7
        %v1112 = vshll.u32 %v932, 16
        %v1114 = vor.u32 %v1111, %v1112
        %v1115 = vsel %vm946, %v1107, %v1114
        %v1116 = vrot.slane %v1111, 4
        %v1118 = vshrl.u32 %v933, 16
        %v1120 = vrot.slane %v1118, 7
        %v1121 = vshll.u32 %v933, 16
        %v1123 = vor.u32 %v1120, %v1121
        %v1124 = vrot.slane %v1120, 4
        %v1126 = vshrl.u32 %v934, 16
        %v1128 = vrot.slane %v1126, 7
        %v1129 = vshll.u32 %v934, 16
        %v1131 = vor.u32 %v1128, %v1129
        %v1132 = vsel %vm946, %v1124, %v1131
        %v1133 = vrot.slane %v1128, 4
        %v1135 = vshrl.u32 %v935, 16
        %v1137 = vrot.slane %v1135, 7
        %v1138 = vshll.u32 %v935, 16
        %v1140 = vor.u32 %v1137, %v1138
        %v1141 = vrot.slane %v1137, 4
        %v1143 = vshrl.u32 %v936, 16
        %v1145 = vrot.slane %v1143, 7
        %v1146 = vshll.u32 %v936, 16
        %v1148 = vor.u32 %v1145, %v1146
        %v1149 = vsel %vm946, %v1141, %v1148
        %v1150 = vrot.slane %v1145, 4
        %v1152 = vshrl.u32 %v937, 16
        %v1154 = vrot.slane %v1152, 7
        %v1155 = vshll.u32 %v937, 16
        %v1157 = vor.u32 %v1154, %v1155
        %v1158 = vrot.slane %v1154, 4
        %v1160 = vshrl.u32 %v938, 16
        %v1162 = vrot.slane %v1160, 7
        %v1163 = vshll.u32 %v938, 16
        %v1165 = vor.u32 %v1162, %v1163
        %v1166 = vsel %vm946, %v1158, %v1165
        %v1167 = vrot.slane %v1162, 4
        %v1169 = vshrl.u32 %v939, 16
        %v1171 = vrot.slane %v1169, 7
        %v1172 = vshll.u32 %v939, 16
        %v1174 = vor.u32 %v1171, %v1172
        %v1175 = vrot.slane %v1171, 4
        %v1177 = vshrl.u32 %v940, 16
        %v1179 = vrot.slane %v1177, 7
        %v1180 = vshll.u32 %v940, 16
        %v1182 = vor.u32 %v1179, %v1180
        %v1183 = vsel %vm946, %v1175, %v1182
        %v1184 = vrot.slane %v1179, 4
        %v1186 = vshrl.u32 %v941, 16
        %v1188 = vrot.slane %v1186, 7
        %v1189 = vshll.u32 %v941, 16
        %v1191 = vor.u32 %v1188, %v1189
        %v1192 = vrot.slane %v1188, 4
        %v1194 = vshrl.u32 %v942, 16
        %v1196 = vrot.slane %v1194, 7
        %v1197 = vshll.u32 %v942, 16
        %v1199 = vor.u32 %v1196, %v1197
        %v1200 = vsel %vm946, %v1192, %v1199
        %v1201 = vrot.slane %v1196, 4
        %v1203 = vshrl.u32 %v943, 16
        %v1205 = vrot.slane %v1203, 7
        %v1206 = vshll.u32 %v943, 16
        %v1208 = vor.u32 %v1205, %v1206
        %v1209 = vrot.slane %v1205, 4
        %v1211 = vshrl.u32 %v944, 16
        %v1213 = vrot.slane %v1211, 7
        %v1214 = vshll.u32 %v944, 16
        %v1216 = vor.u32 %v1213, %v1214
        %v1217 = vsel %vm946, %v1209, %v1216
        %v1218 = vrot.slane %v1213, 4
        %s1267 = scalar_lea.vmem [#allocation2], 12
        %vm1268 = vcmask 257024
        %vm1269 = vmand %vm1268, %vm809
        %v1270 = vld [vmem:[%s1267] sm:$0xf]
        %v1271 = vsel %vm1269, %v953, %v1270
        %1272 = vst [vmem:[%s1267] sm:$0xf] %v1271
        %1273 = vst.msk [vmem:[%s1267 + $0x4] sm:$0xf] %vm743, %v962
        %v1274 = vld [vmem:[%s1267 + $0x8] sm:$0x1]
        %v1275 = vsel %vm754, %v963, %v1274
        %1276 = vst [vmem:[%s1267 + $0x8] sm:$0x1] %v1275
        %v1277 = vld [vmem:[%s1267 + $0xc] sm:$0xf]
        %v1278 = vsel %vm1269, %v970, %v1277
        %1279 = vst [vmem:[%s1267 + $0xc] sm:$0xf] %v1278
        %1280 = vst.msk [vmem:[%s1267 + $0x10] sm:$0xf] %vm743, %v979
        %v1281 = vld [vmem:[%s1267 + $0x14] sm:$0x1]
        %v1282 = vsel %vm754, %v980, %v1281
        %1283 = vst [vmem:[%s1267 + $0x14] sm:$0x1] %v1282
        %v1284 = vld [vmem:[%s1267 + $0x18] sm:$0xf]
        %v1285 = vsel %vm1269, %v987, %v1284
        %1286 = vst [vmem:[%s1267 + $0x18] sm:$0xf] %v1285
        %1287 = vst.msk [vmem:[%s1267 + $0x1c] sm:$0xf] %vm743, %v996
        %v1288 = vld [vmem:[%s1267 + $0x20] sm:$0x1]
        %v1289 = vsel %vm754, %v997, %v1288
        %1290 = vst [vmem:[%s1267 + $0x20] sm:$0x1] %v1289
        %v1291 = vld [vmem:[%s1267 + $0x24] sm:$0xf]
        %v1292 = vsel %vm1269, %v1004, %v1291
        %1293 = vst [vmem:[%s1267 + $0x24] sm:$0xf] %v1292
        %1294 = vst.msk [vmem:[%s1267 + $0x28] sm:$0xf] %vm743, %v1013
        %v1295 = vld [vmem:[%s1267 + $0x2c] sm:$0x1]
        %v1296 = vsel %vm754, %v1014, %v1295
        %1297 = vst [vmem:[%s1267 + $0x2c] sm:$0x1] %v1296
        %v1298 = vld [vmem:[%s1267 + $0x30] sm:$0xf]
        %v1299 = vsel %vm1269, %v1021, %v1298
        %1300 = vst [vmem:[%s1267 + $0x30] sm:$0xf] %v1299
        %1301 = vst.msk [vmem:[%s1267 + $0x34] sm:$0xf] %vm743, %v1030
        %v1302 = vld [vmem:[%s1267 + $0x38] sm:$0x1]
        %v1303 = vsel %vm754, %v1031, %v1302
        %1304 = vst [vmem:[%s1267 + $0x38] sm:$0x1] %v1303
        %v1305 = vld [vmem:[%s1267 + $0x3c] sm:$0xf]
        %v1306 = vsel %vm1269, %v1038, %v1305
        %1307 = vst [vmem:[%s1267 + $0x3c] sm:$0xf] %v1306
        %1308 = vst.msk [vmem:[%s1267 + $0x40] sm:$0xf] %vm743, %v1047
        %v1309 = vld [vmem:[%s1267 + $0x44] sm:$0x1]
        %v1310 = vsel %vm754, %v1048, %v1309
        %1311 = vst [vmem:[%s1267 + $0x44] sm:$0x1] %v1310
        %v1312 = vld [vmem:[%s1267 + $0x48] sm:$0xf]
        %v1313 = vsel %vm1269, %v1055, %v1312
        %1314 = vst [vmem:[%s1267 + $0x48] sm:$0xf] %v1313
        %1315 = vst.msk [vmem:[%s1267 + $0x4c] sm:$0xf] %vm743, %v1064
        %v1316 = vld [vmem:[%s1267 + $0x50] sm:$0x1]
        %v1317 = vsel %vm754, %v1065, %v1316
        %1318 = vst [vmem:[%s1267 + $0x50] sm:$0x1] %v1317
        %v1319 = vld [vmem:[%s1267 + $0x54] sm:$0xf]
        %v1320 = vsel %vm1269, %v1072, %v1319
        %1321 = vst [vmem:[%s1267 + $0x54] sm:$0xf] %v1320
        %1322 = vst.msk [vmem:[%s1267 + $0x58] sm:$0xf] %vm743, %v1081
        %v1323 = vld [vmem:[%s1267 + $0x5c] sm:$0x1]
        %v1324 = vsel %vm754, %v1082, %v1323
        %1325 = vst [vmem:[%s1267 + $0x5c] sm:$0x1] %v1324
        %v1326 = vld [vmem:[%s1267 + $0x60] sm:$0xf]
        %v1327 = vsel %vm1269, %v1089, %v1326
        %1328 = vst [vmem:[%s1267 + $0x60] sm:$0xf] %v1327
        %1329 = vst.msk [vmem:[%s1267 + $0x64] sm:$0xf] %vm743, %v1098
        %v1330 = vld [vmem:[%s1267 + $0x68] sm:$0x1]
        %v1331 = vsel %vm754, %v1099, %v1330
        %1332 = vst [vmem:[%s1267 + $0x68] sm:$0x1] %v1331
        %v1333 = vld [vmem:[%s1267 + $0x6c] sm:$0xf]
        %v1334 = vsel %vm1269, %v1106, %v1333
        %1335 = vst [vmem:[%s1267 + $0x6c] sm:$0xf] %v1334
        %1336 = vst.msk [vmem:[%s1267 + $0x70] sm:$0xf] %vm743, %v1115
        %v1337 = vld [vmem:[%s1267 + $0x74] sm:$0x1]
        %v1338 = vsel %vm754, %v1116, %v1337
        %1339 = vst [vmem:[%s1267 + $0x74] sm:$0x1] %v1338
        %v1340 = vld [vmem:[%s1267 + $0x78] sm:$0xf]
        %v1341 = vsel %vm1269, %v1123, %v1340
        %1342 = vst [vmem:[%s1267 + $0x78] sm:$0xf] %v1341
        %1343 = vst.msk [vmem:[%s1267 + $0x7c] sm:$0xf] %vm743, %v1132
        %v1344 = vld [vmem:[%s1267 + $0x80] sm:$0x1]
        %v1345 = vsel %vm754, %v1133, %v1344
        %1346 = vst [vmem:[%s1267 + $0x80] sm:$0x1] %v1345
        %v1347 = vld [vmem:[%s1267 + $0x84] sm:$0xf]
        %v1348 = vsel %vm1269, %v1140, %v1347
        %1349 = vst [vmem:[%s1267 + $0x84] sm:$0xf] %v1348
        %1350 = vst.msk [vmem:[%s1267 + $0x88] sm:$0xf] %vm743, %v1149
        %v1351 = vld [vmem:[%s1267 + $0x8c] sm:$0x1]
        %v1352 = vsel %vm754, %v1150, %v1351
        %1353 = vst [vmem:[%s1267 + $0x8c] sm:$0x1] %v1352
        %v1354 = vld [vmem:[%s1267 + $0x90] sm:$0xf]
        %v1355 = vsel %vm1269, %v1157, %v1354
        %1356 = vst [vmem:[%s1267 + $0x90] sm:$0xf] %v1355
        %1357 = vst.msk [vmem:[%s1267 + $0x94] sm:$0xf] %vm743, %v1166
        %v1358 = vld [vmem:[%s1267 + $0x98] sm:$0x1]
        %v1359 = vsel %vm754, %v1167, %v1358
        %1360 = vst [vmem:[%s1267 + $0x98] sm:$0x1] %v1359
        %v1361 = vld [vmem:[%s1267 + $0x9c] sm:$0xf]
        %v1362 = vsel %vm1269, %v1174, %v1361
        %1363 = vst [vmem:[%s1267 + $0x9c] sm:$0xf] %v1362
        %1364 = vst.msk [vmem:[%s1267 + $0xa0] sm:$0xf] %vm743, %v1183
        %v1365 = vld [vmem:[%s1267 + $0xa4] sm:$0x1]
        %v1366 = vsel %vm754, %v1184, %v1365
        %1367 = vst [vmem:[%s1267 + $0xa4] sm:$0x1] %v1366
        %v1368 = vld [vmem:[%s1267 + $0xa8] sm:$0xf]
        %v1369 = vsel %vm1269, %v1191, %v1368
        %1370 = vst [vmem:[%s1267 + $0xa8] sm:$0xf] %v1369
        %1371 = vst.msk [vmem:[%s1267 + $0xac] sm:$0xf] %vm743, %v1200
        %v1372 = vld [vmem:[%s1267 + $0xb0] sm:$0x1]
        %v1373 = vsel %vm754, %v1201, %v1372
        %1374 = vst [vmem:[%s1267 + $0xb0] sm:$0x1] %v1373
        %v1375 = vld [vmem:[%s1267 + $0xb4] sm:$0xf]
        %v1376 = vsel %vm1269, %v1208, %v1375
        %1377 = vst [vmem:[%s1267 + $0xb4] sm:$0xf] %v1376
        %1378 = vst.msk [vmem:[%s1267 + $0xb8] sm:$0xf] %vm743, %v1217
        %v1379 = vld [vmem:[%s1267 + $0xbc] sm:$0x1]
        %v1380 = vsel %vm754, %v1218, %v1379
        %1381 = vst [vmem:[%s1267 + $0xbc] sm:$0x1] %v1380
        %v1382 = vld [vmem:[#allocation2] sm:$0xf]
        %v1383 = vld [vmem:[#allocation2 + $0x4] sm:$0xf]
        %v1384 = vld [vmem:[#allocation2 + $0xc] sm:$0xf]
        %v1385 = vld [vmem:[#allocation2 + $0x10] sm:$0xf]
        %v1386 = vld [vmem:[#allocation2 + $0x18] sm:$0xf]
        %v1387 = vld [vmem:[#allocation2 + $0x1c] sm:$0xf]
        %v1388 = vld [vmem:[#allocation2 + $0x24] sm:$0xf]
        %v1389 = vld [vmem:[#allocation2 + $0x28] sm:$0xf]
        %v1390 = vld [vmem:[#allocation2 + $0x30] sm:$0xf]
        %v1391 = vld [vmem:[#allocation2 + $0x34] sm:$0xf]
        %v1392 = vld [vmem:[#allocation2 + $0x3c] sm:$0xf]
        %v1393 = vld [vmem:[#allocation2 + $0x40] sm:$0xf]
        %v1394 = vld [vmem:[#allocation2 + $0x48] sm:$0xf]
        %v1395 = vld [vmem:[#allocation2 + $0x4c] sm:$0xf]
        %v1396 = vld [vmem:[#allocation2 + $0x54] sm:$0xf]
        %v1397 = vld [vmem:[#allocation2 + $0x58] sm:$0xf]
        %v1398 = vld [vmem:[#allocation2 + $0x60] sm:$0xf]
        %v1399 = vld [vmem:[#allocation2 + $0x64] sm:$0xf]
        %v1400 = vld [vmem:[#allocation2 + $0x6c] sm:$0xf]
        %v1401 = vld [vmem:[#allocation2 + $0x70] sm:$0xf]
        %v1402 = vld [vmem:[#allocation2 + $0x78] sm:$0xf]
        %v1403 = vld [vmem:[#allocation2 + $0x7c] sm:$0xf]
        %v1404 = vld [vmem:[#allocation2 + $0x84] sm:$0xf]
        %v1405 = vld [vmem:[#allocation2 + $0x88] sm:$0xf]
        %v1406 = vld [vmem:[#allocation2 + $0x90] sm:$0xf]
        %v1407 = vld [vmem:[#allocation2 + $0x94] sm:$0xf]
        %v1408 = vld [vmem:[#allocation2 + $0x9c] sm:$0xf]
        %v1409 = vld [vmem:[#allocation2 + $0xa0] sm:$0xf]
        %v1410 = vld [vmem:[#allocation2 + $0xa8] sm:$0xf]
        %v1411 = vld [vmem:[#allocation2 + $0xac] sm:$0xf]
        %v1412 = vld [vmem:[#allocation2 + $0xb4] sm:$0xf]
        %v1413 = vld [vmem:[#allocation2 + $0xb8] sm:$0xf]
        %v1414 = vld [vmem:[#allocation2 + $0x8] sm:$0x1]
        %v1415 = vld [vmem:[#allocation2 + $0x14] sm:$0x1]
        %v1416 = vld [vmem:[#allocation2 + $0x20] sm:$0x1]
        %v1417 = vld [vmem:[#allocation2 + $0x2c] sm:$0x1]
        %v1418 = vld [vmem:[#allocation2 + $0x38] sm:$0x1]
        %v1419 = vld [vmem:[#allocation2 + $0x44] sm:$0x1]
        %v1420 = vld [vmem:[#allocation2 + $0x50] sm:$0x1]
        %v1421 = vld [vmem:[#allocation2 + $0x5c] sm:$0x1]
        %v1422 = vld [vmem:[#allocation2 + $0x68] sm:$0x1]
        %v1423 = vld [vmem:[#allocation2 + $0x74] sm:$0x1]
        %v1424 = vld [vmem:[#allocation2 + $0x80] sm:$0x1]
        %v1425 = vld [vmem:[#allocation2 + $0x8c] sm:$0x1]
        %v1426 = vld [vmem:[#allocation2 + $0x98] sm:$0x1]
        %v1427 = vld [vmem:[#allocation2 + $0xa4] sm:$0x1]
        %v1428 = vld [vmem:[#allocation2 + $0xb0] sm:$0x1]
        %v1429 = vld [vmem:[#allocation2 + $0xbc] sm:$0x1]
        %vm1430 = vsmask.f32 3328
        %vm1431 = vsmask.f32 7440
        %vm1432 = vmor %vm1430, %vm1431
        %v1434 = vshrl.u32 %v1382, 16
        %v1436 = vrot.slane %v1434, 4
        %v1437 = vshll.u32 %v1382, 16
        %v1439 = vrot.slane %v1437, 5
        %v1440 = vor.u32 %v1436, %v1439
        %v1441 = vrot.slane %v1440, 4
        %v1443 = vshll.u32 %v1383, 16
        %v1445 = vrot.slane %v1443, 5
        %v1446 = vsel %vm1432, %v1441, %v1445
        %v1447 = vshrl.u32 %v1383, 16
        %v1449 = vrot.slane %v1447, 4
        %v1450 = vor.u32 %v1449, %v1445
        %v1451 = vrot.slane %v1450, 4
        %v1453 = vshll.u32 %v1414, 16
        %v1455 = vrot.slane %v1453, 5
        %v1456 = vsel %vm1432, %v1451, %v1455
        %v1458 = vshrl.u32 %v1384, 16
        %v1460 = vrot.slane %v1458, 4
        %v1461 = vshll.u32 %v1384, 16
        %v1463 = vrot.slane %v1461, 5
        %v1464 = vor.u32 %v1460, %v1463
        %v1465 = vrot.slane %v1464, 4
        %v1467 = vshll.u32 %v1385, 16
        %v1469 = vrot.slane %v1467, 5
        %v1470 = vsel %vm1432, %v1465, %v1469
        %v1471 = vshrl.u32 %v1385, 16
        %v1473 = vrot.slane %v1471, 4
        %v1474 = vor.u32 %v1473, %v1469
        %v1475 = vrot.slane %v1474, 4
        %v1477 = vshll.u32 %v1415, 16
        %v1479 = vrot.slane %v1477, 5
        %v1480 = vsel %vm1432, %v1475, %v1479
        %v1482 = vshrl.u32 %v1386, 16
        %v1484 = vrot.slane %v1482, 4
        %v1485 = vshll.u32 %v1386, 16
        %v1487 = vrot.slane %v1485, 5
        %v1488 = vor.u32 %v1484, %v1487
        %v1489 = vrot.slane %v1488, 4
        %v1491 = vshll.u32 %v1387, 16
        %v1493 = vrot.slane %v1491, 5
        %v1494 = vsel %vm1432, %v1489, %v1493
        %v1495 = vshrl.u32 %v1387, 16
        %v1497 = vrot.slane %v1495, 4
        %v1498 = vor.u32 %v1497, %v1493
        %v1499 = vrot.slane %v1498, 4
        %v1501 = vshll.u32 %v1416, 16
        %v1503 = vrot.slane %v1501, 5
        %v1504 = vsel %vm1432, %v1499, %v1503
        %v1506 = vshrl.u32 %v1388, 16
        %v1508 = vrot.slane %v1506, 4
        %v1509 = vshll.u32 %v1388, 16
        %v1511 = vrot.slane %v1509, 5
        %v1512 = vor.u32 %v1508, %v1511
        %v1513 = vrot.slane %v1512, 4
        %v1515 = vshll.u32 %v1389, 16
        %v1517 = vrot.slane %v1515, 5
        %v1518 = vsel %vm1432, %v1513, %v1517
        %v1519 = vshrl.u32 %v1389, 16
        %v1521 = vrot.slane %v1519, 4
        %v1522 = vor.u32 %v1521, %v1517
        %v1523 = vrot.slane %v1522, 4
        %v1525 = vshll.u32 %v1417, 16
        %v1527 = vrot.slane %v1525, 5
        %v1528 = vsel %vm1432, %v1523, %v1527
        %v1530 = vshrl.u32 %v1390, 16
        %v1532 = vrot.slane %v1530, 4
        %v1533 = vshll.u32 %v1390, 16
        %v1535 = vrot.slane %v1533, 5
        %v1536 = vor.u32 %v1532, %v1535
        %v1537 = vrot.slane %v1536, 4
        %v1539 = vshll.u32 %v1391, 16
        %v1541 = vrot.slane %v1539, 5
        %v1542 = vsel %vm1432, %v1537, %v1541
        %v1543 = vshrl.u32 %v1391, 16
        %v1545 = vrot.slane %v1543, 4
        %v1546 = vor.u32 %v1545, %v1541
        %v1547 = vrot.slane %v1546, 4
        %v1549 = vshll.u32 %v1418, 16
        %v1551 = vrot.slane %v1549, 5
        %v1552 = vsel %vm1432, %v1547, %v1551
        %v1554 = vshrl.u32 %v1392, 16
        %v1556 = vrot.slane %v1554, 4
        %v1557 = vshll.u32 %v1392, 16
        %v1559 = vrot.slane %v1557, 5
        %v1560 = vor.u32 %v1556, %v1559
        %v1561 = vrot.slane %v1560, 4
        %v1563 = vshll.u32 %v1393, 16
        %v1565 = vrot.slane %v1563, 5
        %v1566 = vsel %vm1432, %v1561, %v1565
        %v1567 = vshrl.u32 %v1393, 16
        %v1569 = vrot.slane %v1567, 4
        %v1570 = vor.u32 %v1569, %v1565
        %v1571 = vrot.slane %v1570, 4
        %v1573 = vshll.u32 %v1419, 16
        %v1575 = vrot.slane %v1573, 5
        %v1576 = vsel %vm1432, %v1571, %v1575
        %v1578 = vshrl.u32 %v1394, 16
        %v1580 = vrot.slane %v1578, 4
        %v1581 = vshll.u32 %v1394, 16
        %v1583 = vrot.slane %v1581, 5
        %v1584 = vor.u32 %v1580, %v1583
        %v1585 = vrot.slane %v1584, 4
        %v1587 = vshll.u32 %v1395, 16
        %v1589 = vrot.slane %v1587, 5
        %v1590 = vsel %vm1432, %v1585, %v1589
        %v1591 = vshrl.u32 %v1395, 16
        %v1593 = vrot.slane %v1591, 4
        %v1594 = vor.u32 %v1593, %v1589
        %v1595 = vrot.slane %v1594, 4
        %v1597 = vshll.u32 %v1420, 16
        %v1599 = vrot.slane %v1597, 5
        %v1600 = vsel %vm1432, %v1595, %v1599
        %v1602 = vshrl.u32 %v1396, 16
        %v1604 = vrot.slane %v1602, 4
        %v1605 = vshll.u32 %v1396, 16
        %v1607 = vrot.slane %v1605, 5
        %v1608 = vor.u32 %v1604, %v1607
        %v1609 = vrot.slane %v1608, 4
        %v1611 = vshll.u32 %v1397, 16
        %v1613 = vrot.slane %v1611, 5
        %v1614 = vsel %vm1432, %v1609, %v1613
        %v1615 = vshrl.u32 %v1397, 16
        %v1617 = vrot.slane %v1615, 4
        %v1618 = vor.u32 %v1617, %v1613
        %v1619 = vrot.slane %v1618, 4
        %v1621 = vshll.u32 %v1421, 16
        %v1623 = vrot.slane %v1621, 5
        %v1624 = vsel %vm1432, %v1619, %v1623
        %v1626 = vshrl.u32 %v1398, 16
        %v1628 = vrot.slane %v1626, 4
        %v1629 = vshll.u32 %v1398, 16
        %v1631 = vrot.slane %v1629, 5
        %v1632 = vor.u32 %v1628, %v1631
        %v1633 = vrot.slane %v1632, 4
        %v1635 = vshll.u32 %v1399, 16
        %v1637 = vrot.slane %v1635, 5
        %v1638 = vsel %vm1432, %v1633, %v1637
        %v1639 = vshrl.u32 %v1399, 16
        %v1641 = vrot.slane %v1639, 4
        %v1642 = vor.u32 %v1641, %v1637
        %v1643 = vrot.slane %v1642, 4
        %v1645 = vshll.u32 %v1422, 16
        %v1647 = vrot.slane %v1645, 5
        %v1648 = vsel %vm1432, %v1643, %v1647
        %v1650 = vshrl.u32 %v1400, 16
        %v1652 = vrot.slane %v1650, 4
        %v1653 = vshll.u32 %v1400, 16
        %v1655 = vrot.slane %v1653, 5
        %v1656 = vor.u32 %v1652, %v1655
        %v1657 = vrot.slane %v1656, 4
        %v1659 = vshll.u32 %v1401, 16
        %v1661 = vrot.slane %v1659, 5
        %v1662 = vsel %vm1432, %v1657, %v1661
        %v1663 = vshrl.u32 %v1401, 16
        %v1665 = vrot.slane %v1663, 4
        %v1666 = vor.u32 %v1665, %v1661
        %v1667 = vrot.slane %v1666, 4
        %v1669 = vshll.u32 %v1423, 16
        %v1671 = vrot.slane %v1669, 5
        %v1672 = vsel %vm1432, %v1667, %v1671
        %v1674 = vshrl.u32 %v1402, 16
        %v1676 = vrot.slane %v1674, 4
        %v1677 = vshll.u32 %v1402, 16
        %v1679 = vrot.slane %v1677, 5
        %v1680 = vor.u32 %v1676, %v1679
        %v1681 = vrot.slane %v1680, 4
        %v1683 = vshll.u32 %v1403, 16
        %v1685 = vrot.slane %v1683, 5
        %v1686 = vsel %vm1432, %v1681, %v1685
        %v1687 = vshrl.u32 %v1403, 16
        %v1689 = vrot.slane %v1687, 4
        %v1690 = vor.u32 %v1689, %v1685
        %v1691 = vrot.slane %v1690, 4
        %v1693 = vshll.u32 %v1424, 16
        %v1695 = vrot.slane %v1693, 5
        %v1696 = vsel %vm1432, %v1691, %v1695
        %v1698 = vshrl.u32 %v1404, 16
        %v1700 = vrot.slane %v1698, 4
        %v1701 = vshll.u32 %v1404, 16
        %v1703 = vrot.slane %v1701, 5
        %v1704 = vor.u32 %v1700, %v1703
        %v1705 = vrot.slane %v1704, 4
        %v1707 = vshll.u32 %v1405, 16
        %v1709 = vrot.slane %v1707, 5
        %v1710 = vsel %vm1432, %v1705, %v1709
        %v1711 = vshrl.u32 %v1405, 16
        %v1713 = vrot.slane %v1711, 4
        %v1714 = vor.u32 %v1713, %v1709
        %v1715 = vrot.slane %v1714, 4
        %v1717 = vshll.u32 %v1425, 16
        %v1719 = vrot.slane %v1717, 5
        %v1720 = vsel %vm1432, %v1715, %v1719
        %v1722 = vshrl.u32 %v1406, 16
        %v1724 = vrot.slane %v1722, 4
        %v1725 = vshll.u32 %v1406, 16
        %v1727 = vrot.slane %v1725, 5
        %v1728 = vor.u32 %v1724, %v1727
        %v1729 = vrot.slane %v1728, 4
        %v1731 = vshll.u32 %v1407, 16
        %v1733 = vrot.slane %v1731, 5
        %v1734 = vsel %vm1432, %v1729, %v1733
        %v1735 = vshrl.u32 %v1407, 16
        %v1737 = vrot.slane %v1735, 4
        %v1738 = vor.u32 %v1737, %v1733
        %v1739 = vrot.slane %v1738, 4
        %v1741 = vshll.u32 %v1426, 16
        %v1743 = vrot.slane %v1741, 5
        %v1744 = vsel %vm1432, %v1739, %v1743
        %v1746 = vshrl.u32 %v1408, 16
        %v1748 = vrot.slane %v1746, 4
        %v1749 = vshll.u32 %v1408, 16
        %v1751 = vrot.slane %v1749, 5
        %v1752 = vor.u32 %v1748, %v1751
        %v1753 = vrot.slane %v1752, 4
        %v1755 = vshll.u32 %v1409, 16
        %v1757 = vrot.slane %v1755, 5
        %v1758 = vsel %vm1432, %v1753, %v1757
        %v1759 = vshrl.u32 %v1409, 16
        %v1761 = vrot.slane %v1759, 4
        %v1762 = vor.u32 %v1761, %v1757
        %v1763 = vrot.slane %v1762, 4
        %v1765 = vshll.u32 %v1427, 16
        %v1767 = vrot.slane %v1765, 5
        %v1768 = vsel %vm1432, %v1763, %v1767
        %v1770 = vshrl.u32 %v1410, 16
        %v1772 = vrot.slane %v1770, 4
        %v1773 = vshll.u32 %v1410, 16
        %v1775 = vrot.slane %v1773, 5
        %v1776 = vor.u32 %v1772, %v1775
        %v1777 = vrot.slane %v1776, 4
        %v1779 = vshll.u32 %v1411, 16
        %v1781 = vrot.slane %v1779, 5
        %v1782 = vsel %vm1432, %v1777, %v1781
        %v1783 = vshrl.u32 %v1411, 16
        %v1785 = vrot.slane %v1783, 4
        %v1786 = vor.u32 %v1785, %v1781
        %v1787 = vrot.slane %v1786, 4
        %v1789 = vshll.u32 %v1428, 16
        %v1791 = vrot.slane %v1789, 5
        %v1792 = vsel %vm1432, %v1787, %v1791
        %v1794 = vshrl.u32 %v1412, 16
        %v1796 = vrot.slane %v1794, 4
        %v1797 = vshll.u32 %v1412, 16
        %v1799 = vrot.slane %v1797, 5
        %v1800 = vor.u32 %v1796, %v1799
        %v1801 = vrot.slane %v1800, 4
        %v1803 = vshll.u32 %v1413, 16
        %v1805 = vrot.slane %v1803, 5
        %v1806 = vsel %vm1432, %v1801, %v1805
        %v1807 = vshrl.u32 %v1413, 16
        %v1809 = vrot.slane %v1807, 4
        %v1810 = vor.u32 %v1809, %v1805
        %v1811 = vrot.slane %v1810, 4
        %v1813 = vshll.u32 %v1429, 16
        %v1815 = vrot.slane %v1813, 5
        %v1816 = vsel %vm1432, %v1811, %v1815
        %v1817 = vld [vmem:[#allocation2] sm:$0xe]
        %v1818 = vld [vmem:[#allocation2 + $0xc] sm:$0xe]
        %v1819 = vld [vmem:[#allocation2 + $0x18] sm:$0xe]
        %v1820 = vld [vmem:[#allocation2 + $0x24] sm:$0xe]
        %v1821 = vld [vmem:[#allocation2 + $0x30] sm:$0xe]
        %v1822 = vld [vmem:[#allocation2 + $0x3c] sm:$0xe]
        %v1823 = vld [vmem:[#allocation2 + $0x48] sm:$0xe]
        %v1824 = vld [vmem:[#allocation2 + $0x54] sm:$0xe]
        %v1825 = vld [vmem:[#allocation2 + $0x60] sm:$0xe]
        %v1826 = vld [vmem:[#allocation2 + $0x6c] sm:$0xe]
        %v1827 = vld [vmem:[#allocation2 + $0x78] sm:$0xe]
        %v1828 = vld [vmem:[#allocation2 + $0x84] sm:$0xe]
        %v1829 = vld [vmem:[#allocation2 + $0x90] sm:$0xe]
        %v1830 = vld [vmem:[#allocation2 + $0x9c] sm:$0xe]
        %v1831 = vld [vmem:[#allocation2 + $0xa8] sm:$0xe]
        %v1832 = vld [vmem:[#allocation2 + $0xb4] sm:$0xe]
        %vm1881 = vcmask 1042432
        %vm1882 = vcmask 1046532
        %vm1883 = vmor %vm1881, %vm1882
        %v1884 = vrot.slane %v1817, 5
        %v1885 = vrot.slane %v1884, 4
        %v1886 = vrot.slane %v1383, 5
        %v1887 = vsel %vm1883, %v1885, %v1886
        %v1888 = vrot.slane %v1886, 4
        %v1889 = vrot.slane %v1414, 5
        %v1890 = vsel %vm1883, %v1888, %v1889
        %v1891 = vrot.slane %v1818, 5
        %v1892 = vrot.slane %v1891, 4
        %v1893 = vrot.slane %v1385, 5
        %v1894 = vsel %vm1883, %v1892, %v1893
        %v1895 = vrot.slane %v1893, 4
        %v1896 = vrot.slane %v1415, 5
        %v1897 = vsel %vm1883, %v1895, %v1896
        %v1898 = vrot.slane %v1819, 5
        %v1899 = vrot.slane %v1898, 4
        %v1900 = vrot.slane %v1387, 5
        %v1901 = vsel %vm1883, %v1899, %v1900
        %v1902 = vrot.slane %v1900, 4
        %v1903 = vrot.slane %v1416, 5
        %v1904 = vsel %vm1883, %v1902, %v1903
        %v1905 = vrot.slane %v1820, 5
        %v1906 = vrot.slane %v1905, 4
        %v1907 = vrot.slane %v1389, 5
        %v1908 = vsel %vm1883, %v1906, %v1907
        %v1909 = vrot.slane %v1907, 4
        %v1910 = vrot.slane %v1417, 5
        %v1911 = vsel %vm1883, %v1909, %v1910
        %v1912 = vrot.slane %v1821, 5
        %v1913 = vrot.slane %v1912, 4
        %v1914 = vrot.slane %v1391, 5
        %v1915 = vsel %vm1883, %v1913, %v1914
        %v1916 = vrot.slane %v1914, 4
        %v1917 = vrot.slane %v1418, 5
        %v1918 = vsel %vm1883, %v1916, %v1917
        %v1919 = vrot.slane %v1822, 5
        %v1920 = vrot.slane %v1919, 4
        %v1921 = vrot.slane %v1393, 5
        %v1922 = vsel %vm1883, %v1920, %v1921
        %v1923 = vrot.slane %v1921, 4
        %v1924 = vrot.slane %v1419, 5
        %v1925 = vsel %vm1883, %v1923, %v1924
        %v1926 = vrot.slane %v1823, 5
        %v1927 = vrot.slane %v1926, 4
        %v1928 = vrot.slane %v1395, 5
        %v1929 = vsel %vm1883, %v1927, %v1928
        %v1930 = vrot.slane %v1928, 4
        %v1931 = vrot.slane %v1420, 5
        %v1932 = vsel %vm1883, %v1930, %v1931
        %v1933 = vrot.slane %v1824, 5
        %v1934 = vrot.slane %v1933, 4
        %v1935 = vrot.slane %v1397, 5
        %v1936 = vsel %vm1883, %v1934, %v1935
        %v1937 = vrot.slane %v1935, 4
        %v1938 = vrot.slane %v1421, 5
        %v1939 = vsel %vm1883, %v1937, %v1938
        %v1940 = vrot.slane %v1825, 5
        %v1941 = vrot.slane %v1940, 4
        %v1942 = vrot.slane %v1399, 5
        %v1943 = vsel %vm1883, %v1941, %v1942
        %v1944 = vrot.slane %v1942, 4
        %v1945 = vrot.slane %v1422, 5
        %v1946 = vsel %vm1883, %v1944, %v1945
        %v1947 = vrot.slane %v1826, 5
        %v1948 = vrot.slane %v1947, 4
        %v1949 = vrot.slane %v1401, 5
        %v1950 = vsel %vm1883, %v1948, %v1949
        %v1951 = vrot.slane %v1949, 4
        %v1952 = vrot.slane %v1423, 5
        %v1953 = vsel %vm1883, %v1951, %v1952
        %v1954 = vrot.slane %v1827, 5
        %v1955 = vrot.slane %v1954, 4
        %v1956 = vrot.slane %v1403, 5
        %v1957 = vsel %vm1883, %v1955, %v1956
        %v1958 = vrot.slane %v1956, 4
        %v1959 = vrot.slane %v1424, 5
        %v1960 = vsel %vm1883, %v1958, %v1959
        %v1961 = vrot.slane %v1828, 5
        %v1962 = vrot.slane %v1961, 4
        %v1963 = vrot.slane %v1405, 5
        %v1964 = vsel %vm1883, %v1962, %v1963
        %v1965 = vrot.slane %v1963, 4
        %v1966 = vrot.slane %v1425, 5
        %v1967 = vsel %vm1883, %v1965, %v1966
        %v1968 = vrot.slane %v1829, 5
        %v1969 = vrot.slane %v1968, 4
        %v1970 = vrot.slane %v1407, 5
        %v1971 = vsel %vm1883, %v1969, %v1970
        %v1972 = vrot.slane %v1970, 4
        %v1973 = vrot.slane %v1426, 5
        %v1974 = vsel %vm1883, %v1972, %v1973
        %v1975 = vrot.slane %v1830, 5
        %v1976 = vrot.slane %v1975, 4
        %v1977 = vrot.slane %v1409, 5
        %v1978 = vsel %vm1883, %v1976, %v1977
        %v1979 = vrot.slane %v1977, 4
        %v1980 = vrot.slane %v1427, 5
        %v1981 = vsel %vm1883, %v1979, %v1980
        %v1982 = vrot.slane %v1831, 5
        %v1983 = vrot.slane %v1982, 4
        %v1984 = vrot.slane %v1411, 5
        %v1985 = vsel %vm1883, %v1983, %v1984
        %v1986 = vrot.slane %v1984, 4
        %v1987 = vrot.slane %v1428, 5
        %v1988 = vsel %vm1883, %v1986, %v1987
        %v1989 = vrot.slane %v1832, 5
        %v1990 = vrot.slane %v1989, 4
        %v1991 = vrot.slane %v1413, 5
        %v1992 = vsel %vm1883, %v1990, %v1991
        %v1993 = vrot.slane %v1991, 4
        %v1994 = vrot.slane %v1429, 5
        %v1995 = vsel %vm1883, %v1993, %v1994
        %v1996 = vld [vmem:[%s1267] sm:$0xf]
        %v1997 = vld [vmem:[%s1267 + $0x4] sm:$0xf]
        %v1998 = vld [vmem:[%s1267 + $0xc] sm:$0xf]
        %v1999 = vld [vmem:[%s1267 + $0x10] sm:$0xf]
        %v2000 = vld [vmem:[%s1267 + $0x18] sm:$0xf]
        %v2001 = vld [vmem:[%s1267 + $0x1c] sm:$0xf]
        %v2002 = vld [vmem:[%s1267 + $0x24] sm:$0xf]
        %v2003 = vld [vmem:[%s1267 + $0x28] sm:$0xf]
        %v2004 = vld [vmem:[%s1267 + $0x30] sm:$0xf]
        %v2005 = vld [vmem:[%s1267 + $0x34] sm:$0xf]
        %v2006 = vld [vmem:[%s1267 + $0x3c] sm:$0xf]
        %v2007 = vld [vmem:[%s1267 + $0x40] sm:$0xf]
        %v2008 = vld [vmem:[%s1267 + $0x48] sm:$0xf]
        %v2009 = vld [vmem:[%s1267 + $0x4c] sm:$0xf]
        %v2010 = vld [vmem:[%s1267 + $0x54] sm:$0xf]
        %v2011 = vld [vmem:[%s1267 + $0x58] sm:$0xf]
        %v2012 = vld [vmem:[%s1267 + $0x60] sm:$0xf]
        %v2013 = vld [vmem:[%s1267 + $0x64] sm:$0xf]
        %v2014 = vld [vmem:[%s1267 + $0x6c] sm:$0xf]
        %v2015 = vld [vmem:[%s1267 + $0x70] sm:$0xf]
        %v2016 = vld [vmem:[%s1267 + $0x78] sm:$0xf]
        %v2017 = vld [vmem:[%s1267 + $0x7c] sm:$0xf]
        %v2018 = vld [vmem:[%s1267 + $0x84] sm:$0xf]
        %v2019 = vld [vmem:[%s1267 + $0x88] sm:$0xf]
        %v2020 = vld [vmem:[%s1267 + $0x90] sm:$0xf]
        %v2021 = vld [vmem:[%s1267 + $0x94] sm:$0xf]
        %v2022 = vld [vmem:[%s1267 + $0x9c] sm:$0xf]
        %v2023 = vld [vmem:[%s1267 + $0xa0] sm:$0xf]
        %v2024 = vld [vmem:[%s1267 + $0xa8] sm:$0xf]
        %v2025 = vld [vmem:[%s1267 + $0xac] sm:$0xf]
        %v2026 = vld [vmem:[%s1267 + $0xb4] sm:$0xf]
        %v2027 = vld [vmem:[%s1267 + $0xb8] sm:$0xf]
        %v2028 = vld [vmem:[%s1267 + $0x8] sm:$0x1]
        %v2029 = vld [vmem:[%s1267 + $0x14] sm:$0x1]
        %v2030 = vld [vmem:[%s1267 + $0x20] sm:$0x1]
        %v2031 = vld [vmem:[%s1267 + $0x2c] sm:$0x1]
        %v2032 = vld [vmem:[%s1267 + $0x38] sm:$0x1]
        %v2033 = vld [vmem:[%s1267 + $0x44] sm:$0x1]
        %v2034 = vld [vmem:[%s1267 + $0x50] sm:$0x1]
        %v2035 = vld [vmem:[%s1267 + $0x5c] sm:$0x1]
        %v2036 = vld [vmem:[%s1267 + $0x68] sm:$0x1]
        %v2037 = vld [vmem:[%s1267 + $0x74] sm:$0x1]
        %v2038 = vld [vmem:[%s1267 + $0x80] sm:$0x1]
        %v2039 = vld [vmem:[%s1267 + $0x8c] sm:$0x1]
        %v2040 = vld [vmem:[%s1267 + $0x98] sm:$0x1]
        %v2041 = vld [vmem:[%s1267 + $0xa4] sm:$0x1]
        %v2042 = vld [vmem:[%s1267 + $0xb0] sm:$0x1]
        %v2043 = vld [vmem:[%s1267 + $0xbc] sm:$0x1]
        %v2045 = vshrl.u32 %v1996, 16
        %v2047 = vrot.slane %v2045, 4
        %v2048 = vshll.u32 %v1996, 16
        %v2050 = vrot.slane %v2048, 5
        %v2051 = vor.u32 %v2047, %v2050
        %v2052 = vrot.slane %v2051, 4
        %v2054 = vshll.u32 %v1997, 16
        %v2056 = vrot.slane %v2054, 5
        %v2057 = vsel %vm1432, %v2052, %v2056
        %v2058 = vshrl.u32 %v1997, 16
        %v2060 = vrot.slane %v2058, 4
        %v2061 = vor.u32 %v2060, %v2056
        %v2062 = vrot.slane %v2061, 4
        %v2064 = vshll.u32 %v2028, 16
        %v2066 = vrot.slane %v2064, 5
        %v2067 = vsel %vm1432, %v2062, %v2066
        %v2069 = vshrl.u32 %v1998, 16
        %v2071 = vrot.slane %v2069, 4
        %v2072 = vshll.u32 %v1998, 16
        %v2074 = vrot.slane %v2072, 5
        %v2075 = vor.u32 %v2071, %v2074
        %v2076 = vrot.slane %v2075, 4
        %v2078 = vshll.u32 %v1999, 16
        %v2080 = vrot.slane %v2078, 5
        %v2081 = vsel %vm1432, %v2076, %v2080
        %v2082 = vshrl.u32 %v1999, 16
        %v2084 = vrot.slane %v2082, 4
        %v2085 = vor.u32 %v2084, %v2080
        %v2086 = vrot.slane %v2085, 4
        %v2088 = vshll.u32 %v2029, 16
        %v2090 = vrot.slane %v2088, 5
        %v2091 = vsel %vm1432, %v2086, %v2090
        %v2093 = vshrl.u32 %v2000, 16
        %v2095 = vrot.slane %v2093, 4
        %v2096 = vshll.u32 %v2000, 16
        %v2098 = vrot.slane %v2096, 5
        %v2099 = vor.u32 %v2095, %v2098
        %v2100 = vrot.slane %v2099, 4
        %v2102 = vshll.u32 %v2001, 16
        %v2104 = vrot.slane %v2102, 5
        %v2105 = vsel %vm1432, %v2100, %v2104
        %v2106 = vshrl.u32 %v2001, 16
        %v2108 = vrot.slane %v2106, 4
        %v2109 = vor.u32 %v2108, %v2104
        %v2110 = vrot.slane %v2109, 4
        %v2112 = vshll.u32 %v2030, 16
        %v2114 = vrot.slane %v2112, 5
        %v2115 = vsel %vm1432, %v2110, %v2114
        %v2117 = vshrl.u32 %v2002, 16
        %v2119 = vrot.slane %v2117, 4
        %v2120 = vshll.u32 %v2002, 16
        %v2122 = vrot.slane %v2120, 5
        %v2123 = vor.u32 %v2119, %v2122
        %v2124 = vrot.slane %v2123, 4
        %v2126 = vshll.u32 %v2003, 16
        %v2128 = vrot.slane %v2126, 5
        %v2129 = vsel %vm1432, %v2124, %v2128
        %v2130 = vshrl.u32 %v2003, 16
        %v2132 = vrot.slane %v2130, 4
        %v2133 = vor.u32 %v2132, %v2128
        %v2134 = vrot.slane %v2133, 4
        %v2136 = vshll.u32 %v2031, 16
        %v2138 = vrot.slane %v2136, 5
        %v2139 = vsel %vm1432, %v2134, %v2138
        %v2141 = vshrl.u32 %v2004, 16
        %v2143 = vrot.slane %v2141, 4
        %v2144 = vshll.u32 %v2004, 16
        %v2146 = vrot.slane %v2144, 5
        %v2147 = vor.u32 %v2143, %v2146
        %v2148 = vrot.slane %v2147, 4
        %v2150 = vshll.u32 %v2005, 16
        %v2152 = vrot.slane %v2150, 5
        %v2153 = vsel %vm1432, %v2148, %v2152
        %v2154 = vshrl.u32 %v2005, 16
        %v2156 = vrot.slane %v2154, 4
        %v2157 = vor.u32 %v2156, %v2152
        %v2158 = vrot.slane %v2157, 4
        %v2160 = vshll.u32 %v2032, 16
        %v2162 = vrot.slane %v2160, 5
        %v2163 = vsel %vm1432, %v2158, %v2162
        %v2165 = vshrl.u32 %v2006, 16
        %v2167 = vrot.slane %v2165, 4
        %v2168 = vshll.u32 %v2006, 16
        %v2170 = vrot.slane %v2168, 5
        %v2171 = vor.u32 %v2167, %v2170
        %v2172 = vrot.slane %v2171, 4
        %v2174 = vshll.u32 %v2007, 16
        %v2176 = vrot.slane %v2174, 5
        %v2177 = vsel %vm1432, %v2172, %v2176
        %v2178 = vshrl.u32 %v2007, 16
        %v2180 = vrot.slane %v2178, 4
        %v2181 = vor.u32 %v2180, %v2176
        %v2182 = vrot.slane %v2181, 4
        %v2184 = vshll.u32 %v2033, 16
        %v2186 = vrot.slane %v2184, 5
        %v2187 = vsel %vm1432, %v2182, %v2186
        %v2189 = vshrl.u32 %v2008, 16
        %v2191 = vrot.slane %v2189, 4
        %v2192 = vshll.u32 %v2008, 16
        %v2194 = vrot.slane %v2192, 5
        %v2195 = vor.u32 %v2191, %v2194
        %v2196 = vrot.slane %v2195, 4
        %v2198 = vshll.u32 %v2009, 16
        %v2200 = vrot.slane %v2198, 5
        %v2201 = vsel %vm1432, %v2196, %v2200
        %v2202 = vshrl.u32 %v2009, 16
        %v2204 = vrot.slane %v2202, 4
        %v2205 = vor.u32 %v2204, %v2200
        %v2206 = vrot.slane %v2205, 4
        %v2208 = vshll.u32 %v2034, 16
        %v2210 = vrot.slane %v2208, 5
        %v2211 = vsel %vm1432, %v2206, %v2210
        %v2213 = vshrl.u32 %v2010, 16
        %v2215 = vrot.slane %v2213, 4
        %v2216 = vshll.u32 %v2010, 16
        %v2218 = vrot.slane %v2216, 5
        %v2219 = vor.u32 %v2215, %v2218
        %v2220 = vrot.slane %v2219, 4
        %v2222 = vshll.u32 %v2011, 16
        %v2224 = vrot.slane %v2222, 5
        %v2225 = vsel %vm1432, %v2220, %v2224
        %v2226 = vshrl.u32 %v2011, 16
        %v2228 = vrot.slane %v2226, 4
        %v2229 = vor.u32 %v2228, %v2224
        %v2230 = vrot.slane %v2229, 4
        %v2232 = vshll.u32 %v2035, 16
        %v2234 = vrot.slane %v2232, 5
        %v2235 = vsel %vm1432, %v2230, %v2234
        %v2237 = vshrl.u32 %v2012, 16
        %v2239 = vrot.slane %v2237, 4
        %v2240 = vshll.u32 %v2012, 16
        %v2242 = vrot.slane %v2240, 5
        %v2243 = vor.u32 %v2239, %v2242
        %v2244 = vrot.slane %v2243, 4
        %v2246 = vshll.u32 %v2013, 16
        %v2248 = vrot.slane %v2246, 5
        %v2249 = vsel %vm1432, %v2244, %v2248
        %v2250 = vshrl.u32 %v2013, 16
        %v2252 = vrot.slane %v2250, 4
        %v2253 = vor.u32 %v2252, %v2248
        %v2254 = vrot.slane %v2253, 4
        %v2256 = vshll.u32 %v2036, 16
        %v2258 = vrot.slane %v2256, 5
        %v2259 = vsel %vm1432, %v2254, %v2258
        %v2261 = vshrl.u32 %v2014, 16
        %v2263 = vrot.slane %v2261, 4
        %v2264 = vshll.u32 %v2014, 16
        %v2266 = vrot.slane %v2264, 5
        %v2267 = vor.u32 %v2263, %v2266
        %v2268 = vrot.slane %v2267, 4
        %v2270 = vshll.u32 %v2015, 16
        %v2272 = vrot.slane %v2270, 5
        %v2273 = vsel %vm1432, %v2268, %v2272
        %v2274 = vshrl.u32 %v2015, 16
        %v2276 = vrot.slane %v2274, 4
        %v2277 = vor.u32 %v2276, %v2272
        %v2278 = vrot.slane %v2277, 4
        %v2280 = vshll.u32 %v2037, 16
        %v2282 = vrot.slane %v2280, 5
        %v2283 = vsel %vm1432, %v2278, %v2282
        %v2285 = vshrl.u32 %v2016, 16
        %v2287 = vrot.slane %v2285, 4
        %v2288 = vshll.u32 %v2016, 16
        %v2290 = vrot.slane %v2288, 5
        %v2291 = vor.u32 %v2287, %v2290
        %v2292 = vrot.slane %v2291, 4
        %v2294 = vshll.u32 %v2017, 16
        %v2296 = vrot.slane %v2294, 5
        %v2297 = vsel %vm1432, %v2292, %v2296
        %v2298 = vshrl.u32 %v2017, 16
        %v2300 = vrot.slane %v2298, 4
        %v2301 = vor.u32 %v2300, %v2296
        %v2302 = vrot.slane %v2301, 4
        %v2304 = vshll.u32 %v2038, 16
        %v2306 = vrot.slane %v2304, 5
        %v2307 = vsel %vm1432, %v2302, %v2306
        %v2309 = vshrl.u32 %v2018, 16
        %v2311 = vrot.slane %v2309, 4
        %v2312 = vshll.u32 %v2018, 16
        %v2314 = vrot.slane %v2312, 5
        %v2315 = vor.u32 %v2311, %v2314
        %v2316 = vrot.slane %v2315, 4
        %v2318 = vshll.u32 %v2019, 16
        %v2320 = vrot.slane %v2318, 5
        %v2321 = vsel %vm1432, %v2316, %v2320
        %v2322 = vshrl.u32 %v2019, 16
        %v2324 = vrot.slane %v2322, 4
        %v2325 = vor.u32 %v2324, %v2320
        %v2326 = vrot.slane %v2325, 4
        %v2328 = vshll.u32 %v2039, 16
        %v2330 = vrot.slane %v2328, 5
        %v2331 = vsel %vm1432, %v2326, %v2330
        %v2333 = vshrl.u32 %v2020, 16
        %v2335 = vrot.slane %v2333, 4
        %v2336 = vshll.u32 %v2020, 16
        %v2338 = vrot.slane %v2336, 5
        %v2339 = vor.u32 %v2335, %v2338
        %v2340 = vrot.slane %v2339, 4
        %v2342 = vshll.u32 %v2021, 16
        %v2344 = vrot.slane %v2342, 5
        %v2345 = vsel %vm1432, %v2340, %v2344
        %v2346 = vshrl.u32 %v2021, 16
        %v2348 = vrot.slane %v2346, 4
        %v2349 = vor.u32 %v2348, %v2344
        %v2350 = vrot.slane %v2349, 4
        %v2352 = vshll.u32 %v2040, 16
        %v2354 = vrot.slane %v2352, 5
        %v2355 = vsel %vm1432, %v2350, %v2354
        %v2357 = vshrl.u32 %v2022, 16
        %v2359 = vrot.slane %v2357, 4
        %v2360 = vshll.u32 %v2022, 16
        %v2362 = vrot.slane %v2360, 5
        %v2363 = vor.u32 %v2359, %v2362
        %v2364 = vrot.slane %v2363, 4
        %v2366 = vshll.u32 %v2023, 16
        %v2368 = vrot.slane %v2366, 5
        %v2369 = vsel %vm1432, %v2364, %v2368
        %v2370 = vshrl.u32 %v2023, 16
        %v2372 = vrot.slane %v2370, 4
        %v2373 = vor.u32 %v2372, %v2368
        %v2374 = vrot.slane %v2373, 4
        %v2376 = vshll.u32 %v2041, 16
        %v2378 = vrot.slane %v2376, 5
        %v2379 = vsel %vm1432, %v2374, %v2378
        %v2381 = vshrl.u32 %v2024, 16
        %v2383 = vrot.slane %v2381, 4
        %v2384 = vshll.u32 %v2024, 16
        %v2386 = vrot.slane %v2384, 5
        %v2387 = vor.u32 %v2383, %v2386
        %v2388 = vrot.slane %v2387, 4
        %v2390 = vshll.u32 %v2025, 16
        %v2392 = vrot.slane %v2390, 5
        %v2393 = vsel %vm1432, %v2388, %v2392
        %v2394 = vshrl.u32 %v2025, 16
        %v2396 = vrot.slane %v2394, 4
        %v2397 = vor.u32 %v2396, %v2392
        %v2398 = vrot.slane %v2397, 4
        %v2400 = vshll.u32 %v2042, 16
        %v2402 = vrot.slane %v2400, 5
        %v2403 = vsel %vm1432, %v2398, %v2402
        %v2405 = vshrl.u32 %v2026, 16
        %v2407 = vrot.slane %v2405, 4
        %v2408 = vshll.u32 %v2026, 16
        %v2410 = vrot.slane %v2408, 5
        %v2411 = vor.u32 %v2407, %v2410
        %v2412 = vrot.slane %v2411, 4
        %v2414 = vshll.u32 %v2027, 16
        %v2416 = vrot.slane %v2414, 5
        %v2417 = vsel %vm1432, %v2412, %v2416
        %v2418 = vshrl.u32 %v2027, 16
        %v2420 = vrot.slane %v2418, 4
        %v2421 = vor.u32 %v2420, %v2416
        %v2422 = vrot.slane %v2421, 4
        %v2424 = vshll.u32 %v2043, 16
        %v2426 = vrot.slane %v2424, 5
        %v2427 = vsel %vm1432, %v2422, %v2426
        %v2428 = vld [vmem:[%s1267] sm:$0xe]
        %v2429 = vld [vmem:[%s1267 + $0xc] sm:$0xe]
        %v2430 = vld [vmem:[%s1267 + $0x18] sm:$0xe]
        %v2431 = vld [vmem:[%s1267 + $0x24] sm:$0xe]
        %v2432 = vld [vmem:[%s1267 + $0x30] sm:$0xe]
        %v2433 = vld [vmem:[%s1267 + $0x3c] sm:$0xe]
        %v2434 = vld [vmem:[%s1267 + $0x48] sm:$0xe]
        %v2435 = vld [vmem:[%s1267 + $0x54] sm:$0xe]
        %v2436 = vld [vmem:[%s1267 + $0x60] sm:$0xe]
        %v2437 = vld [vmem:[%s1267 + $0x6c] sm:$0xe]
        %v2438 = vld [vmem:[%s1267 + $0x78] sm:$0xe]
        %v2439 = vld [vmem:[%s1267 + $0x84] sm:$0xe]
        %v2440 = vld [vmem:[%s1267 + $0x90] sm:$0xe]
        %v2441 = vld [vmem:[%s1267 + $0x9c] sm:$0xe]
        %v2442 = vld [vmem:[%s1267 + $0xa8] sm:$0xe]
        %v2443 = vld [vmem:[%s1267 + $0xb4] sm:$0xe]
        %v2492 = vrot.slane %v2428, 5
        %v2493 = vrot.slane %v2492, 4
        %v2494 = vrot.slane %v1997, 5
        %v2495 = vsel %vm1883, %v2493, %v2494
        %v2496 = vrot.slane %v2494, 4
        %v2497 = vrot.slane %v2028, 5
        %v2498 = vsel %vm1883, %v2496, %v2497
        %v2499 = vrot.slane %v2429, 5
        %v2500 = vrot.slane %v2499, 4
        %v2501 = vrot.slane %v1999, 5
        %v2502 = vsel %vm1883, %v2500, %v2501
        %v2503 = vrot.slane %v2501, 4
        %v2504 = vrot.slane %v2029, 5
        %v2505 = vsel %vm1883, %v2503, %v2504
        %v2506 = vrot.slane %v2430, 5
        %v2507 = vrot.slane %v2506, 4
        %v2508 = vrot.slane %v2001, 5
        %v2509 = vsel %vm1883, %v2507, %v2508
        %v2510 = vrot.slane %v2508, 4
        %v2511 = vrot.slane %v2030, 5
        %v2512 = vsel %vm1883, %v2510, %v2511
        %v2513 = vrot.slane %v2431, 5
        %v2514 = vrot.slane %v2513, 4
        %v2515 = vrot.slane %v2003, 5
        %v2516 = vsel %vm1883, %v2514, %v2515
        %v2517 = vrot.slane %v2515, 4
        %v2518 = vrot.slane %v2031, 5
        %v2519 = vsel %vm1883, %v2517, %v2518
        %v2520 = vrot.slane %v2432, 5
        %v2521 = vrot.slane %v2520, 4
        %v2522 = vrot.slane %v2005, 5
        %v2523 = vsel %vm1883, %v2521, %v2522
        %v2524 = vrot.slane %v2522, 4
        %v2525 = vrot.slane %v2032, 5
        %v2526 = vsel %vm1883, %v2524, %v2525
        %v2527 = vrot.slane %v2433, 5
        %v2528 = vrot.slane %v2527, 4
        %v2529 = vrot.slane %v2007, 5
        %v2530 = vsel %vm1883, %v2528, %v2529
        %v2531 = vrot.slane %v2529, 4
        %v2532 = vrot.slane %v2033, 5
        %v2533 = vsel %vm1883, %v2531, %v2532
        %v2534 = vrot.slane %v2434, 5
        %v2535 = vrot.slane %v2534, 4
        %v2536 = vrot.slane %v2009, 5
        %v2537 = vsel %vm1883, %v2535, %v2536
        %v2538 = vrot.slane %v2536, 4
        %v2539 = vrot.slane %v2034, 5
        %v2540 = vsel %vm1883, %v2538, %v2539
        %v2541 = vrot.slane %v2435, 5
        %v2542 = vrot.slane %v2541, 4
        %v2543 = vrot.slane %v2011, 5
        %v2544 = vsel %vm1883, %v2542, %v2543
        %v2545 = vrot.slane %v2543, 4
        %v2546 = vrot.slane %v2035, 5
        %v2547 = vsel %vm1883, %v2545, %v2546
        %v2548 = vrot.slane %v2436, 5
        %v2549 = vrot.slane %v2548, 4
        %v2550 = vrot.slane %v2013, 5
        %v2551 = vsel %vm1883, %v2549, %v2550
        %v2552 = vrot.slane %v2550, 4
        %v2553 = vrot.slane %v2036, 5
        %v2554 = vsel %vm1883, %v2552, %v2553
        %v2555 = vrot.slane %v2437, 5
        %v2556 = vrot.slane %v2555, 4
        %v2557 = vrot.slane %v2015, 5
        %v2558 = vsel %vm1883, %v2556, %v2557
        %v2559 = vrot.slane %v2557, 4
        %v2560 = vrot.slane %v2037, 5
        %v2561 = vsel %vm1883, %v2559, %v2560
        %v2562 = vrot.slane %v2438, 5
        %v2563 = vrot.slane %v2562, 4
        %v2564 = vrot.slane %v2017, 5
        %v2565 = vsel %vm1883, %v2563, %v2564
        %v2566 = vrot.slane %v2564, 4
        %v2567 = vrot.slane %v2038, 5
        %v2568 = vsel %vm1883, %v2566, %v2567
        %v2569 = vrot.slane %v2439, 5
        %v2570 = vrot.slane %v2569, 4
        %v2571 = vrot.slane %v2019, 5
        %v2572 = vsel %vm1883, %v2570, %v2571
        %v2573 = vrot.slane %v2571, 4
        %v2574 = vrot.slane %v2039, 5
        %v2575 = vsel %vm1883, %v2573, %v2574
        %v2576 = vrot.slane %v2440, 5
        %v2577 = vrot.slane %v2576, 4
        %v2578 = vrot.slane %v2021, 5
        %v2579 = vsel %vm1883, %v2577, %v2578
        %v2580 = vrot.slane %v2578, 4
        %v2581 = vrot.slane %v2040, 5
        %v2582 = vsel %vm1883, %v2580, %v2581
        %v2583 = vrot.slane %v2441, 5
        %v2584 = vrot.slane %v2583, 4
        %v2585 = vrot.slane %v2023, 5
        %v2586 = vsel %vm1883, %v2584, %v2585
        %v2587 = vrot.slane %v2585, 4
        %v2588 = vrot.slane %v2041, 5
        %v2589 = vsel %vm1883, %v2587, %v2588
        %v2590 = vrot.slane %v2442, 5
        %v2591 = vrot.slane %v2590, 4
        %v2592 = vrot.slane %v2025, 5
        %v2593 = vsel %vm1883, %v2591, %v2592
        %v2594 = vrot.slane %v2592, 4
        %v2595 = vrot.slane %v2042, 5
        %v2596 = vsel %vm1883, %v2594, %v2595
        %v2597 = vrot.slane %v2443, 5
        %v2598 = vrot.slane %v2597, 4
        %v2599 = vrot.slane %v2027, 5
        %v2600 = vsel %vm1883, %v2598, %v2599
        %v2601 = vrot.slane %v2599, 4
        %v2602 = vrot.slane %v2043, 5
        %v2603 = vsel %vm1883, %v2601, %v2602
        %s2604 = scalar_lea.vmem [#allocation2], 24
        %v2605 = vld [vmem:[%s2604] sm:$0xf]
        %v2606 = vld [vmem:[%s2604 + $0x4] sm:$0xf]
        %v2607 = vld [vmem:[%s2604 + $0xc] sm:$0xf]
        %v2608 = vld [vmem:[%s2604 + $0x10] sm:$0xf]
        %v2609 = vld [vmem:[%s2604 + $0x18] sm:$0xf]
        %v2610 = vld [vmem:[%s2604 + $0x1c] sm:$0xf]
        %v2611 = vld [vmem:[%s2604 + $0x24] sm:$0xf]
        %v2612 = vld [vmem:[%s2604 + $0x28] sm:$0xf]
        %v2613 = vld [vmem:[%s2604 + $0x30] sm:$0xf]
        %v2614 = vld [vmem:[%s2604 + $0x34] sm:$0xf]
        %v2615 = vld [vmem:[%s2604 + $0x3c] sm:$0xf]
        %v2616 = vld [vmem:[%s2604 + $0x40] sm:$0xf]
        %v2617 = vld [vmem:[%s2604 + $0x48] sm:$0xf]
        %v2618 = vld [vmem:[%s2604 + $0x4c] sm:$0xf]
        %v2619 = vld [vmem:[%s2604 + $0x54] sm:$0xf]
        %v2620 = vld [vmem:[%s2604 + $0x58] sm:$0xf]
        %v2621 = vld [vmem:[%s2604 + $0x60] sm:$0xf]
        %v2622 = vld [vmem:[%s2604 + $0x64] sm:$0xf]
        %v2623 = vld [vmem:[%s2604 + $0x6c] sm:$0xf]
        %v2624 = vld [vmem:[%s2604 + $0x70] sm:$0xf]
        %v2625 = vld [vmem:[%s2604 + $0x78] sm:$0xf]
        %v2626 = vld [vmem:[%s2604 + $0x7c] sm:$0xf]
        %v2627 = vld [vmem:[%s2604 + $0x84] sm:$0xf]
        %v2628 = vld [vmem:[%s2604 + $0x88] sm:$0xf]
        %v2629 = vld [vmem:[%s2604 + $0x90] sm:$0xf]
        %v2630 = vld [vmem:[%s2604 + $0x94] sm:$0xf]
        %v2631 = vld [vmem:[%s2604 + $0x9c] sm:$0xf]
        %v2632 = vld [vmem:[%s2604 + $0xa0] sm:$0xf]
        %v2633 = vld [vmem:[%s2604 + $0xa8] sm:$0xf]
        %v2634 = vld [vmem:[%s2604 + $0xac] sm:$0xf]
        %v2635 = vld [vmem:[%s2604 + $0xb4] sm:$0xf]
        %v2636 = vld [vmem:[%s2604 + $0xb8] sm:$0xf]
        %v2637 = vld [vmem:[%s2604 + $0x8] sm:$0x1]
        %v2638 = vld [vmem:[%s2604 + $0x14] sm:$0x1]
        %v2639 = vld [vmem:[%s2604 + $0x20] sm:$0x1]
        %v2640 = vld [vmem:[%s2604 + $0x2c] sm:$0x1]
        %v2641 = vld [vmem:[%s2604 + $0x38] sm:$0x1]
        %v2642 = vld [vmem:[%s2604 + $0x44] sm:$0x1]
        %v2643 = vld [vmem:[%s2604 + $0x50] sm:$0x1]
        %v2644 = vld [vmem:[%s2604 + $0x5c] sm:$0x1]
        %v2645 = vld [vmem:[%s2604 + $0x68] sm:$0x1]
        %v2646 = vld [vmem:[%s2604 + $0x74] sm:$0x1]
        %v2647 = vld [vmem:[%s2604 + $0x80] sm:$0x1]
        %v2648 = vld [vmem:[%s2604 + $0x8c] sm:$0x1]
        %v2649 = vld [vmem:[%s2604 + $0x98] sm:$0x1]
        %v2650 = vld [vmem:[%s2604 + $0xa4] sm:$0x1]
        %v2651 = vld [vmem:[%s2604 + $0xb0] sm:$0x1]
        %v2652 = vld [vmem:[%s2604 + $0xbc] sm:$0x1]
        %v2654 = vshrl.u32 %v2605, 16
        %v2656 = vrot.slane %v2654, 4
        %v2657 = vshll.u32 %v2605, 16
        %v2659 = vrot.slane %v2657, 5
        %v2660 = vor.u32 %v2656, %v2659
        %v2661 = vrot.slane %v2660, 4
        %v2663 = vshll.u32 %v2606, 16
        %v2665 = vrot.slane %v2663, 5
        %v2666 = vsel %vm1432, %v2661, %v2665
        %v2667 = vshrl.u32 %v2606, 16
        %v2669 = vrot.slane %v2667, 4
        %v2670 = vor.u32 %v2669, %v2665
        %v2671 = vrot.slane %v2670, 4
        %v2673 = vshll.u32 %v2637, 16
        %v2675 = vrot.slane %v2673, 5
        %v2676 = vsel %vm1432, %v2671, %v2675
        %v2678 = vshrl.u32 %v2607, 16
        %v2680 = vrot.slane %v2678, 4
        %v2681 = vshll.u32 %v2607, 16
        %v2683 = vrot.slane %v2681, 5
        %v2684 = vor.u32 %v2680, %v2683
        %v2685 = vrot.slane %v2684, 4
        %v2687 = vshll.u32 %v2608, 16
        %v2689 = vrot.slane %v2687, 5
        %v2690 = vsel %vm1432, %v2685, %v2689
        %v2691 = vshrl.u32 %v2608, 16
        %v2693 = vrot.slane %v2691, 4
        %v2694 = vor.u32 %v2693, %v2689
        %v2695 = vrot.slane %v2694, 4
        %v2697 = vshll.u32 %v2638, 16
        %v2699 = vrot.slane %v2697, 5
        %v2700 = vsel %vm1432, %v2695, %v2699
        %v2702 = vshrl.u32 %v2609, 16
        %v2704 = vrot.slane %v2702, 4
        %v2705 = vshll.u32 %v2609, 16
        %v2707 = vrot.slane %v2705, 5
        %v2708 = vor.u32 %v2704, %v2707
        %v2709 = vrot.slane %v2708, 4
        %v2711 = vshll.u32 %v2610, 16
        %v2713 = vrot.slane %v2711, 5
        %v2714 = vsel %vm1432, %v2709, %v2713
        %v2715 = vshrl.u32 %v2610, 16
        %v2717 = vrot.slane %v2715, 4
        %v2718 = vor.u32 %v2717, %v2713
        %v2719 = vrot.slane %v2718, 4
        %v2721 = vshll.u32 %v2639, 16
        %v2723 = vrot.slane %v2721, 5
        %v2724 = vsel %vm1432, %v2719, %v2723
        %v2726 = vshrl.u32 %v2611, 16
        %v2728 = vrot.slane %v2726, 4
        %v2729 = vshll.u32 %v2611, 16
        %v2731 = vrot.slane %v2729, 5
        %v2732 = vor.u32 %v2728, %v2731
        %v2733 = vrot.slane %v2732, 4
        %v2735 = vshll.u32 %v2612, 16
        %v2737 = vrot.slane %v2735, 5
        %v2738 = vsel %vm1432, %v2733, %v2737
        %v2739 = vshrl.u32 %v2612, 16
        %v2741 = vrot.slane %v2739, 4
        %v2742 = vor.u32 %v2741, %v2737
        %v2743 = vrot.slane %v2742, 4
        %v2745 = vshll.u32 %v2640, 16
        %v2747 = vrot.slane %v2745, 5
        %v2748 = vsel %vm1432, %v2743, %v2747
        %v2750 = vshrl.u32 %v2613, 16
        %v2752 = vrot.slane %v2750, 4
        %v2753 = vshll.u32 %v2613, 16
        %v2755 = vrot.slane %v2753, 5
        %v2756 = vor.u32 %v2752, %v2755
        %v2757 = vrot.slane %v2756, 4
        %v2759 = vshll.u32 %v2614, 16
        %v2761 = vrot.slane %v2759, 5
        %v2762 = vsel %vm1432, %v2757, %v2761
        %v2763 = vshrl.u32 %v2614, 16
        %v2765 = vrot.slane %v2763, 4
        %v2766 = vor.u32 %v2765, %v2761
        %v2767 = vrot.slane %v2766, 4
        %v2769 = vshll.u32 %v2641, 16
        %v2771 = vrot.slane %v2769, 5
        %v2772 = vsel %vm1432, %v2767, %v2771
        %v2774 = vshrl.u32 %v2615, 16
        %v2776 = vrot.slane %v2774, 4
        %v2777 = vshll.u32 %v2615, 16
        %v2779 = vrot.slane %v2777, 5
        %v2780 = vor.u32 %v2776, %v2779
        %v2781 = vrot.slane %v2780, 4
        %v2783 = vshll.u32 %v2616, 16
        %v2785 = vrot.slane %v2783, 5
        %v2786 = vsel %vm1432, %v2781, %v2785
        %v2787 = vshrl.u32 %v2616, 16
        %v2789 = vrot.slane %v2787, 4
        %v2790 = vor.u32 %v2789, %v2785
        %v2791 = vrot.slane %v2790, 4
        %v2793 = vshll.u32 %v2642, 16
        %v2795 = vrot.slane %v2793, 5
        %v2796 = vsel %vm1432, %v2791, %v2795
        %v2798 = vshrl.u32 %v2617, 16
        %v2800 = vrot.slane %v2798, 4
        %v2801 = vshll.u32 %v2617, 16
        %v2803 = vrot.slane %v2801, 5
        %v2804 = vor.u32 %v2800, %v2803
        %v2805 = vrot.slane %v2804, 4
        %v2807 = vshll.u32 %v2618, 16
        %v2809 = vrot.slane %v2807, 5
        %v2810 = vsel %vm1432, %v2805, %v2809
        %v2811 = vshrl.u32 %v2618, 16
        %v2813 = vrot.slane %v2811, 4
        %v2814 = vor.u32 %v2813, %v2809
        %v2815 = vrot.slane %v2814, 4
        %v2817 = vshll.u32 %v2643, 16
        %v2819 = vrot.slane %v2817, 5
        %v2820 = vsel %vm1432, %v2815, %v2819
        %v2822 = vshrl.u32 %v2619, 16
        %v2824 = vrot.slane %v2822, 4
        %v2825 = vshll.u32 %v2619, 16
        %v2827 = vrot.slane %v2825, 5
        %v2828 = vor.u32 %v2824, %v2827
        %v2829 = vrot.slane %v2828, 4
        %v2831 = vshll.u32 %v2620, 16
        %v2833 = vrot.slane %v2831, 5
        %v2834 = vsel %vm1432, %v2829, %v2833
        %v2835 = vshrl.u32 %v2620, 16
        %v2837 = vrot.slane %v2835, 4
        %v2838 = vor.u32 %v2837, %v2833
        %v2839 = vrot.slane %v2838, 4
        %v2841 = vshll.u32 %v2644, 16
        %v2843 = vrot.slane %v2841, 5
        %v2844 = vsel %vm1432, %v2839, %v2843
        %v2846 = vshrl.u32 %v2621, 16
        %v2848 = vrot.slane %v2846, 4
        %v2849 = vshll.u32 %v2621, 16
        %v2851 = vrot.slane %v2849, 5
        %v2852 = vor.u32 %v2848, %v2851
        %v2853 = vrot.slane %v2852, 4
        %v2855 = vshll.u32 %v2622, 16
        %v2857 = vrot.slane %v2855, 5
        %v2858 = vsel %vm1432, %v2853, %v2857
        %v2859 = vshrl.u32 %v2622, 16
        %v2861 = vrot.slane %v2859, 4
        %v2862 = vor.u32 %v2861, %v2857
        %v2863 = vrot.slane %v2862, 4
        %v2865 = vshll.u32 %v2645, 16
        %v2867 = vrot.slane %v2865, 5
        %v2868 = vsel %vm1432, %v2863, %v2867
        %v2870 = vshrl.u32 %v2623, 16
        %v2872 = vrot.slane %v2870, 4
        %v2873 = vshll.u32 %v2623, 16
        %v2875 = vrot.slane %v2873, 5
        %v2876 = vor.u32 %v2872, %v2875
        %v2877 = vrot.slane %v2876, 4
        %v2879 = vshll.u32 %v2624, 16
        %v2881 = vrot.slane %v2879, 5
        %v2882 = vsel %vm1432, %v2877, %v2881
        %v2883 = vshrl.u32 %v2624, 16
        %v2885 = vrot.slane %v2883, 4
        %v2886 = vor.u32 %v2885, %v2881
        %v2887 = vrot.slane %v2886, 4
        %v2889 = vshll.u32 %v2646, 16
        %v2891 = vrot.slane %v2889, 5
        %v2892 = vsel %vm1432, %v2887, %v2891
        %v2894 = vshrl.u32 %v2625, 16
        %v2896 = vrot.slane %v2894, 4
        %v2897 = vshll.u32 %v2625, 16
        %v2899 = vrot.slane %v2897, 5
        %v2900 = vor.u32 %v2896, %v2899
        %v2901 = vrot.slane %v2900, 4
        %v2903 = vshll.u32 %v2626, 16
        %v2905 = vrot.slane %v2903, 5
        %v2906 = vsel %vm1432, %v2901, %v2905
        %v2907 = vshrl.u32 %v2626, 16
        %v2909 = vrot.slane %v2907, 4
        %v2910 = vor.u32 %v2909, %v2905
        %v2911 = vrot.slane %v2910, 4
        %v2913 = vshll.u32 %v2647, 16
        %v2915 = vrot.slane %v2913, 5
        %v2916 = vsel %vm1432, %v2911, %v2915
        %v2918 = vshrl.u32 %v2627, 16
        %v2920 = vrot.slane %v2918, 4
        %v2921 = vshll.u32 %v2627, 16
        %v2923 = vrot.slane %v2921, 5
        %v2924 = vor.u32 %v2920, %v2923
        %v2925 = vrot.slane %v2924, 4
        %v2927 = vshll.u32 %v2628, 16
        %v2929 = vrot.slane %v2927, 5
        %v2930 = vsel %vm1432, %v2925, %v2929
        %v2931 = vshrl.u32 %v2628, 16
        %v2933 = vrot.slane %v2931, 4
        %v2934 = vor.u32 %v2933, %v2929
        %v2935 = vrot.slane %v2934, 4
        %v2937 = vshll.u32 %v2648, 16
        %v2939 = vrot.slane %v2937, 5
        %v2940 = vsel %vm1432, %v2935, %v2939
        %v2942 = vshrl.u32 %v2629, 16
        %v2944 = vrot.slane %v2942, 4
        %v2945 = vshll.u32 %v2629, 16
        %v2947 = vrot.slane %v2945, 5
        %v2948 = vor.u32 %v2944, %v2947
        %v2949 = vrot.slane %v2948, 4
        %v2951 = vshll.u32 %v2630, 16
        %v2953 = vrot.slane %v2951, 5
        %v2954 = vsel %vm1432, %v2949, %v2953
        %v2955 = vshrl.u32 %v2630, 16
        %v2957 = vrot.slane %v2955, 4
        %v2958 = vor.u32 %v2957, %v2953
        %v2959 = vrot.slane %v2958, 4
        %v2961 = vshll.u32 %v2649, 16
        %v2963 = vrot.slane %v2961, 5
        %v2964 = vsel %vm1432, %v2959, %v2963
        %v2966 = vshrl.u32 %v2631, 16
        %v2968 = vrot.slane %v2966, 4
        %v2969 = vshll.u32 %v2631, 16
        %v2971 = vrot.slane %v2969, 5
        %v2972 = vor.u32 %v2968, %v2971
        %v2973 = vrot.slane %v2972, 4
        %v2975 = vshll.u32 %v2632, 16
        %v2977 = vrot.slane %v2975, 5
        %v2978 = vsel %vm1432, %v2973, %v2977
        %v2979 = vshrl.u32 %v2632, 16
        %v2981 = vrot.slane %v2979, 4
        %v2982 = vor.u32 %v2981, %v2977
        %v2983 = vrot.slane %v2982, 4
        %v2985 = vshll.u32 %v2650, 16
        %v2987 = vrot.slane %v2985, 5
        %v2988 = vsel %vm1432, %v2983, %v2987
        %v2990 = vshrl.u32 %v2633, 16
        %v2992 = vrot.slane %v2990, 4
        %v2993 = vshll.u32 %v2633, 16
        %v2995 = vrot.slane %v2993, 5
        %v2996 = vor.u32 %v2992, %v2995
        %v2997 = vrot.slane %v2996, 4
        %v2999 = vshll.u32 %v2634, 16
        %v3001 = vrot.slane %v2999, 5
        %v3002 = vsel %vm1432, %v2997, %v3001
        %v3003 = vshrl.u32 %v2634, 16
        %v3005 = vrot.slane %v3003, 4
        %v3006 = vor.u32 %v3005, %v3001
        %v3007 = vrot.slane %v3006, 4
        %v3009 = vshll.u32 %v2651, 16
        %v3011 = vrot.slane %v3009, 5
        %v3012 = vsel %vm1432, %v3007, %v3011
        %v3014 = vshrl.u32 %v2635, 16
        %v3016 = vrot.slane %v3014, 4
        %v3017 = vshll.u32 %v2635, 16
        %v3019 = vrot.slane %v3017, 5
        %v3020 = vor.u32 %v3016, %v3019
        %v3021 = vrot.slane %v3020, 4
        %v3023 = vshll.u32 %v2636, 16
        %v3025 = vrot.slane %v3023, 5
        %v3026 = vsel %vm1432, %v3021, %v3025
        %v3027 = vshrl.u32 %v2636, 16
        %v3029 = vrot.slane %v3027, 4
        %v3030 = vor.u32 %v3029, %v3025
        %v3031 = vrot.slane %v3030, 4
        %v3033 = vshll.u32 %v2652, 16
        %v3035 = vrot.slane %v3033, 5
        %v3036 = vsel %vm1432, %v3031, %v3035
        %v3037 = vld [vmem:[%s2604] sm:$0xe]
        %v3038 = vld [vmem:[%s2604 + $0xc] sm:$0xe]
        %v3039 = vld [vmem:[%s2604 + $0x18] sm:$0xe]
        %v3040 = vld [vmem:[%s2604 + $0x24] sm:$0xe]
        %v3041 = vld [vmem:[%s2604 + $0x30] sm:$0xe]
        %v3042 = vld [vmem:[%s2604 + $0x3c] sm:$0xe]
        %v3043 = vld [vmem:[%s2604 + $0x48] sm:$0xe]
        %v3044 = vld [vmem:[%s2604 + $0x54] sm:$0xe]
        %v3045 = vld [vmem:[%s2604 + $0x60] sm:$0xe]
        %v3046 = vld [vmem:[%s2604 + $0x6c] sm:$0xe]
        %v3047 = vld [vmem:[%s2604 + $0x78] sm:$0xe]
        %v3048 = vld [vmem:[%s2604 + $0x84] sm:$0xe]
        %v3049 = vld [vmem:[%s2604 + $0x90] sm:$0xe]
        %v3050 = vld [vmem:[%s2604 + $0x9c] sm:$0xe]
        %v3051 = vld [vmem:[%s2604 + $0xa8] sm:$0xe]
        %v3052 = vld [vmem:[%s2604 + $0xb4] sm:$0xe]
        %v3101 = vrot.slane %v3037, 5
        %v3102 = vrot.slane %v3101, 4
        %v3103 = vrot.slane %v2606, 5
        %v3104 = vsel %vm1883, %v3102, %v3103
        %v3105 = vrot.slane %v3103, 4
        %v3106 = vrot.slane %v2637, 5
        %v3107 = vsel %vm1883, %v3105, %v3106
        %v3108 = vrot.slane %v3038, 5
        %v3109 = vrot.slane %v3108, 4
        %v3110 = vrot.slane %v2608, 5
        %v3111 = vsel %vm1883, %v3109, %v3110
        %v3112 = vrot.slane %v3110, 4
        %v3113 = vrot.slane %v2638, 5
        %v3114 = vsel %vm1883, %v3112, %v3113
        %v3115 = vrot.slane %v3039, 5
        %v3116 = vrot.slane %v3115, 4
        %v3117 = vrot.slane %v2610, 5
        %v3118 = vsel %vm1883, %v3116, %v3117
        %v3119 = vrot.slane %v3117, 4
        %v3120 = vrot.slane %v2639, 5
        %v3121 = vsel %vm1883, %v3119, %v3120
        %v3122 = vrot.slane %v3040, 5
        %v3123 = vrot.slane %v3122, 4
        %v3124 = vrot.slane %v2612, 5
        %v3125 = vsel %vm1883, %v3123, %v3124
        %v3126 = vrot.slane %v3124, 4
        %v3127 = vrot.slane %v2640, 5
        %v3128 = vsel %vm1883, %v3126, %v3127
        %v3129 = vrot.slane %v3041, 5
        %v3130 = vrot.slane %v3129, 4
        %v3131 = vrot.slane %v2614, 5
        %v3132 = vsel %vm1883, %v3130, %v3131
        %v3133 = vrot.slane %v3131, 4
        %v3134 = vrot.slane %v2641, 5
        %v3135 = vsel %vm1883, %v3133, %v3134
        %v3136 = vrot.slane %v3042, 5
        %v3137 = vrot.slane %v3136, 4
        %v3138 = vrot.slane %v2616, 5
        %v3139 = vsel %vm1883, %v3137, %v3138
        %v3140 = vrot.slane %v3138, 4
        %v3141 = vrot.slane %v2642, 5
        %v3142 = vsel %vm1883, %v3140, %v3141
        %v3143 = vrot.slane %v3043, 5
        %v3144 = vrot.slane %v3143, 4
        %v3145 = vrot.slane %v2618, 5
        %v3146 = vsel %vm1883, %v3144, %v3145
        %v3147 = vrot.slane %v3145, 4
        %v3148 = vrot.slane %v2643, 5
        %v3149 = vsel %vm1883, %v3147, %v3148
        %v3150 = vrot.slane %v3044, 5
        %v3151 = vrot.slane %v3150, 4
        %v3152 = vrot.slane %v2620, 5
        %v3153 = vsel %vm1883, %v3151, %v3152
        %v3154 = vrot.slane %v3152, 4
        %v3155 = vrot.slane %v2644, 5
        %v3156 = vsel %vm1883, %v3154, %v3155
        %v3157 = vrot.slane %v3045, 5
        %v3158 = vrot.slane %v3157, 4
        %v3159 = vrot.slane %v2622, 5
        %v3160 = vsel %vm1883, %v3158, %v3159
        %v3161 = vrot.slane %v3159, 4
        %v3162 = vrot.slane %v2645, 5
        %v3163 = vsel %vm1883, %v3161, %v3162
        %v3164 = vrot.slane %v3046, 5
        %v3165 = vrot.slane %v3164, 4
        %v3166 = vrot.slane %v2624, 5
        %v3167 = vsel %vm1883, %v3165, %v3166
        %v3168 = vrot.slane %v3166, 4
        %v3169 = vrot.slane %v2646, 5
        %v3170 = vsel %vm1883, %v3168, %v3169
        %v3171 = vrot.slane %v3047, 5
        %v3172 = vrot.slane %v3171, 4
        %v3173 = vrot.slane %v2626, 5
        %v3174 = vsel %vm1883, %v3172, %v3173
        %v3175 = vrot.slane %v3173, 4
        %v3176 = vrot.slane %v2647, 5
        %v3177 = vsel %vm1883, %v3175, %v3176
        %v3178 = vrot.slane %v3048, 5
        %v3179 = vrot.slane %v3178, 4
        %v3180 = vrot.slane %v2628, 5
        %v3181 = vsel %vm1883, %v3179, %v3180
        %v3182 = vrot.slane %v3180, 4
        %v3183 = vrot.slane %v2648, 5
        %v3184 = vsel %vm1883, %v3182, %v3183
        %v3185 = vrot.slane %v3049, 5
        %v3186 = vrot.slane %v3185, 4
        %v3187 = vrot.slane %v2630, 5
        %v3188 = vsel %vm1883, %v3186, %v3187
        %v3189 = vrot.slane %v3187, 4
        %v3190 = vrot.slane %v2649, 5
        %v3191 = vsel %vm1883, %v3189, %v3190
        %v3192 = vrot.slane %v3050, 5
        %v3193 = vrot.slane %v3192, 4
        %v3194 = vrot.slane %v2632, 5
        %v3195 = vsel %vm1883, %v3193, %v3194
        %v3196 = vrot.slane %v3194, 4
        %v3197 = vrot.slane %v2650, 5
        %v3198 = vsel %vm1883, %v3196, %v3197
        %v3199 = vrot.slane %v3051, 5
        %v3200 = vrot.slane %v3199, 4
        %v3201 = vrot.slane %v2634, 5
        %v3202 = vsel %vm1883, %v3200, %v3201
        %v3203 = vrot.slane %v3201, 4
        %v3204 = vrot.slane %v2651, 5
        %v3205 = vsel %vm1883, %v3203, %v3204
        %v3206 = vrot.slane %v3052, 5
        %v3207 = vrot.slane %v3206, 4
        %v3208 = vrot.slane %v2636, 5
        %v3209 = vsel %vm1883, %v3207, %v3208
        %v3210 = vrot.slane %v3208, 4
        %v3211 = vrot.slane %v2652, 5
        %v3212 = vsel %vm1883, %v3210, %v3211
        %v3229 = vunpack.c.l.b16 %v1382
        %v3230 = vunpack.c.l.b16 %v1383
        %v3231 = vunpack.c.l.b16 %v1384
        %v3232 = vunpack.c.l.b16 %v1385
        %v3233 = vunpack.c.l.b16 %v1386
        %v3234 = vunpack.c.l.b16 %v1387
        %v3235 = vunpack.c.l.b16 %v1388
        %v3236 = vunpack.c.l.b16 %v1389
        %v3237 = vunpack.c.l.b16 %v1390
        %v3238 = vunpack.c.l.b16 %v1391
        %v3239 = vunpack.c.l.b16 %v1392
        %v3240 = vunpack.c.l.b16 %v1393
        %v3241 = vunpack.c.l.b16 %v1394
        %v3242 = vunpack.c.l.b16 %v1395
        %v3243 = vunpack.c.l.b16 %v1396
        %v3244 = vunpack.c.l.b16 %v1397
        %v3245 = vunpack.c.l.b16 %v1398
        %v3246 = vunpack.c.l.b16 %v1399
        %v3247 = vunpack.c.l.b16 %v1400
        %v3248 = vunpack.c.l.b16 %v1401
        %v3249 = vunpack.c.l.b16 %v1402
        %v3250 = vunpack.c.l.b16 %v1403
        %v3251 = vunpack.c.l.b16 %v1404
        %v3252 = vunpack.c.l.b16 %v1405
        %v3253 = vunpack.c.l.b16 %v1406
        %v3254 = vunpack.c.l.b16 %v1407
        %v3255 = vunpack.c.l.b16 %v1408
        %v3256 = vunpack.c.l.b16 %v1409
        %v3257 = vunpack.c.l.b16 %v1410
        %v3258 = vunpack.c.l.b16 %v1411
        %v3259 = vunpack.c.l.b16 %v1412
        %v3260 = vunpack.c.l.b16 %v1413
        %v3261 = vpack.c.b16 %v3230, %v3229
        %v3262 = vpack.c.b16 %v3232, %v3231
        %v3263 = vpack.c.b16 %v3234, %v3233
        %v3264 = vpack.c.b16 %v3236, %v3235
        %v3265 = vpack.c.b16 %v3238, %v3237
        %v3266 = vpack.c.b16 %v3240, %v3239
        %v3267 = vpack.c.b16 %v3242, %v3241
        %v3268 = vpack.c.b16 %v3244, %v3243
        %v3269 = vpack.c.b16 %v3246, %v3245
        %v3270 = vpack.c.b16 %v3248, %v3247
        %v3271 = vpack.c.b16 %v3250, %v3249
        %v3272 = vpack.c.b16 %v3252, %v3251
        %v3273 = vpack.c.b16 %v3254, %v3253
        %v3274 = vpack.c.b16 %v3256, %v3255
        %v3275 = vpack.c.b16 %v3258, %v3257
        %v3276 = vpack.c.b16 %v3260, %v3259
        %v3277 = vunpack.c.l.b16 %v1446
        %v3278 = vunpack.c.l.b16 %v1456
        %v3279 = vunpack.c.l.b16 %v1470
        %v3280 = vunpack.c.l.b16 %v1480
        %v3281 = vunpack.c.l.b16 %v1494
        %v3282 = vunpack.c.l.b16 %v1504
        %v3283 = vunpack.c.l.b16 %v1518
        %v3284 = vunpack.c.l.b16 %v1528
        %v3285 = vunpack.c.l.b16 %v1542
        %v3286 = vunpack.c.l.b16 %v1552
        %v3287 = vunpack.c.l.b16 %v1566
        %v3288 = vunpack.c.l.b16 %v1576
        %v3289 = vunpack.c.l.b16 %v1590
        %v3290 = vunpack.c.l.b16 %v1600
        %v3291 = vunpack.c.l.b16 %v1614
        %v3292 = vunpack.c.l.b16 %v1624
        %v3293 = vunpack.c.l.b16 %v1638
        %v3294 = vunpack.c.l.b16 %v1648
        %v3295 = vunpack.c.l.b16 %v1662
        %v3296 = vunpack.c.l.b16 %v1672
        %v3297 = vunpack.c.l.b16 %v1686
        %v3298 = vunpack.c.l.b16 %v1696
        %v3299 = vunpack.c.l.b16 %v1710
        %v3300 = vunpack.c.l.b16 %v1720
        %v3301 = vunpack.c.l.b16 %v1734
        %v3302 = vunpack.c.l.b16 %v1744
        %v3303 = vunpack.c.l.b16 %v1758
        %v3304 = vunpack.c.l.b16 %v1768
        %v3305 = vunpack.c.l.b16 %v1782
        %v3306 = vunpack.c.l.b16 %v1792
        %v3307 = vunpack.c.l.b16 %v1806
        %v3308 = vunpack.c.l.b16 %v1816
        %v3309 = vpack.c.b16 %v3278, %v3277
        %v3310 = vpack.c.b16 %v3280, %v3279
        %v3311 = vpack.c.b16 %v3282, %v3281
        %v3312 = vpack.c.b16 %v3284, %v3283
        %v3313 = vpack.c.b16 %v3286, %v3285
        %v3314 = vpack.c.b16 %v3288, %v3287
        %v3315 = vpack.c.b16 %v3290, %v3289
        %v3316 = vpack.c.b16 %v3292, %v3291
        %v3317 = vpack.c.b16 %v3294, %v3293
        %v3318 = vpack.c.b16 %v3296, %v3295
        %v3319 = vpack.c.b16 %v3298, %v3297
        %v3320 = vpack.c.b16 %v3300, %v3299
        %v3321 = vpack.c.b16 %v3302, %v3301
        %v3322 = vpack.c.b16 %v3304, %v3303
        %v3323 = vpack.c.b16 %v3306, %v3305
        %v3324 = vpack.c.b16 %v3308, %v3307
        %3325 = vrot.lane.b32.xlu0 %v3309, 32
        %v3326 = vpop.permute.xlu0 %3325
        %3327 = vrot.lane.b32.xlu0 %v3310, 32
        %v3328 = vpop.permute.xlu0 %3327
        %3329 = vrot.lane.b32.xlu0 %v3311, 32
        %v3330 = vpop.permute.xlu0 %3329
        %3331 = vrot.lane.b32.xlu0 %v3312, 32
        %v3332 = vpop.permute.xlu0 %3331
        %3333 = vrot.lane.b32.xlu0 %v3313, 32
        %v3334 = vpop.permute.xlu0 %3333
        %3335 = vrot.lane.b32.xlu0 %v3314, 32
        %v3336 = vpop.permute.xlu0 %3335
        %3337 = vrot.lane.b32.xlu0 %v3315, 32
        %v3338 = vpop.permute.xlu0 %3337
        %3339 = vrot.lane.b32.xlu0 %v3316, 32
        %v3340 = vpop.permute.xlu0 %3339
        %3341 = vrot.lane.b32.xlu0 %v3317, 32
        %v3342 = vpop.permute.xlu0 %3341
        %3343 = vrot.lane.b32.xlu0 %v3318, 32
        %v3344 = vpop.permute.xlu0 %3343
        %3345 = vrot.lane.b32.xlu0 %v3319, 32
        %v3346 = vpop.permute.xlu0 %3345
        %3347 = vrot.lane.b32.xlu0 %v3320, 32
        %v3348 = vpop.permute.xlu0 %3347
        %3349 = vrot.lane.b32.xlu0 %v3321, 32
        %v3350 = vpop.permute.xlu0 %3349
        %3351 = vrot.lane.b32.xlu0 %v3322, 32
        %v3352 = vpop.permute.xlu0 %3351
        %3353 = vrot.lane.b32.xlu0 %v3323, 32
        %v3354 = vpop.permute.xlu0 %3353
        %3355 = vrot.lane.b32.xlu0 %v3324, 32
        %v3356 = vpop.permute.xlu0 %3355
        %v3357 = vunpack.c.l.b16 %v1887
        %v3358 = vunpack.c.l.b16 %v1890
        %v3359 = vunpack.c.l.b16 %v1894
        %v3360 = vunpack.c.l.b16 %v1897
        %v3361 = vunpack.c.l.b16 %v1901
        %v3362 = vunpack.c.l.b16 %v1904
        %v3363 = vunpack.c.l.b16 %v1908
        %v3364 = vunpack.c.l.b16 %v1911
        %v3365 = vunpack.c.l.b16 %v1915
        %v3366 = vunpack.c.l.b16 %v1918
        %v3367 = vunpack.c.l.b16 %v1922
        %v3368 = vunpack.c.l.b16 %v1925
        %v3369 = vunpack.c.l.b16 %v1929
        %v3370 = vunpack.c.l.b16 %v1932
        %v3371 = vunpack.c.l.b16 %v1936
        %v3372 = vunpack.c.l.b16 %v1939
        %v3373 = vunpack.c.l.b16 %v1943
        %v3374 = vunpack.c.l.b16 %v1946
        %v3375 = vunpack.c.l.b16 %v1950
        %v3376 = vunpack.c.l.b16 %v1953
        %v3377 = vunpack.c.l.b16 %v1957
        %v3378 = vunpack.c.l.b16 %v1960
        %v3379 = vunpack.c.l.b16 %v1964
        %v3380 = vunpack.c.l.b16 %v1967
        %v3381 = vunpack.c.l.b16 %v1971
        %v3382 = vunpack.c.l.b16 %v1974
        %v3383 = vunpack.c.l.b16 %v1978
        %v3384 = vunpack.c.l.b16 %v1981
        %v3385 = vunpack.c.l.b16 %v1985
        %v3386 = vunpack.c.l.b16 %v1988
        %v3387 = vunpack.c.l.b16 %v1992
        %v3388 = vunpack.c.l.b16 %v1995
        %v3389 = vpack.c.b16 %v3358, %v3357
        %v3390 = vpack.c.b16 %v3360, %v3359
        %v3391 = vpack.c.b16 %v3362, %v3361
        %v3392 = vpack.c.b16 %v3364, %v3363
        %v3393 = vpack.c.b16 %v3366, %v3365
        %v3394 = vpack.c.b16 %v3368, %v3367
        %v3395 = vpack.c.b16 %v3370, %v3369
        %v3396 = vpack.c.b16 %v3372, %v3371
        %v3397 = vpack.c.b16 %v3374, %v3373
        %v3398 = vpack.c.b16 %v3376, %v3375
        %v3399 = vpack.c.b16 %v3378, %v3377
        %v3400 = vpack.c.b16 %v3380, %v3379
        %v3401 = vpack.c.b16 %v3382, %v3381
        %v3402 = vpack.c.b16 %v3384, %v3383
        %v3403 = vpack.c.b16 %v3386, %v3385
        %v3404 = vpack.c.b16 %v3388, %v3387
        %3405 = vrot.lane.b32.xlu0 %v3389, 64
        %v3406 = vpop.permute.xlu0 %3405
        %3407 = vrot.lane.b32.xlu0 %v3390, 64
        %v3408 = vpop.permute.xlu0 %3407
        %3409 = vrot.lane.b32.xlu0 %v3391, 64
        %v3410 = vpop.permute.xlu0 %3409
        %3411 = vrot.lane.b32.xlu0 %v3392, 64
        %v3412 = vpop.permute.xlu0 %3411
        %3413 = vrot.lane.b32.xlu0 %v3393, 64
        %v3414 = vpop.permute.xlu0 %3413
        %3415 = vrot.lane.b32.xlu0 %v3394, 64
        %v3416 = vpop.permute.xlu0 %3415
        %3417 = vrot.lane.b32.xlu0 %v3395, 64
        %v3418 = vpop.permute.xlu0 %3417
        %3419 = vrot.lane.b32.xlu0 %v3396, 64
        %v3420 = vpop.permute.xlu0 %3419
        %3421 = vrot.lane.b32.xlu0 %v3397, 64
        %v3422 = vpop.permute.xlu0 %3421
        %3423 = vrot.lane.b32.xlu0 %v3398, 64
        %v3424 = vpop.permute.xlu0 %3423
        %3425 = vrot.lane.b32.xlu0 %v3399, 64
        %v3426 = vpop.permute.xlu0 %3425
        %3427 = vrot.lane.b32.xlu0 %v3400, 64
        %v3428 = vpop.permute.xlu0 %3427
        %3429 = vrot.lane.b32.xlu0 %v3401, 64
        %v3430 = vpop.permute.xlu0 %3429
        %3431 = vrot.lane.b32.xlu0 %v3402, 64
        %v3432 = vpop.permute.xlu0 %3431
        %3433 = vrot.lane.b32.xlu0 %v3403, 64
        %v3434 = vpop.permute.xlu0 %3433
        %3435 = vrot.lane.b32.xlu0 %v3404, 64
        %v3436 = vpop.permute.xlu0 %3435
        %v3453 = vunpack.c.l.b16 %v1996
        %v3454 = vunpack.c.l.b16 %v1997
        %v3455 = vunpack.c.l.b16 %v1998
        %v3456 = vunpack.c.l.b16 %v1999
        %v3457 = vunpack.c.l.b16 %v2000
        %v3458 = vunpack.c.l.b16 %v2001
        %v3459 = vunpack.c.l.b16 %v2002
        %v3460 = vunpack.c.l.b16 %v2003
        %v3461 = vunpack.c.l.b16 %v2004
        %v3462 = vunpack.c.l.b16 %v2005
        %v3463 = vunpack.c.l.b16 %v2006
        %v3464 = vunpack.c.l.b16 %v2007
        %v3465 = vunpack.c.l.b16 %v2008
        %v3466 = vunpack.c.l.b16 %v2009
        %v3467 = vunpack.c.l.b16 %v2010
        %v3468 = vunpack.c.l.b16 %v2011
        %v3469 = vunpack.c.l.b16 %v2012
        %v3470 = vunpack.c.l.b16 %v2013
        %v3471 = vunpack.c.l.b16 %v2014
        %v3472 = vunpack.c.l.b16 %v2015
        %v3473 = vunpack.c.l.b16 %v2016
        %v3474 = vunpack.c.l.b16 %v2017
        %v3475 = vunpack.c.l.b16 %v2018
        %v3476 = vunpack.c.l.b16 %v2019
        %v3477 = vunpack.c.l.b16 %v2020
        %v3478 = vunpack.c.l.b16 %v2021
        %v3479 = vunpack.c.l.b16 %v2022
        %v3480 = vunpack.c.l.b16 %v2023
        %v3481 = vunpack.c.l.b16 %v2024
        %v3482 = vunpack.c.l.b16 %v2025
        %v3483 = vunpack.c.l.b16 %v2026
        %v3484 = vunpack.c.l.b16 %v2027
        %v3485 = vpack.c.b16 %v3454, %v3453
        %v3486 = vpack.c.b16 %v3456, %v3455
        %v3487 = vpack.c.b16 %v3458, %v3457
        %v3488 = vpack.c.b16 %v3460, %v3459
        %v3489 = vpack.c.b16 %v3462, %v3461
        %v3490 = vpack.c.b16 %v3464, %v3463
        %v3491 = vpack.c.b16 %v3466, %v3465
        %v3492 = vpack.c.b16 %v3468, %v3467
        %v3493 = vpack.c.b16 %v3470, %v3469
        %v3494 = vpack.c.b16 %v3472, %v3471
        %v3495 = vpack.c.b16 %v3474, %v3473
        %v3496 = vpack.c.b16 %v3476, %v3475
        %v3497 = vpack.c.b16 %v3478, %v3477
        %v3498 = vpack.c.b16 %v3480, %v3479
        %v3499 = vpack.c.b16 %v3482, %v3481
        %v3500 = vpack.c.b16 %v3484, %v3483
        %3501 = vrot.lane.b32.xlu0 %v3485, 96
        %v3502 = vpop.permute.xlu0 %3501
        %3503 = vrot.lane.b32.xlu0 %v3486, 96
        %v3504 = vpop.permute.xlu0 %3503
        %3505 = vrot.lane.b32.xlu0 %v3487, 96
        %v3506 = vpop.permute.xlu0 %3505
        %3507 = vrot.lane.b32.xlu0 %v3488, 96
        %v3508 = vpop.permute.xlu0 %3507
        %3509 = vrot.lane.b32.xlu0 %v3489, 96
        %v3510 = vpop.permute.xlu0 %3509
        %3511 = vrot.lane.b32.xlu0 %v3490, 96
        %v3512 = vpop.permute.xlu0 %3511
        %3513 = vrot.lane.b32.xlu0 %v3491, 96
        %v3514 = vpop.permute.xlu0 %3513
        %3515 = vrot.lane.b32.xlu0 %v3492, 96
        %v3516 = vpop.permute.xlu0 %3515
        %3517 = vrot.lane.b32.xlu0 %v3493, 96
        %v3518 = vpop.permute.xlu0 %3517
        %3519 = vrot.lane.b32.xlu0 %v3494, 96
        %v3520 = vpop.permute.xlu0 %3519
        %3521 = vrot.lane.b32.xlu0 %v3495, 96
        %v3522 = vpop.permute.xlu0 %3521
        %3523 = vrot.lane.b32.xlu0 %v3496, 96
        %v3524 = vpop.permute.xlu0 %3523
        %3525 = vrot.lane.b32.xlu0 %v3497, 96
        %v3526 = vpop.permute.xlu0 %3525
        %3527 = vrot.lane.b32.xlu0 %v3498, 96
        %v3528 = vpop.permute.xlu0 %3527
        %3529 = vrot.lane.b32.xlu0 %v3499, 96
        %v3530 = vpop.permute.xlu0 %3529
        %3531 = vrot.lane.b32.xlu0 %v3500, 96
        %v3532 = vpop.permute.xlu0 %3531
        %v3533 = vunpack.c.l.b16 %v2057
        %v3534 = vunpack.c.l.b16 %v2067
        %v3535 = vunpack.c.l.b16 %v2081
        %v3536 = vunpack.c.l.b16 %v2091
        %v3537 = vunpack.c.l.b16 %v2105
        %v3538 = vunpack.c.l.b16 %v2115
        %v3539 = vunpack.c.l.b16 %v2129
        %v3540 = vunpack.c.l.b16 %v2139
        %v3541 = vunpack.c.l.b16 %v2153
        %v3542 = vunpack.c.l.b16 %v2163
        %v3543 = vunpack.c.l.b16 %v2177
        %v3544 = vunpack.c.l.b16 %v2187
        %v3545 = vunpack.c.l.b16 %v2201
        %v3546 = vunpack.c.l.b16 %v2211
        %v3547 = vunpack.c.l.b16 %v2225
        %v3548 = vunpack.c.l.b16 %v2235
        %v3549 = vunpack.c.l.b16 %v2249
        %v3550 = vunpack.c.l.b16 %v2259
        %v3551 = vunpack.c.l.b16 %v2273
        %v3552 = vunpack.c.l.b16 %v2283
        %v3553 = vunpack.c.l.b16 %v2297
        %v3554 = vunpack.c.l.b16 %v2307
        %v3555 = vunpack.c.l.b16 %v2321
        %v3556 = vunpack.c.l.b16 %v2331
        %v3557 = vunpack.c.l.b16 %v2345
        %v3558 = vunpack.c.l.b16 %v2355
        %v3559 = vunpack.c.l.b16 %v2369
        %v3560 = vunpack.c.l.b16 %v2379
        %v3561 = vunpack.c.l.b16 %v2393
        %v3562 = vunpack.c.l.b16 %v2403
        %v3563 = vunpack.c.l.b16 %v2417
        %v3564 = vunpack.c.l.b16 %v2427
        %v3565 = vpack.c.b16 %v3534, %v3533
        %v3566 = vpack.c.b16 %v3536, %v3535
        %v3567 = vpack.c.b16 %v3538, %v3537
        %v3568 = vpack.c.b16 %v3540, %v3539
        %v3569 = vpack.c.b16 %v3542, %v3541
        %v3570 = vpack.c.b16 %v3544, %v3543
        %v3571 = vpack.c.b16 %v3546, %v3545
        %v3572 = vpack.c.b16 %v3548, %v3547
        %v3573 = vpack.c.b16 %v3550, %v3549
        %v3574 = vpack.c.b16 %v3552, %v3551
        %v3575 = vpack.c.b16 %v3554, %v3553
        %v3576 = vpack.c.b16 %v3556, %v3555
        %v3577 = vpack.c.b16 %v3558, %v3557
        %v3578 = vpack.c.b16 %v3560, %v3559
        %v3579 = vpack.c.b16 %v3562, %v3561
        %v3580 = vpack.c.b16 %v3564, %v3563
        %v3581 = vunpack.c.l.b16 %v2495
        %v3582 = vunpack.c.l.b16 %v2498
        %v3583 = vunpack.c.l.b16 %v2502
        %v3584 = vunpack.c.l.b16 %v2505
        %v3585 = vunpack.c.l.b16 %v2509
        %v3586 = vunpack.c.l.b16 %v2512
        %v3587 = vunpack.c.l.b16 %v2516
        %v3588 = vunpack.c.l.b16 %v2519
        %v3589 = vunpack.c.l.b16 %v2523
        %v3590 = vunpack.c.l.b16 %v2526
        %v3591 = vunpack.c.l.b16 %v2530
        %v3592 = vunpack.c.l.b16 %v2533
        %v3593 = vunpack.c.l.b16 %v2537
        %v3594 = vunpack.c.l.b16 %v2540
        %v3595 = vunpack.c.l.b16 %v2544
        %v3596 = vunpack.c.l.b16 %v2547
        %v3597 = vunpack.c.l.b16 %v2551
        %v3598 = vunpack.c.l.b16 %v2554
        %v3599 = vunpack.c.l.b16 %v2558
        %v3600 = vunpack.c.l.b16 %v2561
        %v3601 = vunpack.c.l.b16 %v2565
        %v3602 = vunpack.c.l.b16 %v2568
        %v3603 = vunpack.c.l.b16 %v2572
        %v3604 = vunpack.c.l.b16 %v2575
        %v3605 = vunpack.c.l.b16 %v2579
        %v3606 = vunpack.c.l.b16 %v2582
        %v3607 = vunpack.c.l.b16 %v2586
        %v3608 = vunpack.c.l.b16 %v2589
        %v3609 = vunpack.c.l.b16 %v2593
        %v3610 = vunpack.c.l.b16 %v2596
        %v3611 = vunpack.c.l.b16 %v2600
        %v3612 = vunpack.c.l.b16 %v2603
        %v3613 = vpack.c.b16 %v3582, %v3581
        %v3614 = vpack.c.b16 %v3584, %v3583
        %v3615 = vpack.c.b16 %v3586, %v3585
        %v3616 = vpack.c.b16 %v3588, %v3587
        %v3617 = vpack.c.b16 %v3590, %v3589
        %v3618 = vpack.c.b16 %v3592, %v3591
        %v3619 = vpack.c.b16 %v3594, %v3593
        %v3620 = vpack.c.b16 %v3596, %v3595
        %v3621 = vpack.c.b16 %v3598, %v3597
        %v3622 = vpack.c.b16 %v3600, %v3599
        %v3623 = vpack.c.b16 %v3602, %v3601
        %v3624 = vpack.c.b16 %v3604, %v3603
        %v3625 = vpack.c.b16 %v3606, %v3605
        %v3626 = vpack.c.b16 %v3608, %v3607
        %v3627 = vpack.c.b16 %v3610, %v3609
        %v3628 = vpack.c.b16 %v3612, %v3611
        %3629 = vrot.lane.b32.xlu0 %v3613, 32
        %v3630 = vpop.permute.xlu0 %3629
        %3631 = vrot.lane.b32.xlu0 %v3614, 32
        %v3632 = vpop.permute.xlu0 %3631
        %3633 = vrot.lane.b32.xlu0 %v3615, 32
        %v3634 = vpop.permute.xlu0 %3633
        %3635 = vrot.lane.b32.xlu0 %v3616, 32
        %v3636 = vpop.permute.xlu0 %3635
        %3637 = vrot.lane.b32.xlu0 %v3617, 32
        %v3638 = vpop.permute.xlu0 %3637
        %3639 = vrot.lane.b32.xlu0 %v3618, 32
        %v3640 = vpop.permute.xlu0 %3639
        %3641 = vrot.lane.b32.xlu0 %v3619, 32
        %v3642 = vpop.permute.xlu0 %3641
        %3643 = vrot.lane.b32.xlu0 %v3620, 32
        %v3644 = vpop.permute.xlu0 %3643
        %3645 = vrot.lane.b32.xlu0 %v3621, 32
        %v3646 = vpop.permute.xlu0 %3645
        %3647 = vrot.lane.b32.xlu0 %v3622, 32
        %v3648 = vpop.permute.xlu0 %3647
        %3649 = vrot.lane.b32.xlu0 %v3623, 32
        %v3650 = vpop.permute.xlu0 %3649
        %3651 = vrot.lane.b32.xlu0 %v3624, 32
        %v3652 = vpop.permute.xlu0 %3651
        %3653 = vrot.lane.b32.xlu0 %v3625, 32
        %v3654 = vpop.permute.xlu0 %3653
        %3655 = vrot.lane.b32.xlu0 %v3626, 32
        %v3656 = vpop.permute.xlu0 %3655
        %3657 = vrot.lane.b32.xlu0 %v3627, 32
        %v3658 = vpop.permute.xlu0 %3657
        %3659 = vrot.lane.b32.xlu0 %v3628, 32
        %v3660 = vpop.permute.xlu0 %3659
        %v3677 = vunpack.c.l.b16 %v2605
        %v3678 = vunpack.c.l.b16 %v2606
        %v3679 = vunpack.c.l.b16 %v2607
        %v3680 = vunpack.c.l.b16 %v2608
        %v3681 = vunpack.c.l.b16 %v2609
        %v3682 = vunpack.c.l.b16 %v2610
        %v3683 = vunpack.c.l.b16 %v2611
        %v3684 = vunpack.c.l.b16 %v2612
        %v3685 = vunpack.c.l.b16 %v2613
        %v3686 = vunpack.c.l.b16 %v2614
        %v3687 = vunpack.c.l.b16 %v2615
        %v3688 = vunpack.c.l.b16 %v2616
        %v3689 = vunpack.c.l.b16 %v2617
        %v3690 = vunpack.c.l.b16 %v2618
        %v3691 = vunpack.c.l.b16 %v2619
        %v3692 = vunpack.c.l.b16 %v2620
        %v3693 = vunpack.c.l.b16 %v2621
        %v3694 = vunpack.c.l.b16 %v2622
        %v3695 = vunpack.c.l.b16 %v2623
        %v3696 = vunpack.c.l.b16 %v2624
        %v3697 = vunpack.c.l.b16 %v2625
        %v3698 = vunpack.c.l.b16 %v2626
        %v3699 = vunpack.c.l.b16 %v2627
        %v3700 = vunpack.c.l.b16 %v2628
        %v3701 = vunpack.c.l.b16 %v2629
        %v3702 = vunpack.c.l.b16 %v2630
        %v3703 = vunpack.c.l.b16 %v2631
        %v3704 = vunpack.c.l.b16 %v2632
        %v3705 = vunpack.c.l.b16 %v2633
        %v3706 = vunpack.c.l.b16 %v2634
        %v3707 = vunpack.c.l.b16 %v2635
        %v3708 = vunpack.c.l.b16 %v2636
        %v3709 = vpack.c.b16 %v3678, %v3677
        %v3710 = vpack.c.b16 %v3680, %v3679
        %v3711 = vpack.c.b16 %v3682, %v3681
        %v3712 = vpack.c.b16 %v3684, %v3683
        %v3713 = vpack.c.b16 %v3686, %v3685
        %v3714 = vpack.c.b16 %v3688, %v3687
        %v3715 = vpack.c.b16 %v3690, %v3689
        %v3716 = vpack.c.b16 %v3692, %v3691
        %v3717 = vpack.c.b16 %v3694, %v3693
        %v3718 = vpack.c.b16 %v3696, %v3695
        %v3719 = vpack.c.b16 %v3698, %v3697
        %v3720 = vpack.c.b16 %v3700, %v3699
        %v3721 = vpack.c.b16 %v3702, %v3701
        %v3722 = vpack.c.b16 %v3704, %v3703
        %v3723 = vpack.c.b16 %v3706, %v3705
        %v3724 = vpack.c.b16 %v3708, %v3707
        %3725 = vrot.lane.b32.xlu0 %v3709, 64
        %v3726 = vpop.permute.xlu0 %3725
        %3727 = vrot.lane.b32.xlu0 %v3710, 64
        %v3728 = vpop.permute.xlu0 %3727
        %3729 = vrot.lane.b32.xlu0 %v3711, 64
        %v3730 = vpop.permute.xlu0 %3729
        %3731 = vrot.lane.b32.xlu0 %v3712, 64
        %v3732 = vpop.permute.xlu0 %3731
        %3733 = vrot.lane.b32.xlu0 %v3713, 64
        %v3734 = vpop.permute.xlu0 %3733
        %3735 = vrot.lane.b32.xlu0 %v3714, 64
        %v3736 = vpop.permute.xlu0 %3735
        %3737 = vrot.lane.b32.xlu0 %v3715, 64
        %v3738 = vpop.permute.xlu0 %3737
        %3739 = vrot.lane.b32.xlu0 %v3716, 64
        %v3740 = vpop.permute.xlu0 %3739
        %3741 = vrot.lane.b32.xlu0 %v3717, 64
        %v3742 = vpop.permute.xlu0 %3741
        %3743 = vrot.lane.b32.xlu0 %v3718, 64
        %v3744 = vpop.permute.xlu0 %3743
        %3745 = vrot.lane.b32.xlu0 %v3719, 64
        %v3746 = vpop.permute.xlu0 %3745
        %3747 = vrot.lane.b32.xlu0 %v3720, 64
        %v3748 = vpop.permute.xlu0 %3747
        %3749 = vrot.lane.b32.xlu0 %v3721, 64
        %v3750 = vpop.permute.xlu0 %3749
        %3751 = vrot.lane.b32.xlu0 %v3722, 64
        %v3752 = vpop.permute.xlu0 %3751
        %3753 = vrot.lane.b32.xlu0 %v3723, 64
        %v3754 = vpop.permute.xlu0 %3753
        %3755 = vrot.lane.b32.xlu0 %v3724, 64
        %v3756 = vpop.permute.xlu0 %3755
        %v3757 = vunpack.c.l.b16 %v2666
        %v3758 = vunpack.c.l.b16 %v2676
        %v3759 = vunpack.c.l.b16 %v2690
        %v3760 = vunpack.c.l.b16 %v2700
        %v3761 = vunpack.c.l.b16 %v2714
        %v3762 = vunpack.c.l.b16 %v2724
        %v3763 = vunpack.c.l.b16 %v2738
        %v3764 = vunpack.c.l.b16 %v2748
        %v3765 = vunpack.c.l.b16 %v2762
        %v3766 = vunpack.c.l.b16 %v2772
        %v3767 = vunpack.c.l.b16 %v2786
        %v3768 = vunpack.c.l.b16 %v2796
        %v3769 = vunpack.c.l.b16 %v2810
        %v3770 = vunpack.c.l.b16 %v2820
        %v3771 = vunpack.c.l.b16 %v2834
        %v3772 = vunpack.c.l.b16 %v2844
        %v3773 = vunpack.c.l.b16 %v2858
        %v3774 = vunpack.c.l.b16 %v2868
        %v3775 = vunpack.c.l.b16 %v2882
        %v3776 = vunpack.c.l.b16 %v2892
        %v3777 = vunpack.c.l.b16 %v2906
        %v3778 = vunpack.c.l.b16 %v2916
        %v3779 = vunpack.c.l.b16 %v2930
        %v3780 = vunpack.c.l.b16 %v2940
        %v3781 = vunpack.c.l.b16 %v2954
        %v3782 = vunpack.c.l.b16 %v2964
        %v3783 = vunpack.c.l.b16 %v2978
        %v3784 = vunpack.c.l.b16 %v2988
        %v3785 = vunpack.c.l.b16 %v3002
        %v3786 = vunpack.c.l.b16 %v3012
        %v3787 = vunpack.c.l.b16 %v3026
        %v3788 = vunpack.c.l.b16 %v3036
        %v3789 = vpack.c.b16 %v3758, %v3757
        %v3790 = vpack.c.b16 %v3760, %v3759
        %v3791 = vpack.c.b16 %v3762, %v3761
        %v3792 = vpack.c.b16 %v3764, %v3763
        %v3793 = vpack.c.b16 %v3766, %v3765
        %v3794 = vpack.c.b16 %v3768, %v3767
        %v3795 = vpack.c.b16 %v3770, %v3769
        %v3796 = vpack.c.b16 %v3772, %v3771
        %v3797 = vpack.c.b16 %v3774, %v3773
        %v3798 = vpack.c.b16 %v3776, %v3775
        %v3799 = vpack.c.b16 %v3778, %v3777
        %v3800 = vpack.c.b16 %v3780, %v3779
        %v3801 = vpack.c.b16 %v3782, %v3781
        %v3802 = vpack.c.b16 %v3784, %v3783
        %v3803 = vpack.c.b16 %v3786, %v3785
        %v3804 = vpack.c.b16 %v3788, %v3787
        %3805 = vrot.lane.b32.xlu0 %v3789, 96
        %v3806 = vpop.permute.xlu0 %3805
        %3807 = vrot.lane.b32.xlu0 %v3790, 96
        %v3808 = vpop.permute.xlu0 %3807
        %3809 = vrot.lane.b32.xlu0 %v3791, 96
        %v3810 = vpop.permute.xlu0 %3809
        %3811 = vrot.lane.b32.xlu0 %v3792, 96
        %v3812 = vpop.permute.xlu0 %3811
        %3813 = vrot.lane.b32.xlu0 %v3793, 96
        %v3814 = vpop.permute.xlu0 %3813
        %3815 = vrot.lane.b32.xlu0 %v3794, 96
        %v3816 = vpop.permute.xlu0 %3815
        %3817 = vrot.lane.b32.xlu0 %v3795, 96
        %v3818 = vpop.permute.xlu0 %3817
        %3819 = vrot.lane.b32.xlu0 %v3796, 96
        %v3820 = vpop.permute.xlu0 %3819
        %3821 = vrot.lane.b32.xlu0 %v3797, 96
        %v3822 = vpop.permute.xlu0 %3821
        %3823 = vrot.lane.b32.xlu0 %v3798, 96
        %v3824 = vpop.permute.xlu0 %3823
        %3825 = vrot.lane.b32.xlu0 %v3799, 96
        %v3826 = vpop.permute.xlu0 %3825
        %3827 = vrot.lane.b32.xlu0 %v3800, 96
        %v3828 = vpop.permute.xlu0 %3827
        %3829 = vrot.lane.b32.xlu0 %v3801, 96
        %v3830 = vpop.permute.xlu0 %3829
        %3831 = vrot.lane.b32.xlu0 %v3802, 96
        %v3832 = vpop.permute.xlu0 %3831
        %3833 = vrot.lane.b32.xlu0 %v3803, 96
        %v3834 = vpop.permute.xlu0 %3833
        %3835 = vrot.lane.b32.xlu0 %v3804, 96
        %v3836 = vpop.permute.xlu0 %3835
        %v3837 = vunpack.c.l.b16 %v3104
        %v3838 = vunpack.c.l.b16 %v3107
        %v3839 = vunpack.c.l.b16 %v3111
        %v3840 = vunpack.c.l.b16 %v3114
        %v3841 = vunpack.c.l.b16 %v3118
        %v3842 = vunpack.c.l.b16 %v3121
        %v3843 = vunpack.c.l.b16 %v3125
        %v3844 = vunpack.c.l.b16 %v3128
        %v3845 = vunpack.c.l.b16 %v3132
        %v3846 = vunpack.c.l.b16 %v3135
        %v3847 = vunpack.c.l.b16 %v3139
        %v3848 = vunpack.c.l.b16 %v3142
        %v3849 = vunpack.c.l.b16 %v3146
        %v3850 = vunpack.c.l.b16 %v3149
        %v3851 = vunpack.c.l.b16 %v3153
        %v3852 = vunpack.c.l.b16 %v3156
        %v3853 = vunpack.c.l.b16 %v3160
        %v3854 = vunpack.c.l.b16 %v3163
        %v3855 = vunpack.c.l.b16 %v3167
        %v3856 = vunpack.c.l.b16 %v3170
        %v3857 = vunpack.c.l.b16 %v3174
        %v3858 = vunpack.c.l.b16 %v3177
        %v3859 = vunpack.c.l.b16 %v3181
        %v3860 = vunpack.c.l.b16 %v3184
        %v3861 = vunpack.c.l.b16 %v3188
        %v3862 = vunpack.c.l.b16 %v3191
        %v3863 = vunpack.c.l.b16 %v3195
        %v3864 = vunpack.c.l.b16 %v3198
        %v3865 = vunpack.c.l.b16 %v3202
        %v3866 = vunpack.c.l.b16 %v3205
        %v3867 = vunpack.c.l.b16 %v3209
        %v3868 = vunpack.c.l.b16 %v3212
        %v3869 = vpack.c.b16 %v3838, %v3837
        %v3870 = vpack.c.b16 %v3840, %v3839
        %v3871 = vpack.c.b16 %v3842, %v3841
        %v3872 = vpack.c.b16 %v3844, %v3843
        %v3873 = vpack.c.b16 %v3846, %v3845
        %v3874 = vpack.c.b16 %v3848, %v3847
        %v3875 = vpack.c.b16 %v3850, %v3849
        %v3876 = vpack.c.b16 %v3852, %v3851
        %v3877 = vpack.c.b16 %v3854, %v3853
        %v3878 = vpack.c.b16 %v3856, %v3855
        %v3879 = vpack.c.b16 %v3858, %v3857
        %v3880 = vpack.c.b16 %v3860, %v3859
        %v3881 = vpack.c.b16 %v3862, %v3861
        %v3882 = vpack.c.b16 %v3864, %v3863
        %v3883 = vpack.c.b16 %v3866, %v3865
        %v3884 = vpack.c.b16 %v3868, %v3867
        %vm3885 = vcmask 261120
        %v3888 = vsel %vm3885, %v3261, %v3326
        %v3891 = vsel %vm3885, %v3262, %v3328
        %v3894 = vsel %vm3885, %v3263, %v3330
        %v3897 = vsel %vm3885, %v3264, %v3332
        %v3900 = vsel %vm3885, %v3265, %v3334
        %v3903 = vsel %vm3885, %v3266, %v3336
        %v3906 = vsel %vm3885, %v3267, %v3338
        %v3909 = vsel %vm3885, %v3268, %v3340
        %v3912 = vsel %vm3885, %v3269, %v3342
        %v3915 = vsel %vm3885, %v3270, %v3344
        %v3918 = vsel %vm3885, %v3271, %v3346
        %v3921 = vsel %vm3885, %v3272, %v3348
        %v3924 = vsel %vm3885, %v3273, %v3350
        %v3927 = vsel %vm3885, %v3274, %v3352
        %v3930 = vsel %vm3885, %v3275, %v3354
        %v3933 = vsel %vm3885, %v3276, %v3356
        %vm3934 = vcmask 523264
        %v3936 = vsel %vm3934, %v3888, %v3406
        %v3938 = vsel %vm3934, %v3891, %v3408
        %v3940 = vsel %vm3934, %v3894, %v3410
        %v3942 = vsel %vm3934, %v3897, %v3412
        %v3944 = vsel %vm3934, %v3900, %v3414
        %v3946 = vsel %vm3934, %v3903, %v3416
        %v3948 = vsel %vm3934, %v3906, %v3418
        %v3950 = vsel %vm3934, %v3909, %v3420
        %v3952 = vsel %vm3934, %v3912, %v3422
        %v3954 = vsel %vm3934, %v3915, %v3424
        %v3956 = vsel %vm3934, %v3918, %v3426
        %v3958 = vsel %vm3934, %v3921, %v3428
        %v3960 = vsel %vm3934, %v3924, %v3430
        %v3962 = vsel %vm3934, %v3927, %v3432
        %v3964 = vsel %vm3934, %v3930, %v3434
        %v3966 = vsel %vm3934, %v3933, %v3436
        %vm3967 = vcmask 785408
        %v3969 = vsel %vm3967, %v3936, %v3502
        %v3972 = vsel %vm3967, %v3938, %v3504
        %v3975 = vsel %vm3967, %v3940, %v3506
        %v3978 = vsel %vm3967, %v3942, %v3508
        %v3981 = vsel %vm3967, %v3944, %v3510
        %v3984 = vsel %vm3967, %v3946, %v3512
        %v3987 = vsel %vm3967, %v3948, %v3514
        %v3990 = vsel %vm3967, %v3950, %v3516
        %v3993 = vsel %vm3967, %v3952, %v3518
        %v3996 = vsel %vm3967, %v3954, %v3520
        %v3999 = vsel %vm3967, %v3956, %v3522
        %v4002 = vsel %vm3967, %v3958, %v3524
        %v4005 = vsel %vm3967, %v3960, %v3526
        %v4008 = vsel %vm3967, %v3962, %v3528
        %v4011 = vsel %vm3967, %v3964, %v3530
        %v4014 = vsel %vm3967, %v3966, %v3532
        %v4018 = vsel %vm3885, %v3565, %v3630
        %v4021 = vsel %vm3885, %v3566, %v3632
        %v4024 = vsel %vm3885, %v3567, %v3634
        %v4027 = vsel %vm3885, %v3568, %v3636
        %v4030 = vsel %vm3885, %v3569, %v3638
        %v4033 = vsel %vm3885, %v3570, %v3640
        %v4036 = vsel %vm3885, %v3571, %v3642
        %v4039 = vsel %vm3885, %v3572, %v3644
        %v4042 = vsel %vm3885, %v3573, %v3646
        %v4045 = vsel %vm3885, %v3574, %v3648
        %v4048 = vsel %vm3885, %v3575, %v3650
        %v4051 = vsel %vm3885, %v3576, %v3652
        %v4054 = vsel %vm3885, %v3577, %v3654
        %v4057 = vsel %vm3885, %v3578, %v3656
        %v4060 = vsel %vm3885, %v3579, %v3658
        %v4063 = vsel %vm3885, %v3580, %v3660
        %v4065 = vsel %vm3934, %v4018, %v3726
        %v4067 = vsel %vm3934, %v4021, %v3728
        %v4069 = vsel %vm3934, %v4024, %v3730
        %v4071 = vsel %vm3934, %v4027, %v3732
        %v4073 = vsel %vm3934, %v4030, %v3734
        %v4075 = vsel %vm3934, %v4033, %v3736
        %v4077 = vsel %vm3934, %v4036, %v3738
        %v4079 = vsel %vm3934, %v4039, %v3740
        %v4081 = vsel %vm3934, %v4042, %v3742
        %v4083 = vsel %vm3934, %v4045, %v3744
        %v4085 = vsel %vm3934, %v4048, %v3746
        %v4087 = vsel %vm3934, %v4051, %v3748
        %v4089 = vsel %vm3934, %v4054, %v3750
        %v4091 = vsel %vm3934, %v4057, %v3752
        %v4093 = vsel %vm3934, %v4060, %v3754
        %v4095 = vsel %vm3934, %v4063, %v3756
        %v4097 = vsel %vm3967, %v4065, %v3806
        %v4100 = vsel %vm3967, %v4067, %v3808
        %v4103 = vsel %vm3967, %v4069, %v3810
        %v4106 = vsel %vm3967, %v4071, %v3812
        %v4109 = vsel %vm3967, %v4073, %v3814
        %v4112 = vsel %vm3967, %v4075, %v3816
        %v4115 = vsel %vm3967, %v4077, %v3818
        %v4118 = vsel %vm3967, %v4079, %v3820
        %v4121 = vsel %vm3967, %v4081, %v3822
        %v4124 = vsel %vm3967, %v4083, %v3824
        %v4127 = vsel %vm3967, %v4085, %v3826
        %v4130 = vsel %vm3967, %v4087, %v3828
        %v4133 = vsel %vm3967, %v4089, %v3830
        %v4136 = vsel %vm3967, %v4091, %v3832
        %v4139 = vsel %vm3967, %v4093, %v3834
        %v4142 = vsel %vm3967, %v4095, %v3836
        %v4144 = vld [vmem:[%s5] sm:$0xf]
        %v4145 = vld [vmem:[%s5 + $0x4] sm:$0xf]
        %v4146 = vld [vmem:[%s5 + $0x8] sm:$0xf]
        %v4147 = vld [vmem:[%s5 + $0xc] sm:$0xf]
        %v4148 = vld [vmem:[%s5 + $0x10] sm:$0xf]
        %v4149 = vld [vmem:[%s5 + $0x14] sm:$0xf]
        %v4150 = vld [vmem:[%s5 + $0x18] sm:$0xf]
        %v4151 = vld [vmem:[%s5 + $0x1c] sm:$0xf]
        %v4152 = vld [vmem:[%s5 + $0x20] sm:$0xf]
        %v4153 = vld [vmem:[%s5 + $0x24] sm:$0xf]
        %v4154 = vld [vmem:[%s5 + $0x28] sm:$0xf]
        %v4155 = vld [vmem:[%s5 + $0x2c] sm:$0xf]
        %v4156 = vld [vmem:[%s5 + $0x30] sm:$0xf]
        %v4157 = vld [vmem:[%s5 + $0x34] sm:$0xf]
        %v4158 = vld [vmem:[%s5 + $0x38] sm:$0xf]
        %v4159 = vld [vmem:[%s5 + $0x3c] sm:$0xf]
        %v4160 = vld [vmem:[%s5 + $0x40] sm:$0xf]
        %v4161 = vld [vmem:[%s5 + $0x44] sm:$0xf]
        %v4162 = vld [vmem:[%s5 + $0x48] sm:$0xf]
        %v4163 = vld [vmem:[%s5 + $0x4c] sm:$0xf]
        %v4164 = vld [vmem:[%s5 + $0x50] sm:$0xf]
        %v4165 = vld [vmem:[%s5 + $0x54] sm:$0xf]
        %v4166 = vld [vmem:[%s5 + $0x58] sm:$0xf]
        %v4167 = vld [vmem:[%s5 + $0x5c] sm:$0xf]
        %v4168 = vld [vmem:[%s5 + $0x60] sm:$0xf]
        %v4169 = vld [vmem:[%s5 + $0x64] sm:$0xf]
        %v4170 = vld [vmem:[%s5 + $0x68] sm:$0xf]
        %v4171 = vld [vmem:[%s5 + $0x6c] sm:$0xf]
        %v4172 = vld [vmem:[%s5 + $0x70] sm:$0xf]
        %v4173 = vld [vmem:[%s5 + $0x74] sm:$0xf]
        %v4174 = vld [vmem:[%s5 + $0x78] sm:$0xf]
        %v4175 = vld [vmem:[%s5 + $0x7c] sm:$0xf]
        %v4176 = vld [vmem:[%s5 + $0x80] sm:$0xf]
        %v4177 = vld [vmem:[%s5 + $0x84] sm:$0xf]
        %v4178 = vld [vmem:[%s5 + $0x88] sm:$0xf]
        %v4179 = vld [vmem:[%s5 + $0x8c] sm:$0xf]
        %v4180 = vld [vmem:[%s6] sm:$0x1]
        %v4182 = vlaneseq
        %v4183 = vshrl.u32 %v4182, 7
        %v4184 = vsub.s32 0, %v4183
        %v4185 = vrot.slane %v4180, %v4184
        %v4223 = vunpack.c.l.b16 %v4144
        %v4224 = vunpack.c.l.b16 %v4145
        %v4225 = vunpack.c.l.b16 %v4146
        %v4226 = vunpack.c.l.b16 %v4147
        %v4227 = vunpack.c.l.b16 %v4148
        %v4228 = vunpack.c.l.b16 %v4149
        %v4229 = vunpack.c.l.b16 %v4150
        %v4230 = vunpack.c.l.b16 %v4151
        %v4231 = vunpack.c.l.b16 %v4152
        %v4232 = vunpack.c.l.b16 %v4153
        %v4233 = vunpack.c.l.b16 %v4154
        %v4234 = vunpack.c.l.b16 %v4155
        %v4235 = vunpack.c.l.b16 %v4156
        %v4236 = vunpack.c.l.b16 %v4157
        %v4237 = vunpack.c.l.b16 %v4158
        %v4238 = vunpack.c.l.b16 %v4159
        %v4239 = vunpack.c.l.b16 %v4160
        %v4240 = vunpack.c.l.b16 %v4161
        %v4241 = vunpack.c.l.b16 %v4162
        %v4242 = vunpack.c.l.b16 %v4163
        %v4243 = vunpack.c.l.b16 %v4164
        %v4244 = vunpack.c.l.b16 %v4165
        %v4245 = vunpack.c.l.b16 %v4166
        %v4246 = vunpack.c.l.b16 %v4167
        %v4247 = vunpack.c.l.b16 %v4168
        %v4248 = vunpack.c.l.b16 %v4169
        %v4249 = vunpack.c.l.b16 %v4170
        %v4250 = vunpack.c.l.b16 %v4171
        %v4251 = vunpack.c.l.b16 %v4172
        %v4252 = vunpack.c.l.b16 %v4173
        %v4253 = vunpack.c.l.b16 %v4174
        %v4254 = vunpack.c.l.b16 %v4175
        %v4255 = vunpack.c.l.b16 %v4176
        %v4256 = vunpack.c.l.b16 %v4177
        %v4257 = vunpack.c.l.b16 %v4178
        %v4258 = vunpack.c.l.b16 %v4179
        %v4259 = vpack.c.b16 %v4224, %v4223
        %v4260 = vpack.c.b16 %v4226, %v4225
        %v4261 = vpack.c.b16 %v4228, %v4227
        %v4262 = vpack.c.b16 %v4230, %v4229
        %v4263 = vpack.c.b16 %v4232, %v4231
        %v4264 = vpack.c.b16 %v4234, %v4233
        %v4265 = vpack.c.b16 %v4236, %v4235
        %v4266 = vpack.c.b16 %v4238, %v4237
        %v4267 = vpack.c.b16 %v4240, %v4239
        %v4268 = vpack.c.b16 %v4242, %v4241
        %v4269 = vpack.c.b16 %v4244, %v4243
        %v4270 = vpack.c.b16 %v4246, %v4245
        %v4271 = vpack.c.b16 %v4248, %v4247
        %v4272 = vpack.c.b16 %v4250, %v4249
        %v4273 = vpack.c.b16 %v4252, %v4251
        %v4274 = vpack.c.b16 %v4254, %v4253
        %v4275 = vpack.c.b16 %v4256, %v4255
        %v4276 = vpack.c.b16 %v4258, %v4257
        %v4296 = vsel %vm3885, %v3869, 0
        %v4299 = vsel %vm3885, %v3870, 0
        %v4302 = vsel %vm3885, %v3871, 0
        %v4305 = vsel %vm3885, %v3872, 0
        %v4308 = vsel %vm3885, %v3873, 0
        %v4311 = vsel %vm3885, %v3874, 0
        %v4314 = vsel %vm3885, %v3875, 0
        %v4317 = vsel %vm3885, %v3876, 0
        %v4320 = vsel %vm3885, %v3877, 0
        %v4323 = vsel %vm3885, %v3878, 0
        %v4326 = vsel %vm3885, %v3879, 0
        %v4329 = vsel %vm3885, %v3880, 0
        %v4332 = vsel %vm3885, %v3881, 0
        %v4335 = vsel %vm3885, %v3882, 0
        %v4338 = vsel %vm3885, %v3883, 0
        %v4341 = vsel %vm3885, %v3884, 0
        %4343 = vmatprep.subr.bf16.mxu0 0
        %4344 = vmatpush1.bf16.msra.mxu0 %v4259
        %4345 = vmatprep.subr.bf16.mxu0 0
        %4346 = vmatpush1.bf16.msra.mxu0 %v4260
        %4347 = vmatprep.subr.bf16.mxu0 0
        %4348 = vmatpush1.bf16.msra.mxu0 %v4261
        %4349 = vmatprep.subr.bf16.mxu0 0
        %4350 = vmatpush1.bf16.msra.mxu0 %v4262
        %4351 = vmatprep.subr.bf16.mxu0 0
        %4352 = vmatpush1.bf16.msra.mxu0 %v4263
        %4353 = vmatprep.subr.bf16.mxu0 0
        %4354 = vmatpush1.bf16.msra.mxu0 %v4264
        %4355 = vmatprep.subr.bf16.mxu0 0
        %4356 = vmatpush1.bf16.msra.mxu0 %v4265
        %4357 = vmatprep.subr.bf16.mxu0 0
        %4358 = vmatpush1.bf16.msra.mxu0 %v4266
        %4359 = vmatprep.subr.bf16.mxu0 0
        %4360 = vmatpush1.bf16.msra.mxu0 %v4267
        %4361 = vmatprep.subr.bf16.mxu0 0
        %4362 = vmatpush1.bf16.msra.mxu0 %v4268
        %4363 = vmatprep.subr.bf16.mxu0 0
        %4364 = vmatpush1.bf16.msra.mxu0 %v4269
        %4365 = vmatprep.subr.bf16.mxu0 0
        %4366 = vmatpush1.bf16.msra.mxu0 %v4270
        %4367 = vmatprep.subr.bf16.mxu0 0
        %4368 = vmatpush1.bf16.msra.mxu0 %v4271
        %4369 = vmatprep.subr.bf16.mxu0 0
        %4370 = vmatpush1.bf16.msra.mxu0 %v4272
        %4371 = vmatprep.subr.bf16.mxu0 0
        %4372 = vmatpush1.bf16.msra.mxu0 %v4273
        %4373 = vmatprep.subr.bf16.mxu0 0
        %4374 = vmatpush1.bf16.msra.mxu0 %v4274
        %4375 = vmatprep.mubr.bf16.mxu0 %v4097
        %4376 = vmatmul.mubr.bf16.gmra.mrb[0].mxu0 %v3969
        %v4377 = vpop.f32.mrb[0].mxu0
        %v4378 = vadd.f32 %v4185, %v4377
        %v4379 = vpop.f32.mrb[0].mxu0
        %v4380 = vpop.f32.mrb[0].mxu0
        %v4381 = vadd.f32 %v4185, %v4380
        %v4382 = vpop.f32.mrb[0].mxu0
        %4383 = vmatprep.mubr.bf16.mxu0 %v4100
        %4384 = vmatmul.mubr.bf16.gmra.mrb[0].mxu0 %v3972
        %v4385 = vpop.f32.mrb[0].mxu0
        %v4386 = vadd.f32 %v4185, %v4385
        %v4387 = vpop.f32.mrb[0].mxu0
        %v4388 = vpop.f32.mrb[0].mxu0
        %v4389 = vadd.f32 %v4185, %v4388
        %v4390 = vpop.f32.mrb[0].mxu0
        %4391 = vmatprep.mubr.bf16.mxu0 %v4103
        %4392 = vmatmul.mubr.bf16.gmra.mrb[0].mxu0 %v3975
        %v4393 = vpop.f32.mrb[0].mxu0
        %v4394 = vadd.f32 %v4185, %v4393
        %v4395 = vpop.f32.mrb[0].mxu0
        %v4396 = vpop.f32.mrb[0].mxu0
        %v4397 = vadd.f32 %v4185, %v4396
        %v4398 = vpop.f32.mrb[0].mxu0
        %4399 = vmatprep.mubr.bf16.mxu0 %v4106
        %4400 = vmatmul.mubr.bf16.gmra.mrb[0].mxu0 %v3978
        %v4401 = vpop.f32.mrb[0].mxu0
        %v4402 = vadd.f32 %v4185, %v4401
        %v4403 = vpop.f32.mrb[0].mxu0
        %v4404 = vpop.f32.mrb[0].mxu0
        %v4405 = vadd.f32 %v4185, %v4404
        %v4406 = vpop.f32.mrb[0].mxu0
        %4407 = vmatprep.mubr.bf16.mxu0 %v4109
        %4408 = vmatmul.mubr.bf16.gmra.mrb[0].mxu0 %v3981
        %v4409 = vpop.f32.mrb[0].mxu0
        %v4410 = vadd.f32 %v4185, %v4409
        %v4411 = vpop.f32.mrb[0].mxu0
        %v4412 = vpop.f32.mrb[0].mxu0
        %v4413 = vadd.f32 %v4185, %v4412
        %v4414 = vpop.f32.mrb[0].mxu0
        %4415 = vmatprep.mubr.bf16.mxu0 %v4112
        %4416 = vmatmul.mubr.bf16.gmra.mrb[0].mxu0 %v3984
        %v4417 = vpop.f32.mrb[0].mxu0
        %v4418 = vadd.f32 %v4185, %v4417
        %v4419 = vpop.f32.mrb[0].mxu0
        %v4420 = vpop.f32.mrb[0].mxu0
        %v4421 = vadd.f32 %v4185, %v4420
        %v4422 = vpop.f32.mrb[0].mxu0
        %4423 = vmatprep.mubr.bf16.mxu0 %v4115
        %4424 = vmatmul.mubr.bf16.gmra.mrb[0].mxu0 %v3987
        %v4425 = vpop.f32.mrb[0].mxu0
        %v4426 = vadd.f32 %v4185, %v4425
        %v4427 = vpop.f32.mrb[0].mxu0
        %v4428 = vpop.f32.mrb[0].mxu0
        %v4429 = vadd.f32 %v4185, %v4428
        %v4430 = vpop.f32.mrb[0].mxu0
        %4431 = vmatprep.mubr.bf16.mxu0 %v4118
        %4432 = vmatmul.mubr.bf16.gmra.mrb[0].mxu0 %v3990
        %v4433 = vpop.f32.mrb[0].mxu0
        %v4434 = vadd.f32 %v4185, %v4433
        %v4435 = vpop.f32.mrb[0].mxu0
        %v4436 = vpop.f32.mrb[0].mxu0
        %v4437 = vadd.f32 %v4185, %v4436
        %v4438 = vpop.f32.mrb[0].mxu0
        %4439 = vmatprep.mubr.bf16.mxu0 %v4121
        %4440 = vmatmul.mubr.bf16.gmra.mrb[0].mxu0 %v3993
        %v4441 = vpop.f32.mrb[0].mxu0
        %v4442 = vadd.f32 %v4185, %v4441
        %v4443 = vpop.f32.mrb[0].mxu0
        %v4444 = vpop.f32.mrb[0].mxu0
        %v4445 = vadd.f32 %v4185, %v4444
        %v4446 = vpop.f32.mrb[0].mxu0
        %4447 = vmatprep.mubr.bf16.mxu0 %v4124
        %4448 = vmatmul.mubr.bf16.gmra.mrb[0].mxu0 %v3996
        %v4449 = vpop.f32.mrb[0].mxu0
        %v4450 = vadd.f32 %v4185, %v4449
        %v4451 = vpop.f32.mrb[0].mxu0
        %v4452 = vpop.f32.mrb[0].mxu0
        %v4453 = vadd.f32 %v4185, %v4452
        %v4454 = vpop.f32.mrb[0].mxu0
        %4455 = vmatprep.mubr.bf16.mxu0 %v4127
        %4456 = vmatmul.mubr.bf16.gmra.mrb[0].mxu0 %v3999
        %v4457 = vpop.f32.mrb[0].mxu0
        %v4458 = vadd.f32 %v4185, %v4457
        %v4459 = vpop.f32.mrb[0].mxu0
        %v4460 = vpop.f32.mrb[0].mxu0
        %v4461 = vadd.f32 %v4185, %v4460
        %v4462 = vpop.f32.mrb[0].mxu0
        %4463 = vmatprep.mubr.bf16.mxu0 %v4130
        %4464 = vmatmul.mubr.bf16.gmra.mrb[0].mxu0 %v4002
        %v4465 = vpop.f32.mrb[0].mxu0
        %v4466 = vadd.f32 %v4185, %v4465
        %v4467 = vpop.f32.mrb[0].mxu0
        %v4468 = vpop.f32.mrb[0].mxu0
        %v4469 = vadd.f32 %v4185, %v4468
        %v4470 = vpop.f32.mrb[0].mxu0
        %4471 = vmatprep.mubr.bf16.mxu0 %v4133
        %4472 = vmatmul.mubr.bf16.gmra.mrb[0].mxu0 %v4005
        %v4473 = vpop.f32.mrb[0].mxu0
        %v4474 = vadd.f32 %v4185, %v4473
        %v4475 = vpop.f32.mrb[0].mxu0
        %v4476 = vpop.f32.mrb[0].mxu0
        %v4477 = vadd.f32 %v4185, %v4476
        %v4478 = vpop.f32.mrb[0].mxu0
        %4479 = vmatprep.mubr.bf16.mxu0 %v4136
        %4480 = vmatmul.mubr.bf16.gmra.mrb[0].mxu0 %v4008
        %v4481 = vpop.f32.mrb[0].mxu0
        %v4482 = vadd.f32 %v4185, %v4481
        %v4483 = vpop.f32.mrb[0].mxu0
        %v4484 = vpop.f32.mrb[0].mxu0
        %v4485 = vadd.f32 %v4185, %v4484
        %v4486 = vpop.f32.mrb[0].mxu0
        %4487 = vmatprep.mubr.bf16.mxu0 %v4139
        %4488 = vmatmul.mubr.bf16.gmra.mrb[0].mxu0 %v4011
        %v4489 = vpop.f32.mrb[0].mxu0
        %v4490 = vadd.f32 %v4185, %v4489
        %v4491 = vpop.f32.mrb[0].mxu0
        %v4492 = vpop.f32.mrb[0].mxu0
        %v4493 = vadd.f32 %v4185, %v4492
        %v4494 = vpop.f32.mrb[0].mxu0
        %4495 = vmatprep.mubr.bf16.mxu0 %v4142
        %4496 = vmatmul.mubr.bf16.gmra.mrb[0].mxu0 %v4014
        %v4497 = vpop.f32.mrb[0].mxu0
        %v4498 = vadd.f32 %v4185, %v4497
        %v4499 = vpop.f32.mrb[0].mxu0
        %v4500 = vpop.f32.mrb[0].mxu0
        %v4501 = vadd.f32 %v4185, %v4500
        %v4502 = vpop.f32.mrb[0].mxu0
        %4503 = vdwg.mxu0
        %4504 = vmatprep.subr.bf16.mxu0 0
        %4505 = vmatpush1.bf16.msra.mxu0 %v4275
        %4506 = vmatprep.subr.bf16.mxu0 0
        %4507 = vmatpush1.bf16.msra.mxu0 %v4276
        %4508 = vmatprep.subr.bf16.mxu0 0
        %4509 = vmatpush1.bf16.msra.mxu0 0
        %4510 = vmatprep.subr.bf16.mxu0 0
        %4511 = vmatpush1.bf16.msra.mxu0 0
        %4512 = vmatprep.subr.bf16.mxu0 0
        %4513 = vmatpush1.bf16.msra.mxu0 0
        %4514 = vmatprep.subr.bf16.mxu0 0
        %4515 = vmatpush1.bf16.msra.mxu0 0
        %4516 = vmatprep.subr.bf16.mxu0 0
        %4517 = vmatpush1.bf16.msra.mxu0 0
        %4518 = vmatprep.subr.bf16.mxu0 0
        %4519 = vmatpush1.bf16.msra.mxu0 0
        %4520 = vmatprep.subr.bf16.mxu0 0
        %4521 = vmatpush1.bf16.msra.mxu0 0
        %4522 = vmatprep.subr.bf16.mxu0 0
        %4523 = vmatpush1.bf16.msra.mxu0 0
        %4524 = vmatprep.subr.bf16.mxu0 0
        %4525 = vmatpush1.bf16.msra.mxu0 0
        %4526 = vmatprep.subr.bf16.mxu0 0
        %4527 = vmatpush1.bf16.msra.mxu0 0
        %4528 = vmatprep.subr.bf16.mxu0 0
        %4529 = vmatpush1.bf16.msra.mxu0 0
        %4530 = vmatprep.subr.bf16.mxu0 0
        %4531 = vmatpush1.bf16.msra.mxu0 0
        %4532 = vmatprep.subr.bf16.mxu0 0
        %4533 = vmatpush1.bf16.msra.mxu0 0
        %4534 = vmatprep.subr.bf16.mxu0 0
        %4535 = vmatpush1.bf16.msra.mxu0 0
        %4536 = vmatprep.mubr.bf16.mxu0 0
        %4537 = vmatmul.mubr.bf16.gmra.mrb[0].mxu0 %v4296
        %v4538 = vpop.f32.mrb[0].mxu0
        %v4539 = vadd.f32 %v4378, %v4538
        %v4540 = vpop.f32.mrb[0].mxu0
        %v4541 = vpop.f32.mrb[0].mxu0
        %v4542 = vadd.f32 %v4381, %v4541
        %v4543 = vpop.f32.mrb[0].mxu0
        %4544 = vmatprep.mubr.bf16.mxu0 0
        %4545 = vmatmul.mubr.bf16.gmra.mrb[0].mxu0 %v4299
        %v4546 = vpop.f32.mrb[0].mxu0
        %v4547 = vadd.f32 %v4386, %v4546
        %v4548 = vpop.f32.mrb[0].mxu0
        %v4549 = vpop.f32.mrb[0].mxu0
        %v4550 = vadd.f32 %v4389, %v4549
        %v4551 = vpop.f32.mrb[0].mxu0
        %4552 = vmatprep.mubr.bf16.mxu0 0
        %4553 = vmatmul.mubr.bf16.gmra.mrb[0].mxu0 %v4302
        %v4554 = vpop.f32.mrb[0].mxu0
        %v4555 = vadd.f32 %v4394, %v4554
        %v4556 = vpop.f32.mrb[0].mxu0
        %v4557 = vpop.f32.mrb[0].mxu0
        %v4558 = vadd.f32 %v4397, %v4557
        %v4559 = vpop.f32.mrb[0].mxu0
        %4560 = vmatprep.mubr.bf16.mxu0 0
        %4561 = vmatmul.mubr.bf16.gmra.mrb[0].mxu0 %v4305
        %v4562 = vpop.f32.mrb[0].mxu0
        %v4563 = vadd.f32 %v4402, %v4562
        %v4564 = vpop.f32.mrb[0].mxu0
        %v4565 = vpop.f32.mrb[0].mxu0
        %v4566 = vadd.f32 %v4405, %v4565
        %v4567 = vpop.f32.mrb[0].mxu0
        %4568 = vmatprep.mubr.bf16.mxu0 0
        %4569 = vmatmul.mubr.bf16.gmra.mrb[0].mxu0 %v4308
        %v4570 = vpop.f32.mrb[0].mxu0
        %v4571 = vadd.f32 %v4410, %v4570
        %v4572 = vpop.f32.mrb[0].mxu0
        %v4573 = vpop.f32.mrb[0].mxu0
        %v4574 = vadd.f32 %v4413, %v4573
        %v4575 = vpop.f32.mrb[0].mxu0
        %4576 = vmatprep.mubr.bf16.mxu0 0
        %4577 = vmatmul.mubr.bf16.gmra.mrb[0].mxu0 %v4311
        %v4578 = vpop.f32.mrb[0].mxu0
        %v4579 = vadd.f32 %v4418, %v4578
        %v4580 = vpop.f32.mrb[0].mxu0
        %v4581 = vpop.f32.mrb[0].mxu0
        %v4582 = vadd.f32 %v4421, %v4581
        %v4583 = vpop.f32.mrb[0].mxu0
        %4584 = vmatprep.mubr.bf16.mxu0 0
        %4585 = vmatmul.mubr.bf16.gmra.mrb[0].mxu0 %v4314
        %v4586 = vpop.f32.mrb[0].mxu0
        %v4587 = vadd.f32 %v4426, %v4586
        %v4588 = vpop.f32.mrb[0].mxu0
        %v4589 = vpop.f32.mrb[0].mxu0
        %v4590 = vadd.f32 %v4429, %v4589
        %v4591 = vpop.f32.mrb[0].mxu0
        %4592 = vmatprep.mubr.bf16.mxu0 0
        %4593 = vmatmul.mubr.bf16.gmra.mrb[0].mxu0 %v4317
        %v4594 = vpop.f32.mrb[0].mxu0
        %v4595 = vadd.f32 %v4434, %v4594
        %v4596 = vpop.f32.mrb[0].mxu0
        %v4597 = vpop.f32.mrb[0].mxu0
        %v4598 = vadd.f32 %v4437, %v4597
        %v4599 = vpop.f32.mrb[0].mxu0
        %4600 = vmatprep.mubr.bf16.mxu0 0
        %4601 = vmatmul.mubr.bf16.gmra.mrb[0].mxu0 %v4320
        %v4602 = vpop.f32.mrb[0].mxu0
        %v4603 = vadd.f32 %v4442, %v4602
        %v4604 = vpop.f32.mrb[0].mxu0
        %v4605 = vpop.f32.mrb[0].mxu0
        %v4606 = vadd.f32 %v4445, %v4605
        %v4607 = vpop.f32.mrb[0].mxu0
        %4608 = vmatprep.mubr.bf16.mxu0 0
        %4609 = vmatmul.mubr.bf16.gmra.mrb[0].mxu0 %v4323
        %v4610 = vpop.f32.mrb[0].mxu0
        %v4611 = vadd.f32 %v4450, %v4610
        %v4612 = vpop.f32.mrb[0].mxu0
        %v4613 = vpop.f32.mrb[0].mxu0
        %v4614 = vadd.f32 %v4453, %v4613
        %v4615 = vpop.f32.mrb[0].mxu0
        %4616 = vmatprep.mubr.bf16.mxu0 0
        %4617 = vmatmul.mubr.bf16.gmra.mrb[0].mxu0 %v4326
        %v4618 = vpop.f32.mrb[0].mxu0
        %v4619 = vadd.f32 %v4458, %v4618
        %v4620 = vpop.f32.mrb[0].mxu0
        %v4621 = vpop.f32.mrb[0].mxu0
        %v4622 = vadd.f32 %v4461, %v4621
        %v4623 = vpop.f32.mrb[0].mxu0
        %4624 = vmatprep.mubr.bf16.mxu0 0
        %4625 = vmatmul.mubr.bf16.gmra.mrb[0].mxu0 %v4329
        %v4626 = vpop.f32.mrb[0].mxu0
        %v4627 = vadd.f32 %v4466, %v4626
        %v4628 = vpop.f32.mrb[0].mxu0
        %v4629 = vpop.f32.mrb[0].mxu0
        %v4630 = vadd.f32 %v4469, %v4629
        %v4631 = vpop.f32.mrb[0].mxu0
        %4632 = vmatprep.mubr.bf16.mxu0 0
        %4633 = vmatmul.mubr.bf16.gmra.mrb[0].mxu0 %v4332
        %v4634 = vpop.f32.mrb[0].mxu0
        %v4635 = vadd.f32 %v4474, %v4634
        %v4636 = vpop.f32.mrb[0].mxu0
        %v4637 = vpop.f32.mrb[0].mxu0
        %v4638 = vadd.f32 %v4477, %v4637
        %v4639 = vpop.f32.mrb[0].mxu0
        %4640 = vmatprep.mubr.bf16.mxu0 0
        %4641 = vmatmul.mubr.bf16.gmra.mrb[0].mxu0 %v4335
        %v4642 = vpop.f32.mrb[0].mxu0
        %v4643 = vadd.f32 %v4482, %v4642
        %v4644 = vpop.f32.mrb[0].mxu0
        %v4645 = vpop.f32.mrb[0].mxu0
        %v4646 = vadd.f32 %v4485, %v4645
        %v4647 = vpop.f32.mrb[0].mxu0
        %4648 = vmatprep.mubr.bf16.mxu0 0
        %4649 = vmatmul.mubr.bf16.gmra.mrb[0].mxu0 %v4338
        %v4650 = vpop.f32.mrb[0].mxu0
        %v4651 = vadd.f32 %v4490, %v4650
        %v4652 = vpop.f32.mrb[0].mxu0
        %v4653 = vpop.f32.mrb[0].mxu0
        %v4654 = vadd.f32 %v4493, %v4653
        %v4655 = vpop.f32.mrb[0].mxu0
        %4656 = vmatprep.mubr.bf16.mxu0 0
        %4657 = vmatmul.mubr.bf16.gmra.mrb[0].mxu0 %v4341
        %v4658 = vpop.f32.mrb[0].mxu0
        %v4659 = vadd.f32 %v4498, %v4658
        %v4660 = vpop.f32.mrb[0].mxu0
        %v4661 = vpop.f32.mrb[0].mxu0
        %v4662 = vadd.f32 %v4501, %v4661
        %v4663 = vpop.f32.mrb[0].mxu0
        %4664 = vdwg.mxu0
        %v4665 = vmax.f32 %v4539, 0.0
        %v4666 = vmax.f32 %v4542, 0.0
        %v4667 = vmax.f32 %v4547, 0.0
        %v4668 = vmax.f32 %v4550, 0.0
        %v4669 = vmax.f32 %v4555, 0.0
        %v4670 = vmax.f32 %v4558, 0.0
        %v4671 = vmax.f32 %v4563, 0.0
        %v4672 = vmax.f32 %v4566, 0.0
        %v4673 = vmax.f32 %v4571, 0.0
        %v4674 = vmax.f32 %v4574, 0.0
        %v4675 = vmax.f32 %v4579, 0.0
        %v4676 = vmax.f32 %v4582, 0.0
        %v4677 = vmax.f32 %v4587, 0.0
        %v4678 = vmax.f32 %v4590, 0.0
        %v4679 = vmax.f32 %v4595, 0.0
        %v4680 = vmax.f32 %v4598, 0.0
        %v4681 = vmax.f32 %v4603, 0.0
        %v4682 = vmax.f32 %v4606, 0.0
        %v4683 = vmax.f32 %v4611, 0.0
        %v4684 = vmax.f32 %v4614, 0.0
        %v4685 = vmax.f32 %v4619, 0.0
        %v4686 = vmax.f32 %v4622, 0.0
        %v4687 = vmax.f32 %v4627, 0.0
        %v4688 = vmax.f32 %v4630, 0.0
        %v4689 = vmax.f32 %v4635, 0.0
        %v4690 = vmax.f32 %v4638, 0.0
        %v4691 = vmax.f32 %v4643, 0.0
        %v4692 = vmax.f32 %v4646, 0.0
        %v4693 = vmax.f32 %v4651, 0.0
        %v4694 = vmax.f32 %v4654, 0.0
        %v4695 = vmax.f32 %v4659, 0.0
        %v4696 = vmax.f32 %v4662, 0.0
        %v4697 = vpack.c.bf16 %v4666, %v4665
        %v4698 = vpack.c.bf16 %v4668, %v4667
        %v4699 = vpack.c.bf16 %v4670, %v4669
        %v4700 = vpack.c.bf16 %v4672, %v4671
        %v4701 = vpack.c.bf16 %v4674, %v4673
        %v4702 = vpack.c.bf16 %v4676, %v4675
        %v4703 = vpack.c.bf16 %v4678, %v4677
        %v4704 = vpack.c.bf16 %v4680, %v4679
        %v4705 = vpack.c.bf16 %v4682, %v4681
        %v4706 = vpack.c.bf16 %v4684, %v4683
        %v4707 = vpack.c.bf16 %v4686, %v4685
        %v4708 = vpack.c.bf16 %v4688, %v4687
        %v4709 = vpack.c.bf16 %v4690, %v4689
        %v4710 = vpack.c.bf16 %v4692, %v4691
        %v4711 = vpack.c.bf16 %v4694, %v4693
        %v4712 = vpack.c.bf16 %v4696, %v4695
        %v4713 = vld [vmem:[%s7] sm:$0xf]
        %v4714 = vld [vmem:[%s7 + $0x4] sm:$0xf]
        %v4715 = vld [vmem:[%s7 + $0x8] sm:$0xf]
        %v4716 = vld [vmem:[%s7 + $0xc] sm:$0xf]
        %v4717 = vld [vmem:[%s303] sm:$0xff]
        %v4718 = vld [vmem:[%s303 + $0x8] sm:$0xff]
        %v4719 = vld [vmem:[%s303 + $0x10] sm:$0xff]
        %v4720 = vld [vmem:[%s303 + $0x18] sm:$0xff]
        %v4721 = vld [vmem:[%s303 + $0x20] sm:$0xff]
        %v4722 = vld [vmem:[%s303 + $0x28] sm:$0xff]
        %v4723 = vld [vmem:[%s303 + $0x30] sm:$0xff]
        %v4724 = vld [vmem:[%s303 + $0x38] sm:$0xff]
        %v4725 = vld [vmem:[%s303 + $0x40] sm:$0xff]
        %v4726 = vld [vmem:[%s303 + $0x48] sm:$0xff]
        %v4727 = vld [vmem:[%s303 + $0x50] sm:$0xff]
        %v4728 = vld [vmem:[%s303 + $0x58] sm:$0xff]
        %v4729 = vld [vmem:[%s303 + $0x60] sm:$0xff]
        %v4730 = vld [vmem:[%s303 + $0x68] sm:$0xff]
        %v4731 = vld [vmem:[%s303 + $0x70] sm:$0xff]
        %v4732 = vld [vmem:[%s303 + $0x78] sm:$0xff]
        %v4733 = vld [vmem:[%s303 + $0x80] sm:$0xff]
        %v4734 = vld [vmem:[%s303 + $0x88] sm:$0xff]
        %v4735 = vld [vmem:[%s303 + $0x90] sm:$0xff]
        %v4736 = vld [vmem:[%s303 + $0x98] sm:$0xff]
        %v4737 = vld [vmem:[%s303 + $0xa0] sm:$0xff]
        %v4738 = vld [vmem:[%s303 + $0xa8] sm:$0xff]
        %v4739 = vld [vmem:[%s303 + $0xb0] sm:$0xff]
        %v4740 = vld [vmem:[%s303 + $0xb8] sm:$0xff]
        %v4741 = vld [vmem:[%s303 + $0xc0] sm:$0xff]
        %v4742 = vld [vmem:[%s303 + $0xc8] sm:$0xff]
        %v4743 = vld [vmem:[%s303 + $0xd0] sm:$0xff]
        %v4744 = vld [vmem:[%s303 + $0xd8] sm:$0xff]
        %v4745 = vld [vmem:[%s303 + $0xe0] sm:$0xff]
        %v4746 = vld [vmem:[%s303 + $0xe8] sm:$0xff]
        %v4747 = vld [vmem:[%s303 + $0xf0] sm:$0xff]
        %v4748 = vld [vmem:[%s303 + $0xf8] sm:$0xff]
        %v4753 = vunpack.c.l.b16 %v4713
        %v4754 = vunpack.c.l.b16 %v4714
        %v4755 = vunpack.c.l.b16 %v4715
        %v4756 = vunpack.c.l.b16 %v4716
        %v4757 = vpack.c.b16 %v4754, %v4753
        %v4758 = vpack.c.b16 %v4756, %v4755
        %v4762 = vsel %vm3885, %v4697, 0
        %v4765 = vsel %vm3885, %v4698, 0
        %v4768 = vsel %vm3885, %v4699, 0
        %v4771 = vsel %vm3885, %v4700, 0
        %v4774 = vsel %vm3885, %v4701, 0
        %v4777 = vsel %vm3885, %v4702, 0
        %v4780 = vsel %vm3885, %v4703, 0
        %v4783 = vsel %vm3885, %v4704, 0
        %v4786 = vsel %vm3885, %v4705, 0
        %v4789 = vsel %vm3885, %v4706, 0
        %v4792 = vsel %vm3885, %v4707, 0
        %v4795 = vsel %vm3885, %v4708, 0
        %v4798 = vsel %vm3885, %v4709, 0
        %v4801 = vsel %vm3885, %v4710, 0
        %v4804 = vsel %vm3885, %v4711, 0
        %v4807 = vsel %vm3885, %v4712, 0
        %4809 = vmatprep.subr.bf16.mxu0 0
        %4810 = vmatpush1.bf16.msra.mxu0 %v4757
        %4811 = vmatprep.subr.bf16.mxu0 0
        %4812 = vmatpush1.bf16.msra.mxu0 %v4758
        %4813 = vmatprep.subr.bf16.mxu0 0
        %4814 = vmatpush1.bf16.msra.mxu0 0
        %4815 = vmatprep.subr.bf16.mxu0 0
        %4816 = vmatpush1.bf16.msra.mxu0 0
        %4817 = vmatprep.subr.bf16.mxu0 0
        %4818 = vmatpush1.bf16.msra.mxu0 0
        %4819 = vmatprep.subr.bf16.mxu0 0
        %4820 = vmatpush1.bf16.msra.mxu0 0
        %4821 = vmatprep.subr.bf16.mxu0 0
        %4822 = vmatpush1.bf16.msra.mxu0 0
        %4823 = vmatprep.subr.bf16.mxu0 0
        %4824 = vmatpush1.bf16.msra.mxu0 0
        %4825 = vmatprep.subr.bf16.mxu0 0
        %4826 = vmatpush1.bf16.msra.mxu0 0
        %4827 = vmatprep.subr.bf16.mxu0 0
        %4828 = vmatpush1.bf16.msra.mxu0 0
        %4829 = vmatprep.subr.bf16.mxu0 0
        %4830 = vmatpush1.bf16.msra.mxu0 0
        %4831 = vmatprep.subr.bf16.mxu0 0
        %4832 = vmatpush1.bf16.msra.mxu0 0
        %4833 = vmatprep.subr.bf16.mxu0 0
        %4834 = vmatpush1.bf16.msra.mxu0 0
        %4835 = vmatprep.subr.bf16.mxu0 0
        %4836 = vmatpush1.bf16.msra.mxu0 0
        %4837 = vmatprep.subr.bf16.mxu0 0
        %4838 = vmatpush1.bf16.msra.mxu0 0
        %4839 = vmatprep.subr.bf16.mxu0 0
        %4840 = vmatpush1.bf16.msra.mxu0 0
        %4841 = vmatprep.mubr.bf16.mxu0 0
        %4842 = vmatmul.mubr.bf16.gmra.mrb[0].mxu0 %v4762
        %v4843 = vpop.f32.mrb[0].mxu0
        %v4844 = vadd.f32 %v4717, %v4843
        %v4845 = vpop.f32.mrb[0].mxu0
        %v4846 = vpop.f32.mrb[0].mxu0
        %v4847 = vadd.f32 %v4718, %v4846
        %v4848 = vpop.f32.mrb[0].mxu0
        %4849 = vmatprep.mubr.bf16.mxu0 0
        %4850 = vmatmul.mubr.bf16.gmra.mrb[0].mxu0 %v4765
        %v4851 = vpop.f32.mrb[0].mxu0
        %v4852 = vadd.f32 %v4719, %v4851
        %v4853 = vpop.f32.mrb[0].mxu0
        %v4854 = vpop.f32.mrb[0].mxu0
        %v4855 = vadd.f32 %v4720, %v4854
        %v4856 = vpop.f32.mrb[0].mxu0
        %4857 = vmatprep.mubr.bf16.mxu0 0
        %4858 = vmatmul.mubr.bf16.gmra.mrb[0].mxu0 %v4768
        %v4859 = vpop.f32.mrb[0].mxu0
        %v4860 = vadd.f32 %v4721, %v4859
        %v4861 = vpop.f32.mrb[0].mxu0
        %v4862 = vpop.f32.mrb[0].mxu0
        %v4863 = vadd.f32 %v4722, %v4862
        %v4864 = vpop.f32.mrb[0].mxu0
        %4865 = vmatprep.mubr.bf16.mxu0 0
        %4866 = vmatmul.mubr.bf16.gmra.mrb[0].mxu0 %v4771
        %v4867 = vpop.f32.mrb[0].mxu0
        %v4868 = vadd.f32 %v4723, %v4867
        %v4869 = vpop.f32.mrb[0].mxu0
        %v4870 = vpop.f32.mrb[0].mxu0
        %v4871 = vadd.f32 %v4724, %v4870
        %v4872 = vpop.f32.mrb[0].mxu0
        %4873 = vmatprep.mubr.bf16.mxu0 0
        %4874 = vmatmul.mubr.bf16.gmra.mrb[0].mxu0 %v4774
        %v4875 = vpop.f32.mrb[0].mxu0
        %v4876 = vadd.f32 %v4725, %v4875
        %v4877 = vpop.f32.mrb[0].mxu0
        %v4878 = vpop.f32.mrb[0].mxu0
        %v4879 = vadd.f32 %v4726, %v4878
        %v4880 = vpop.f32.mrb[0].mxu0
        %4881 = vmatprep.mubr.bf16.mxu0 0
        %4882 = vmatmul.mubr.bf16.gmra.mrb[0].mxu0 %v4777
        %v4883 = vpop.f32.mrb[0].mxu0
        %v4884 = vadd.f32 %v4727, %v4883
        %v4885 = vpop.f32.mrb[0].mxu0
        %v4886 = vpop.f32.mrb[0].mxu0
        %v4887 = vadd.f32 %v4728, %v4886
        %v4888 = vpop.f32.mrb[0].mxu0
        %4889 = vmatprep.mubr.bf16.mxu0 0
        %4890 = vmatmul.mubr.bf16.gmra.mrb[0].mxu0 %v4780
        %v4891 = vpop.f32.mrb[0].mxu0
        %v4892 = vadd.f32 %v4729, %v4891
        %v4893 = vpop.f32.mrb[0].mxu0
        %v4894 = vpop.f32.mrb[0].mxu0
        %v4895 = vadd.f32 %v4730, %v4894
        %v4896 = vpop.f32.mrb[0].mxu0
        %4897 = vmatprep.mubr.bf16.mxu0 0
        %4898 = vmatmul.mubr.bf16.gmra.mrb[0].mxu0 %v4783
        %v4899 = vpop.f32.mrb[0].mxu0
        %v4900 = vadd.f32 %v4731, %v4899
        %v4901 = vpop.f32.mrb[0].mxu0
        %v4902 = vpop.f32.mrb[0].mxu0
        %v4903 = vadd.f32 %v4732, %v4902
        %v4904 = vpop.f32.mrb[0].mxu0
        %4905 = vmatprep.mubr.bf16.mxu0 0
        %4906 = vmatmul.mubr.bf16.gmra.mrb[0].mxu0 %v4786
        %v4907 = vpop.f32.mrb[0].mxu0
        %v4908 = vadd.f32 %v4733, %v4907
        %v4909 = vpop.f32.mrb[0].mxu0
        %v4910 = vpop.f32.mrb[0].mxu0
        %v4911 = vadd.f32 %v4734, %v4910
        %v4912 = vpop.f32.mrb[0].mxu0
        %4913 = vmatprep.mubr.bf16.mxu0 0
        %4914 = vmatmul.mubr.bf16.gmra.mrb[0].mxu0 %v4789
        %v4915 = vpop.f32.mrb[0].mxu0
        %v4916 = vadd.f32 %v4735, %v4915
        %v4917 = vpop.f32.mrb[0].mxu0
        %v4918 = vpop.f32.mrb[0].mxu0
        %v4919 = vadd.f32 %v4736, %v4918
        %v4920 = vpop.f32.mrb[0].mxu0
        %4921 = vmatprep.mubr.bf16.mxu0 0
        %4922 = vmatmul.mubr.bf16.gmra.mrb[0].mxu0 %v4792
        %v4923 = vpop.f32.mrb[0].mxu0
        %v4924 = vadd.f32 %v4737, %v4923
        %v4925 = vpop.f32.mrb[0].mxu0
        %v4926 = vpop.f32.mrb[0].mxu0
        %v4927 = vadd.f32 %v4738, %v4926
        %v4928 = vpop.f32.mrb[0].mxu0
        %4929 = vmatprep.mubr.bf16.mxu0 0
        %4930 = vmatmul.mubr.bf16.gmra.mrb[0].mxu0 %v4795
        %v4931 = vpop.f32.mrb[0].mxu0
        %v4932 = vadd.f32 %v4739, %v4931
        %v4933 = vpop.f32.mrb[0].mxu0
        %v4934 = vpop.f32.mrb[0].mxu0
        %v4935 = vadd.f32 %v4740, %v4934
        %v4936 = vpop.f32.mrb[0].mxu0
        %4937 = vmatprep.mubr.bf16.mxu0 0
        %4938 = vmatmul.mubr.bf16.gmra.mrb[0].mxu0 %v4798
        %v4939 = vpop.f32.mrb[0].mxu0
        %v4940 = vadd.f32 %v4741, %v4939
        %v4941 = vpop.f32.mrb[0].mxu0
        %v4942 = vpop.f32.mrb[0].mxu0
        %v4943 = vadd.f32 %v4742, %v4942
        %v4944 = vpop.f32.mrb[0].mxu0
        %4945 = vmatprep.mubr.bf16.mxu0 0
        %4946 = vmatmul.mubr.bf16.gmra.mrb[0].mxu0 %v4801
        %v4947 = vpop.f32.mrb[0].mxu0
        %v4948 = vadd.f32 %v4743, %v4947
        %v4949 = vpop.f32.mrb[0].mxu0
        %v4950 = vpop.f32.mrb[0].mxu0
        %v4951 = vadd.f32 %v4744, %v4950
        %v4952 = vpop.f32.mrb[0].mxu0
        %4953 = vmatprep.mubr.bf16.mxu0 0
        %4954 = vmatmul.mubr.bf16.gmra.mrb[0].mxu0 %v4804
        %v4955 = vpop.f32.mrb[0].mxu0
        %v4956 = vadd.f32 %v4745, %v4955
        %v4957 = vpop.f32.mrb[0].mxu0
        %v4958 = vpop.f32.mrb[0].mxu0
        %v4959 = vadd.f32 %v4746, %v4958
        %v4960 = vpop.f32.mrb[0].mxu0
        %4961 = vmatprep.mubr.bf16.mxu0 0
        %4962 = vmatmul.mubr.bf16.gmra.mrb[0].mxu0 %v4807
        %v4963 = vpop.f32.mrb[0].mxu0
        %v4964 = vadd.f32 %v4747, %v4963
        %v4965 = vpop.f32.mrb[0].mxu0
        %v4966 = vpop.f32.mrb[0].mxu0
        %v4967 = vadd.f32 %v4748, %v4966
        %v4968 = vpop.f32.mrb[0].mxu0
        %4969 = vdwg.mxu0
        %4970 = vst [vmem:[%s298] sm:$0xff] %v4844
        %4971 = vst [vmem:[%s298 + $0x8] sm:$0xff] %v4847
        %4972 = vst [vmem:[%s298 + $0x10] sm:$0xff] %v4852
        %4973 = vst [vmem:[%s298 + $0x18] sm:$0xff] %v4855
        %4974 = vst [vmem:[%s298 + $0x20] sm:$0xff] %v4860
        %4975 = vst [vmem:[%s298 + $0x28] sm:$0xff] %v4863
        %4976 = vst [vmem:[%s298 + $0x30] sm:$0xff] %v4868
        %4977 = vst [vmem:[%s298 + $0x38] sm:$0xff] %v4871
        %4978 = vst [vmem:[%s298 + $0x40] sm:$0xff] %v4876
        %4979 = vst [vmem:[%s298 + $0x48] sm:$0xff] %v4879
        %4980 = vst [vmem:[%s298 + $0x50] sm:$0xff] %v4884
        %4981 = vst [vmem:[%s298 + $0x58] sm:$0xff] %v4887
        %4982 = vst [vmem:[%s298 + $0x60] sm:$0xff] %v4892
        %4983 = vst [vmem:[%s298 + $0x68] sm:$0xff] %v4895
        %4984 = vst [vmem:[%s298 + $0x70] sm:$0xff] %v4900
        %4985 = vst [vmem:[%s298 + $0x78] sm:$0xff] %v4903
        %4986 = vst [vmem:[%s298 + $0x80] sm:$0xff] %v4908
        %4987 = vst [vmem:[%s298 + $0x88] sm:$0xff] %v4911
        %4988 = vst [vmem:[%s298 + $0x90] sm:$0xff] %v4916
        %4989 = vst [vmem:[%s298 + $0x98] sm:$0xff] %v4919
        %4990 = vst [vmem:[%s298 + $0xa0] sm:$0xff] %v4924
        %4991 = vst [vmem:[%s298 + $0xa8] sm:$0xff] %v4927
        %4992 = vst [vmem:[%s298 + $0xb0] sm:$0xff] %v4932
        %4993 = vst [vmem:[%s298 + $0xb8] sm:$0xff] %v4935
        %4994 = vst [vmem:[%s298 + $0xc0] sm:$0xff] %v4940
        %4995 = vst [vmem:[%s298 + $0xc8] sm:$0xff] %v4943
        %4996 = vst [vmem:[%s298 + $0xd0] sm:$0xff] %v4948
        %4997 = vst [vmem:[%s298 + $0xd8] sm:$0xff] %v4951
        %4998 = vst [vmem:[%s298 + $0xe0] sm:$0xff] %v4956
        %4999 = vst [vmem:[%s298 + $0xe8] sm:$0xff] %v4959
        %5000 = vst [vmem:[%s298 + $0xf0] sm:$0xff] %v4964
        %5001 = vst [vmem:[%s298 + $0xf8] sm:$0xff] %v4967
        %s5002 = sand.u32 %s203, 1
        %s5003 = scalar_lea.sflag [#allocation4], %s5002
        %s5004 = sand.u32 %s203, 1
        %s5005 = smul.addr %s5004, 256
        %s5006 = scalar_lea.vmem [#allocation3], %s5005
        // Predicated region
        $region53: #{bottleneck_forward_nhwc.1} parent=51 // pred_check
          %p5007 = pneg %p213
        $region54: #{bottleneck_forward_nhwc.1} parent=51 // pred_check_branch
          %5009 = sbr.rel (%p5007) target = $region56
        $region55: #{bottleneck_forward_nhwc.1} parent=51 // pred_region
          %s5011 = ssub.s32 4096, 4096
          %5012 = vsyncadd %s5003, %s5011
          %s5013 = smul.addr %s22, 32
          %s5014 = smul.addr %s5013, 128
          %s5015 = scalar_lea.hbm %s8, %s5014
          %s5016 = sshll.u32 %s5006, 4
          %s5017 = int_to_ptr.vmem [resolvable:$true] %s5016
          %5022 = dma.vmem_to_hbm [thread:$0]  %s5017, 4096, %s5015, %s5003, 128, 128, 8
        $region56: #{bottleneck_forward_nhwc.1} parent=51 // pred_fallthru
          _
      $region52: #{bottleneck_forward_nhwc.1} parent=5 // pred_fallthru
        _
      %p5023 = scmp.le.s32.totalorder 2, %s17
      // Predicated region
      $region57: #{bottleneck_forward_nhwc.1} parent=5 // pred_check
        %p5024 = pneg %p5023
      $region58: #{bottleneck_forward_nhwc.1} parent=5 // pred_check_branch
        %5026 = sbr.rel (%p5024) target = $region60
      $region59: #{bottleneck_forward_nhwc.1} parent=5 // pred_region
        %s5027 = ssub.s32 %s17, 2
        // Predicated region
        $region61: #{bottleneck_forward_nhwc.1} parent=59 // pred_check
          %p5028 = pneg %p219
        $region62: #{bottleneck_forward_nhwc.1} parent=59 // pred_check_branch
          %5030 = sbr.rel (%p5028) target = $region64
        $region63: #{bottleneck_forward_nhwc.1} parent=59 // pred_region
          %s5031 = sand.u32 %s204, 1
          %s5032 = scalar_lea.sflag [#allocation4], %s5031
          %s5033 = sand.u32 %s204, 1
          %s5034 = smul.addr %s5033, 256
          %s5035 = scalar_lea.vmem [#allocation3], %s5034
          %5036 = dma.done %s5032, 4096
        $region64: #{bottleneck_forward_nhwc.1} parent=59 // pred_fallthru
          _
      $region60: #{bottleneck_forward_nhwc.1} parent=5 // pred_fallthru
        _
    $region6: #{bottleneck_forward_nhwc.1} parent=1 // loop_footer
      %s21 = sadd.s32 1, %s17
    $region7: #{bottleneck_forward_nhwc.1} parent=1 // loop_footer_branch
      %16 = sbr.rel target = $region3
    $region8: #{bottleneck_forward_nhwc.1} parent=1 // loop_exit
      _
    %5037 = vsyncpa [#allocation4], 1
    %s5038 = scalar_lea.sflag [#allocation4], 1
    %5039 = vsyncpa %s5038, 1

</llo_original>
